<compile_context>
chip_gen: v5e
topology: v5e:2x2
jax: 0.10.0
libtpu: 0.0.40
codegen_flags: <defaults>
</compile_context>

<pallas_src>
import jax
import jax.numpy as jnp
from jax import lax
from jax.experimental import pallas as pl
from jax.experimental.pallas import tpu as pltpu


# ----------------------------- Pallas kernel --------------------------------
def d_encoder_kernel(x_ref, mask_ref, wd_ref, bd_ref, wih_ref, bih_ref,
                     whh_ref, bhh_ref, out_ref,
                     gr_ref, gz_ref, gn_ref, seq_ref):
    TB, H = x_ref.shape            # TB = T * B (padded batch), H = context size
    B = out_ref.shape[0]           # padded batch (multiple of 8)
    T = TB // B
    hh = H // 2                    # GRU hidden per direction
    D = 2 * hh                     # direction-concatenated lane width (== H)

    gi_refs = (gr_ref, gz_ref, gn_ref)

    # Constant direction lane mask: first hh lanes = forward, last hh = backward.
    dirmask = lax.broadcasted_iota(jnp.int32, (1, D), 1) < hh

    # ---- dense1 + ReLU over the whole (T*B, H) slab: one batched MXU matmul ----
    y2d = jnp.maximum(
        jnp.dot(x_ref[...], wd_ref[...], preferred_element_type=jnp.float32)
        + bd_ref[...], 0.0)

    def precompute_gi(layer, inp2d):
        # Input->hidden projections for ALL time steps, per gate, off the
        # serial path. Weights carry fwd|bwd lanes side by side, so there are
        # no zero-padded columns and no lane slicing when writing the scratch.
        for g in range(3):
            gi_refs[g][...] = (
                jnp.dot(inp2d, wih_ref[layer, g],
                        preferred_element_type=jnp.float32)
                + bih_ref[layer, g])

    def sel(ref, rf, rb):
        # Forward lanes come from row block rf (time i), backward lanes from
        # row block rb (time T-1-i): one vselect, no lane slicing.
        return jnp.where(dirmask, ref[pl.ds(rf, B), :], ref[pl.ds(rb, B), :])

    def run_layer(layer, store_seq):
        # Recurrent weights/biases loaded once per layer (hoisted off the loop).
        whh_g = [whh_ref[layer, g] for g in range(3)]   # (2h, 2h) block-diagonal
        bhh_g = [bhh_ref[layer, g] for g in range(3)]   # (1, 2h)

        def body(i, h2):               # h2 = [h_fwd | h_bwd], shape (B, 2h)
            rf = i * B
            rb = (T - 1 - i) * B
            gi_r = sel(gr_ref, rf, rb)
            gi_z = sel(gz_ref, rf, rb)
            gi_n = sel(gn_ref, rf, rb)
            gh_r = jnp.dot(h2, whh_g[0], preferred_element_type=jnp.float32) + bhh_g[0]
            gh_z = jnp.dot(h2, whh_g[1], preferred_element_type=jnp.float32) + bhh_g[1]
            gh_n = jnp.dot(h2, whh_g[2], preferred_element_type=jnp.float32) + bhh_g[2]
            r = jax.nn.sigmoid(gi_r + gh_r)
            z = jax.nn.sigmoid(gi_z + gh_z)
            n = jnp.tanh(gi_n + r * gh_n)
            h_new = n + z * (h2 - n)                   # (1-z)*n + z*h
            # pack_padded_sequence emulation: hold state on padded steps
            m = mask_ref[pl.ds(rf, B), :]
            h2 = jnp.where(m != 0.0, h_new, h2)        # single vselect
            if store_seq:
                # ONE full-width store per step (fwd half = time i,
                # bwd half = time T-1-i).
                seq_ref[pl.ds(rf, B), :] = h2
            return h2

        return lax.fori_loop(0, T, body, jnp.zeros((B, D), jnp.float32),
                             unroll=True)

    # ---- layer 0 ----
    precompute_gi(0, y2d)
    h2_l0 = run_layer(0, store_seq=True)

    # ---- layer 1: time-align the backward half of the layer-0 outputs once,
    #      off the serial path (row t of seq1 = [fwd_out(t) | bwd_out(t)]) ----
    seq_all = seq_ref[...]
    seq1 = jnp.concatenate(
        [jnp.where(dirmask,
                   seq_all[t * B:(t + 1) * B, :],
                   seq_all[(T - 1 - t) * B:(T - t) * B, :])
         for t in range(T)], axis=0)                    # (T*B, H)
    precompute_gi(1, seq1)
    h2_l1 = run_layer(1, store_seq=False)

    # hidden.view(L, D, B, h).sum(0) + cat over directions: the [h_fwd | h_bwd]
    # lane layout already matches the concatenation.
    out_ref[...] = h2_l0 + h2_l1


# --------------------------- parameter re-layout ------------------------------
def pack_params(params):
    """One-time re-layout of per-gate GRU params into the kernel layout.

    Per gate: input->hidden weights (H, 2h) with [fwd | bwd] output lanes,
    recurrent weights (2h, 2h) block-diagonal over directions, biases (1, 2h).
    Call this once at init and cache the result.
    """
    Wd, bd, Wih, Whh, bih, bhh = params
    wih = jnp.concatenate([Wih[:, 0], Wih[:, 1]], axis=-1)        # (2,3,H,2h)
    bih_p = jnp.concatenate([bih[:, 0], bih[:, 1]], axis=-1)      # (2,3,1,2h)
    bhh_p = jnp.concatenate([bhh[:, 0], bhh[:, 1]], axis=-1)      # (2,3,1,2h)
    zero = jnp.zeros_like(Whh[:, 0])                              # (2,3,h,h)
    whh = jnp.concatenate(
        [jnp.concatenate([Whh[:, 0], zero], axis=-1),             # rows: h_fwd
         jnp.concatenate([zero, Whh[:, 1]], axis=-1)],            # rows: h_bwd
        axis=-2)                                                  # (2,3,2h,2h)
    return (Wd.astype(jnp.float32), bd.astype(jnp.float32),
            wih.astype(jnp.float32), bih_p.astype(jnp.float32),
            whh.astype(jnp.float32), bhh_p.astype(jnp.float32))


# ------------------------------- wrapper --------------------------------------
def d_encoder(uembeds, clens, packed):
    Wd, bd, wih, bih_p, whh, bhh_p = packed
    B, T, H = uembeds.shape
    h = H // 2
    D = 2 * h

    # Pad batch to a sublane multiple so every per-step (B, 2h) row block is
    # sublane-aligned; padded rows have length 0 -> never update -> stay zero.
    Bp = max(8, -(-B // 8) * 8)
    x = jnp.zeros((Bp, T, H), jnp.float32).at[:B].set(uembeds.astype(jnp.float32))
    cl = jnp.zeros((Bp,), jnp.int32).at[:B].set(clens.astype(jnp.int32))

    # Time-major 2-D slab (T*Bp, H): no reshapes/transposes inside the kernel.
    x2d = jnp.transpose(x, (1, 0, 2)).reshape(T * Bp, H)

    # Per-step masks precomputed once: fwd lanes gate time i, bwd lanes gate
    # time T-1-i (pack_padded_sequence emulation for the final hidden state).
    t_idx = jnp.arange(T, dtype=jnp.int32)[:, None, None]         # (T,1,1)
    clr = cl.reshape(1, Bp, 1)
    m_f = (t_idx < clr).astype(jnp.float32)                       # (T,Bp,1)
    m_b = ((T - 1 - t_idx) < clr).astype(jnp.float32)
    mask2d = jnp.concatenate([jnp.broadcast_to(m_f, (T, Bp, h)),
                              jnp.broadcast_to(m_b, (T, Bp, h))],
                             axis=-1).reshape(T * Bp, D)

    out = pl.pallas_call(
        d_encoder_kernel,
        out_shape=jax.ShapeDtypeStruct((Bp, D), jnp.float32),
        in_specs=[pl.BlockSpec(memory_space=pltpu.MemorySpace.VMEM)] * 8,
        out_specs=pl.BlockSpec(memory_space=pltpu.MemorySpace.VMEM),
        scratch_shapes=[
            pltpu.VMEM((T * Bp, D), jnp.float32),   # gi, r gate (reused per layer)
            pltpu.VMEM((T * Bp, D), jnp.float32),   # gi, z gate
            pltpu.VMEM((T * Bp, D), jnp.float32),   # gi, n gate
            pltpu.VMEM((T * Bp, D), jnp.float32),   # layer-0 per-step states
        ],
        compiler_params=pltpu.CompilerParams(vmem_limit_bytes=32 * 1024 * 1024),
    )(x2d, mask2d, Wd, bd, wih, bih_p, whh, bhh_p)

    return out[:B, None, :]


# --------------------------- pure-JAX reference -------------------------------
def d_encoder_ref(uembeds, clens, params):
    Wd, bd, Wih, Whh, bih, bhh = params
    B, T, H = uembeds.shape
    h = H // 2
    xr = jax.nn.relu(uembeds @ Wd + bd)

    def cell(x_t, h_prev, l, d):
        gi = [x_t @ Wih[l, d, g] + bih[l, d, g, 0] for g in range(3)]
        gh = [h_prev @ Whh[l, d, g] + bhh[l, d, g, 0] for g in range(3)]
        r = jax.nn.sigmoid(gi[0] + gh[0])
        z = jax.nn.sigmoid(gi[1] + gh[1])
        n = jnp.tanh(gi[2] + r * gh[2])
        return (1.0 - z) * n + z * h_prev

    def run(layer, d, seq):
        hcur = jnp.zeros((B, h), jnp.float32)
        outs = [None] * T
        order = range(T) if d == 0 else range(T - 1, -1, -1)
        for t in order:
            hn = cell(seq[:, t, :], hcur, layer, d)
            hcur = jnp.where((t < clens)[:, None], hn, hcur)
            outs[t] = hcur
        return hcur, jnp.stack(outs, axis=1)

    h0f, sf = run(0, 0, xr)
    h0b, sb = run(0, 1, xr)
    seq1 = jnp.concatenate([sf, sb], axis=-1)
    h1f, _ = run(1, 0, seq1)
    h1b, _ = run(1, 1, seq1)
    return jnp.concatenate([h0f + h1f, h0b + h1b], axis=-1)[:, None, :]


# ------------------------------ param init ------------------------------------
def init_params(key, H):
    h = H // 2
    k = 1.0 / jnp.sqrt(jnp.float32(h))
    ks = jax.random.split(key, 6)
    Wd  = jax.random.uniform(ks[0], (H, H), jnp.float32, -k, k)           # dense1 (in,out)
    bd  = jax.random.uniform(ks[1], (1, H), jnp.float32, -k, k)
    Wih = jax.random.uniform(ks[2], (2, 2, 3, H, h), jnp.float32, -k, k)  # [layer,dir,gate,in,h]
    Whh = jax.random.uniform(ks[3], (2, 2, 3, h, h), jnp.float32, -k, k)
    bih = jax.random.uniform(ks[4], (2, 2, 3, 1, h), jnp.float32, -k, k)
    bhh = jax.random.uniform(ks[5], (2, 2, 3, 1, h), jnp.float32, -k, k)
    return (Wd, bd, Wih, Whh, bih, bhh)


if __name__ == "__main__":
    B, T, H = 2, 8, 32  # H = args.hidden_size (context_size); GRU hidden = H // 2
    key = jax.random.PRNGKey(0)
    kx, kp = jax.random.split(key)
    uembeds = jax.random.normal(kx, (B, T, H), jnp.float32)
    clens = jnp.array([8, 5], jnp.int32)  # variable lengths (<= T)
    params = init_params(kp, H)

    packed = pack_params(params)  # one-time weight re-layout (cache at init)

    out = d_encoder(uembeds, clens, packed)
    out = jax.block_until_ready(out)

    ref = d_encoder_ref(uembeds, clens, params)
    assert out.shape == (B, 1, H)
    assert jnp.allclose(out, ref, atol=2e-2, rtol=2e-2), (
        f"max abs diff {jnp.max(jnp.abs(out - ref))}")
    print("KERNEL_OK")
</pallas_src>

<mosaic_0001>
module attributes {stable_mosaic.version = 11 : i64} {
  func.func @d_encoder_kernel(%arg0: memref<64x32xf32, #tpu.memory_space<vmem>>, %arg1: memref<64x32xf32, #tpu.memory_space<vmem>>, %arg2: memref<32x32xf32, #tpu.memory_space<vmem>>, %arg3: memref<1x32xf32, #tpu.memory_space<vmem>>, %arg4: memref<2x3x32x32xf32, #tpu.memory_space<vmem>>, %arg5: memref<2x3x1x32xf32, #tpu.memory_space<vmem>>, %arg6: memref<2x3x32x32xf32, #tpu.memory_space<vmem>>, %arg7: memref<2x3x1x32xf32, #tpu.memory_space<vmem>>, %arg8: memref<8x32xf32, #tpu.memory_space<vmem>>, %arg9: memref<64x32xf32, #tpu.memory_space<vmem>>, %arg10: memref<64x32xf32, #tpu.memory_space<vmem>>, %arg11: memref<64x32xf32, #tpu.memory_space<vmem>>, %arg12: memref<64x32xf32, #tpu.memory_space<vmem>>) attributes {dimension_semantics = [], scalar_prefetch = 0 : i64, scratch_operands = 4 : i64, tpu.core_type = #tpu.core_type<tc>} {
    %0 = tpu.iota {dimensions = array<i32: 1>} : vector<1x32xi32>
    %c16_i32 = arith.constant 16 : i32
    %1 = vector.broadcast %c16_i32 : i32 to vector<1x32xi32>
    %2 = arith.cmpi slt, %0, %1 : vector<1x32xi32>
    %c0 = arith.constant 0 : index
    %c0_0 = arith.constant 0 : index
    %3 = vector.load %arg0[%c0, %c0_0] : memref<64x32xf32, #tpu.memory_space<vmem>>, vector<64x32xf32>
    %c0_1 = arith.constant 0 : index
    %c0_2 = arith.constant 0 : index
    %4 = vector.load %arg2[%c0_1, %c0_2] : memref<32x32xf32, #tpu.memory_space<vmem>>, vector<32x32xf32>
    %cst = arith.constant dense<0.000000e+00> : vector<64x32xf32>
    %5 = tpu.matmul %3, %4, %cst {dimension_numbers = #tpu.dot_dimension_numbers<[1], [0], [0], [1], [0, 0, 1, 1], [], []>} : vector<64x32xf32>, vector<32x32xf32>, vector<64x32xf32> -> vector<64x32xf32>
    %c0_3 = arith.constant 0 : index
    %c0_4 = arith.constant 0 : index
    %6 = vector.load %arg3[%c0_3, %c0_4] : memref<1x32xf32, #tpu.memory_space<vmem>>, vector<1x32xf32>
    %7 = vector.broadcast %6 : vector<1x32xf32> to vector<64x32xf32>
    %8 = arith.addf %5, %7 : vector<64x32xf32>
    %cst_5 = arith.constant 0.000000e+00 : f32
    %9 = vector.broadcast %cst_5 : f32 to vector<64x32xf32>
    %10 = arith.maximumf %8, %9 : vector<64x32xf32>
    %c0_6 = arith.constant 0 : index
    %c0_7 = arith.constant 0 : index
    %c0_8 = arith.constant 0 : index
    %c0_9 = arith.constant 0 : index
    %11 = vector.load %arg4[%c0_6, %c0_7, %c0_8, %c0_9] : memref<2x3x32x32xf32, #tpu.memory_space<vmem>>, vector<1x1x32x32xf32>
    %12 = vector.shape_cast %11 : vector<1x1x32x32xf32> to vector<32x32xf32>
    %cst_10 = arith.constant dense<0.000000e+00> : vector<64x32xf32>
    %13 = tpu.matmul %10, %12, %cst_10 {dimension_numbers = #tpu.dot_dimension_numbers<[1], [0], [0], [1], [0, 0, 1, 1], [], []>} : vector<64x32xf32>, vector<32x32xf32>, vector<64x32xf32> -> vector<64x32xf32>
    %c0_11 = arith.constant 0 : index
    %c0_12 = arith.constant 0 : index
    %c0_13 = arith.constant 0 : index
    %c0_14 = arith.constant 0 : index
    %14 = vector.load %arg5[%c0_11, %c0_12, %c0_13, %c0_14] : memref<2x3x1x32xf32, #tpu.memory_space<vmem>>, vector<1x1x1x32xf32>
    %15 = vector.shape_cast %14 : vector<1x1x1x32xf32> to vector<1x32xf32>
    %16 = vector.broadcast %15 : vector<1x32xf32> to vector<64x32xf32>
    %17 = arith.addf %13, %16 : vector<64x32xf32>
    %c0_15 = arith.constant 0 : index
    %c0_16 = arith.constant 0 : index
    %18 = vector.load %arg9[%c0_15, %c0_16] : memref<64x32xf32, #tpu.memory_space<vmem>>, vector<64x32xf32>
    tpu.vector_store %arg9[%c0_15, %c0_16], %17 {strides = array<i32>} : memref<64x32xf32, #tpu.memory_space<vmem>>, vector<64x32xf32>,
    %c0_17 = arith.constant 0 : index
    %c1 = arith.constant 1 : index
    %c0_18 = arith.constant 0 : index
    %c0_19 = arith.constant 0 : index
    %19 = vector.load %arg4[%c0_17, %c1, %c0_18, %c0_19] : memref<2x3x32x32xf32, #tpu.memory_space<vmem>>, vector<1x1x32x32xf32>
    %20 = vector.shape_cast %19 : vector<1x1x32x32xf32> to vector<32x32xf32>
    %cst_20 = arith.constant dense<0.000000e+00> : vector<64x32xf32>
    %21 = tpu.matmul %10, %20, %cst_20 {dimension_numbers = #tpu.dot_dimension_numbers<[1], [0], [0], [1], [0, 0, 1, 1], [], []>} : vector<64x32xf32>, vector<32x32xf32>, vector<64x32xf32> -> vector<64x32xf32>
    %c0_21 = arith.constant 0 : index
    %c1_22 = arith.constant 1 : index
    %c0_23 = arith.constant 0 : index
    %c0_24 = arith.constant 0 : index
    %22 = vector.load %arg5[%c0_21, %c1_22, %c0_23, %c0_24] : memref<2x3x1x32xf32, #tpu.memory_space<vmem>>, vector<1x1x1x32xf32>
    %23 = vector.shape_cast %22 : vector<1x1x1x32xf32> to vector<1x32xf32>
    %24 = vector.broadcast %23 : vector<1x32xf32> to vector<64x32xf32>
    %25 = arith.addf %21, %24 : vector<64x32xf32>
    %c0_25 = arith.constant 0 : index
    %c0_26 = arith.constant 0 : index
    %26 = vector.load %arg10[%c0_25, %c0_26] : memref<64x32xf32, #tpu.memory_space<vmem>>, vector<64x32xf32>
    tpu.vector_store %arg10[%c0_25, %c0_26], %25 {strides = array<i32>} : memref<64x32xf32, #tpu.memory_space<vmem>>, vector<64x32xf32>,
    %c0_27 = arith.constant 0 : index
    %c2 = arith.constant 2 : index
    %c0_28 = arith.constant 0 : index
    %c0_29 = arith.constant 0 : index
    %27 = vector.load %arg4[%c0_27, %c2, %c0_28, %c0_29] : memref<2x3x32x32xf32, #tpu.memory_space<vmem>>, vector<1x1x32x32xf32>
    %28 = vector.shape_cast %27 : vector<1x1x32x32xf32> to vector<32x32xf32>
    %cst_30 = arith.constant dense<0.000000e+00> : vector<64x32xf32>
    %29 = tpu.matmul %10, %28, %cst_30 {dimension_numbers = #tpu.dot_dimension_numbers<[1], [0], [0], [1], [0, 0, 1, 1], [], []>} : vector<64x32xf32>, vector<32x32xf32>, vector<64x32xf32> -> vector<64x32xf32>
    %c0_31 = arith.constant 0 : index
    %c2_32 = arith.constant 2 : index
    %c0_33 = arith.constant 0 : index
    %c0_34 = arith.constant 0 : index
    %30 = vector.load %arg5[%c0_31, %c2_32, %c0_33, %c0_34] : memref<2x3x1x32xf32, #tpu.memory_space<vmem>>, vector<1x1x1x32xf32>
    %31 = vector.shape_cast %30 : vector<1x1x1x32xf32> to vector<1x32xf32>
    %32 = vector.broadcast %31 : vector<1x32xf32> to vector<64x32xf32>
    %33 = arith.addf %29, %32 : vector<64x32xf32>
    %c0_35 = arith.constant 0 : index
    %c0_36 = arith.constant 0 : index
    %34 = vector.load %arg11[%c0_35, %c0_36] : memref<64x32xf32, #tpu.memory_space<vmem>>, vector<64x32xf32>
    tpu.vector_store %arg11[%c0_35, %c0_36], %33 {strides = array<i32>} : memref<64x32xf32, #tpu.memory_space<vmem>>, vector<64x32xf32>,
    %c0_37 = arith.constant 0 : index
    %c0_38 = arith.constant 0 : index
    %c0_39 = arith.constant 0 : index
    %c0_40 = arith.constant 0 : index
    %35 = vector.load %arg6[%c0_37, %c0_38, %c0_39, %c0_40] : memref<2x3x32x32xf32, #tpu.memory_space<vmem>>, vector<1x1x32x32xf32>
    %36 = vector.shape_cast %35 : vector<1x1x32x32xf32> to vector<32x32xf32>
    %c0_41 = arith.constant 0 : index
    %c1_42 = arith.constant 1 : index
    %c0_43 = arith.constant 0 : index
    %c0_44 = arith.constant 0 : index
    %37 = vector.load %arg6[%c0_41, %c1_42, %c0_43, %c0_44] : memref<2x3x32x32xf32, #tpu.memory_space<vmem>>, vector<1x1x32x32xf32>
    %38 = vector.shape_cast %37 : vector<1x1x32x32xf32> to vector<32x32xf32>
    %c0_45 = arith.constant 0 : index
    %c2_46 = arith.constant 2 : index
    %c0_47 = arith.constant 0 : index
    %c0_48 = arith.constant 0 : index
    %39 = vector.load %arg6[%c0_45, %c2_46, %c0_47, %c0_48] : memref<2x3x32x32xf32, #tpu.memory_space<vmem>>, vector<1x1x32x32xf32>
    %40 = vector.shape_cast %39 : vector<1x1x32x32xf32> to vector<32x32xf32>
    %c0_49 = arith.constant 0 : index
    %c0_50 = arith.constant 0 : index
    %c0_51 = arith.constant 0 : index
    %c0_52 = arith.constant 0 : index
    %41 = vector.load %arg7[%c0_49, %c0_50, %c0_51, %c0_52] : memref<2x3x1x32xf32, #tpu.memory_space<vmem>>, vector<1x1x1x32xf32>
    %42 = vector.shape_cast %41 : vector<1x1x1x32xf32> to vector<1x32xf32>
    %c0_53 = arith.constant 0 : index
    %c1_54 = arith.constant 1 : index
    %c0_55 = arith.constant 0 : index
    %c0_56 = arith.constant 0 : index
    %43 = vector.load %arg7[%c0_53, %c1_54, %c0_55, %c0_56] : memref<2x3x1x32xf32, #tpu.memory_space<vmem>>, vector<1x1x1x32xf32>
    %44 = vector.shape_cast %43 : vector<1x1x1x32xf32> to vector<1x32xf32>
    %c0_57 = arith.constant 0 : index
    %c2_58 = arith.constant 2 : index
    %c0_59 = arith.constant 0 : index
    %c0_60 = arith.constant 0 : index
    %45 = vector.load %arg7[%c0_57, %c2_58, %c0_59, %c0_60] : memref<2x3x1x32xf32, #tpu.memory_space<vmem>>, vector<1x1x1x32xf32>
    %46 = vector.shape_cast %45 : vector<1x1x1x32xf32> to vector<1x32xf32>
    %cst_61 = arith.constant 0.000000e+00 : f32
    %47 = vector.broadcast %cst_61 : f32 to vector<8x32xf32>
    %c0_i32 = arith.constant 0 : i32
    %c8_i32 = arith.constant 8 : i32
    %48 = arith.muli %c0_i32, %c8_i32 : i32
    %c7_i32 = arith.constant 7 : i32
    %49 = arith.subi %c7_i32, %c0_i32 : i32
    %c8_i32_62 = arith.constant 8 : i32
    %50 = arith.muli %49, %c8_i32_62 : i32
    %51 = arith.index_cast %48 : i32 to index
    %c0_63 = arith.constant 0 : index
    %52 = vector.load %arg9[%51, %c0_63] : memref<64x32xf32, #tpu.memory_space<vmem>>, vector<8x32xf32>
    %53 = arith.index_cast %50 : i32 to index
    %c0_64 = arith.constant 0 : index
    %54 = vector.load %arg9[%53, %c0_64] : memref<64x32xf32, #tpu.memory_space<vmem>>, vector<8x32xf32>
    %55 = vector.shape_cast %2 : vector<1x32xi1> to vector<1x32xi1>
    %56 = vector.broadcast %55 : vector<1x32xi1> to vector<8x32xi1>
    %57 = arith.select %56, %52, %54 : vector<8x32xi1>, vector<8x32xf32>
    %58 = arith.index_cast %48 : i32 to index
    %c0_65 = arith.constant 0 : index
    %59 = vector.load %arg10[%58, %c0_65] : memref<64x32xf32, #tpu.memory_space<vmem>>, vector<8x32xf32>
    %60 = arith.index_cast %50 : i32 to index
    %c0_66 = arith.constant 0 : index
    %61 = vector.load %arg10[%60, %c0_66] : memref<64x32xf32, #tpu.memory_space<vmem>>, vector<8x32xf32>
    %62 = vector.shape_cast %2 : vector<1x32xi1> to vector<1x32xi1>
    %63 = vector.broadcast %62 : vector<1x32xi1> to vector<8x32xi1>
    %64 = arith.select %63, %59, %61 : vector<8x32xi1>, vector<8x32xf32>
    %65 = arith.index_cast %48 : i32 to index
    %c0_67 = arith.constant 0 : index
    %66 = vector.load %arg11[%65, %c0_67] : memref<64x32xf32, #tpu.memory_space<vmem>>, vector<8x32xf32>
    %67 = arith.index_cast %50 : i32 to index
    %c0_68 = arith.constant 0 : index
    %68 = vector.load %arg11[%67, %c0_68] : memref<64x32xf32, #tpu.memory_space<vmem>>, vector<8x32xf32>
    %69 = vector.shape_cast %2 : vector<1x32xi1> to vector<1x32xi1>
    %70 = vector.broadcast %69 : vector<1x32xi1> to vector<8x32xi1>
    %71 = arith.select %70, %66, %68 : vector<8x32xi1>, vector<8x32xf32>
    %cst_69 = arith.constant dense<0.000000e+00> : vector<8x32xf32>
    %72 = tpu.matmul %47, %36, %cst_69 {dimension_numbers = #tpu.dot_dimension_numbers<[1], [0], [0], [1], [0, 0, 1, 1], [], []>} : vector<8x32xf32>, vector<32x32xf32>, vector<8x32xf32> -> vector<8x32xf32>
    %73 = vector.broadcast %42 : vector<1x32xf32> to vector<8x32xf32>
    %74 = arith.addf %72, %73 : vector<8x32xf32>
    %cst_70 = arith.constant dense<0.000000e+00> : vector<8x32xf32>
    %75 = tpu.matmul %47, %38, %cst_70 {dimension_numbers = #tpu.dot_dimension_numbers<[1], [0], [0], [1], [0, 0, 1, 1], [], []>} : vector<8x32xf32>, vector<32x32xf32>, vector<8x32xf32> -> vector<8x32xf32>
    %76 = vector.broadcast %44 : vector<1x32xf32> to vector<8x32xf32>
    %77 = arith.addf %75, %76 : vector<8x32xf32>
    %cst_71 = arith.constant dense<0.000000e+00> : vector<8x32xf32>
    %78 = tpu.matmul %47, %40, %cst_71 {dimension_numbers = #tpu.dot_dimension_numbers<[1], [0], [0], [1], [0, 0, 1, 1], [], []>} : vector<8x32xf32>, vector<32x32xf32>, vector<8x32xf32> -> vector<8x32xf32>
    %79 = vector.broadcast %46 : vector<1x32xf32> to vector<8x32xf32>
    %80 = arith.addf %78, %79 : vector<8x32xf32>
    %81 = arith.addf %57, %74 : vector<8x32xf32>
    %82 = arith.negf %81 : vector<8x32xf32>
    %83 = math.exp %82 : vector<8x32xf32>
    %cst_72 = arith.constant 1.000000e+00 : f32
    %84 = vector.broadcast %cst_72 : f32 to vector<8x32xf32>
    %85 = arith.addf %84, %83 : vector<8x32xf32>
    %86 = arith.divf %84, %85 : vector<8x32xf32>
    %87 = arith.addf %64, %77 : vector<8x32xf32>
    %88 = arith.negf %87 : vector<8x32xf32>
    %89 = math.exp %88 : vector<8x32xf32>
    %cst_73 = arith.constant 1.000000e+00 : f32
    %90 = vector.broadcast %cst_73 : f32 to vector<8x32xf32>
    %91 = arith.addf %90, %89 : vector<8x32xf32>
    %92 = arith.divf %90, %91 : vector<8x32xf32>
    %93 = arith.mulf %86, %80 : vector<8x32xf32>
    %94 = arith.addf %71, %93 : vector<8x32xf32>
    %95 = math.tanh %94 : vector<8x32xf32>
    %96 = arith.subf %47, %95 : vector<8x32xf32>
    %97 = arith.mulf %92, %96 : vector<8x32xf32>
    %98 = arith.addf %95, %97 : vector<8x32xf32>
    %99 = arith.index_cast %48 : i32 to index
    %c0_74 = arith.constant 0 : index
    %100 = vector.load %arg1[%99, %c0_74] : memref<64x32xf32, #tpu.memory_space<vmem>>, vector<8x32xf32>
    %cst_75 = arith.constant 0.000000e+00 : f32
    %101 = vector.broadcast %cst_75 : f32 to vector<8x32xf32>
    %102 = arith.cmpf one, %100, %101 : vector<8x32xf32>
    %103 = arith.select %102, %98, %47 : vector<8x32xi1>, vector<8x32xf32>
    %104 = arith.index_cast %48 : i32 to index
    %c0_76 = arith.constant 0 : index
    %105 = vector.load %arg12[%104, %c0_76] : memref<64x32xf32, #tpu.memory_space<vmem>>, vector<8x32xf32>
    tpu.vector_store %arg12[%104, %c0_76], %103 {strides = array<i32>} : memref<64x32xf32, #tpu.memory_space<vmem>>, vector<8x32xf32>,
    %c1_i32 = arith.constant 1 : i32
    %c8_i32_77 = arith.constant 8 : i32
    %106 = arith.muli %c1_i32, %c8_i32_77 : i32
    %c7_i32_78 = arith.constant 7 : i32
    %107 = arith.subi %c7_i32_78, %c1_i32 : i32
    %c8_i32_79 = arith.constant 8 : i32
    %108 = arith.muli %107, %c8_i32_79 : i32
    %109 = arith.index_cast %106 : i32 to index
    %c0_80 = arith.constant 0 : index
    %110 = vector.load %arg9[%109, %c0_80] : memref<64x32xf32, #tpu.memory_space<vmem>>, vector<8x32xf32>
    %111 = arith.index_cast %108 : i32 to index
    %c0_81 = arith.constant 0 : index
    %112 = vector.load %arg9[%111, %c0_81] : memref<64x32xf32, #tpu.memory_space<vmem>>, vector<8x32xf32>
    %113 = vector.shape_cast %2 : vector<1x32xi1> to vector<1x32xi1>
    %114 = vector.broadcast %113 : vector<1x32xi1> to vector<8x32xi1>
    %115 = arith.select %114, %110, %112 : vector<8x32xi1>, vector<8x32xf32>
    %116 = arith.index_cast %106 : i32 to index
    %c0_82 = arith.constant 0 : index
    %117 = vector.load %arg10[%116, %c0_82] : memref<64x32xf32, #tpu.memory_space<vmem>>, vector<8x32xf32>
    %118 = arith.index_cast %108 : i32 to index
    %c0_83 = arith.constant 0 : index
    %119 = vector.load %arg10[%118, %c0_83] : memref<64x32xf32, #tpu.memory_space<vmem>>, vector<8x32xf32>
    %120 = vector.shape_cast %2 : vector<1x32xi1> to vector<1x32xi1>
    %121 = vector.broadcast %120 : vector<1x32xi1> to vector<8x32xi1>
    %122 = arith.select %121, %117, %119 : vector<8x32xi1>, vector<8x32xf32>
    %123 = arith.index_cast %106 : i32 to index
    %c0_84 = arith.constant 0 : index
    %124 = vector.load %arg11[%123, %c0_84] : memref<64x32xf32, #tpu.memory_space<vmem>>, vector<8x32xf32>
    %125 = arith.index_cast %108 : i32 to index
    %c0_85 = arith.constant 0 : index
    %126 = vector.load %arg11[%125, %c0_85] : memref<64x32xf32, #tpu.memory_space<vmem>>, vector<8x32xf32>
    %127 = vector.shape_cast %2 : vector<1x32xi1> to vector<1x32xi1>
    %128 = vector.broadcast %127 : vector<1x32xi1> to vector<8x32xi1>
    %129 = arith.select %128, %124, %126 : vector<8x32xi1>, vector<8x32xf32>
    %cst_86 = arith.constant dense<0.000000e+00> : vector<8x32xf32>
    %130 = tpu.matmul %103, %36, %cst_86 {dimension_numbers = #tpu.dot_dimension_numbers<[1], [0], [0], [1], [0, 0, 1, 1], [], []>} : vector<8x32xf32>, vector<32x32xf32>, vector<8x32xf32> -> vector<8x32xf32>
    %131 = vector.broadcast %42 : vector<1x32xf32> to vector<8x32xf32>
    %132 = arith.addf %130, %131 : vector<8x32xf32>
    %cst_87 = arith.constant dense<0.000000e+00> : vector<8x32xf32>
    %133 = tpu.matmul %103, %38, %cst_87 {dimension_numbers = #tpu.dot_dimension_numbers<[1], [0], [0], [1], [0, 0, 1, 1], [], []>} : vector<8x32xf32>, vector<32x32xf32>, vector<8x32xf32> -> vector<8x32xf32>
    %134 = vector.broadcast %44 : vector<1x32xf32> to vector<8x32xf32>
    %135 = arith.addf %133, %134 : vector<8x32xf32>
    %cst_88 = arith.constant dense<0.000000e+00> : vector<8x32xf32>
    %136 = tpu.matmul %103, %40, %cst_88 {dimension_numbers = #tpu.dot_dimension_numbers<[1], [0], [0], [1], [0, 0, 1, 1], [], []>} : vector<8x32xf32>, vector<32x32xf32>, vector<8x32xf32> -> vector<8x32xf32>
    %137 = vector.broadcast %46 : vector<1x32xf32> to vector<8x32xf32>
    %138 = arith.addf %136, %137 : vector<8x32xf32>
    %139 = arith.addf %115, %132 : vector<8x32xf32>
    %140 = arith.negf %139 : vector<8x32xf32>
    %141 = math.exp %140 : vector<8x32xf32>
    %cst_89 = arith.constant 1.000000e+00 : f32
    %142 = vector.broadcast %cst_89 : f32 to vector<8x32xf32>
    %143 = arith.addf %142, %141 : vector<8x32xf32>
    %144 = arith.divf %142, %143 : vector<8x32xf32>
    %145 = arith.addf %122, %135 : vector<8x32xf32>
    %146 = arith.negf %145 : vector<8x32xf32>
    %147 = math.exp %146 : vector<8x32xf32>
    %cst_90 = arith.constant 1.000000e+00 : f32
    %148 = vector.broadcast %cst_90 : f32 to vector<8x32xf32>
    %149 = arith.addf %148, %147 : vector<8x32xf32>
    %150 = arith.divf %148, %149 : vector<8x32xf32>
    %151 = arith.mulf %144, %138 : vector<8x32xf32>
    %152 = arith.addf %129, %151 : vector<8x32xf32>
    %153 = math.tanh %152 : vector<8x32xf32>
    %154 = arith.subf %103, %153 : vector<8x32xf32>
    %155 = arith.mulf %150, %154 : vector<8x32xf32>
    %156 = arith.addf %153, %155 : vector<8x32xf32>
    %157 = arith.index_cast %106 : i32 to index
    %c0_91 = arith.constant 0 : index
    %158 = vector.load %arg1[%157, %c0_91] : memref<64x32xf32, #tpu.memory_space<vmem>>, vector<8x32xf32>
    %cst_92 = arith.constant 0.000000e+00 : f32
    %159 = vector.broadcast %cst_92 : f32 to vector<8x32xf32>
    %160 = arith.cmpf one, %158, %159 : vector<8x32xf32>
    %161 = arith.select %160, %156, %103 : vector<8x32xi1>, vector<8x32xf32>
    %162 = arith.index_cast %106 : i32 to index
    %c0_93 = arith.constant 0 : index
    %163 = vector.load %arg12[%162, %c0_93] : memref<64x32xf32, #tpu.memory_space<vmem>>, vector<8x32xf32>
    tpu.vector_store %arg12[%162, %c0_93], %161 {strides = array<i32>} : memref<64x32xf32, #tpu.memory_space<vmem>>, vector<8x32xf32>,
    %c2_i32 = arith.constant 2 : i32
    %c8_i32_94 = arith.constant 8 : i32
    %164 = arith.muli %c2_i32, %c8_i32_94 : i32
    %c7_i32_95 = arith.constant 7 : i32
    %165 = arith.subi %c7_i32_95, %c2_i32 : i32
    %c8_i32_96 = arith.constant 8 : i32
    %166 = arith.muli %165, %c8_i32_96 : i32
    %167 = arith.index_cast %164 : i32 to index
    %c0_97 = arith.constant 0 : index
    %168 = vector.load %arg9[%167, %c0_97] : memref<64x32xf32, #tpu.memory_space<vmem>>, vector<8x32xf32>
    %169 = arith.index_cast %166 : i32 to index
    %c0_98 = arith.constant 0 : index
    %170 = vector.load %arg9[%169, %c0_98] : memref<64x32xf32, #tpu.memory_space<vmem>>, vector<8x32xf32>
    %171 = vector.shape_cast %2 : vector<1x32xi1> to vector<1x32xi1>
    %172 = vector.broadcast %171 : vector<1x32xi1> to vector<8x32xi1>
    %173 = arith.select %172, %168, %170 : vector<8x32xi1>, vector<8x32xf32>
    %174 = arith.index_cast %164 : i32 to index
    %c0_99 = arith.constant 0 : index
    %175 = vector.load %arg10[%174, %c0_99] : memref<64x32xf32, #tpu.memory_space<vmem>>, vector<8x32xf32>
    %176 = arith.index_cast %166 : i32 to index
    %c0_100 = arith.constant 0 : index
    %177 = vector.load %arg10[%176, %c0_100] : memref<64x32xf32, #tpu.memory_space<vmem>>, vector<8x32xf32>
    %178 = vector.shape_cast %2 : vector<1x32xi1> to vector<1x32xi1>
    %179 = vector.broadcast %178 : vector<1x32xi1> to vector<8x32xi1>
    %180 = arith.select %179, %175, %177 : vector<8x32xi1>, vector<8x32xf32>
    %181 = arith.index_cast %164 : i32 to index
    %c0_101 = arith.constant 0 : index
    %182 = vector.load %arg11[%181, %c0_101] : memref<64x32xf32, #tpu.memory_space<vmem>>, vector<8x32xf32>
    %183 = arith.index_cast %166 : i32 to index
    %c0_102 = arith.constant 0 : index
    %184 = vector.load %arg11[%183, %c0_102] : memref<64x32xf32, #tpu.memory_space<vmem>>, vector<8x32xf32>
    %185 = vector.shape_cast %2 : vector<1x32xi1> to vector<1x32xi1>
    %186 = vector.broadcast %185 : vector<1x32xi1> to vector<8x32xi1>
    %187 = arith.select %186, %182, %184 : vector<8x32xi1>, vector<8x32xf32>
    %cst_103 = arith.constant dense<0.000000e+00> : vector<8x32xf32>
    %188 = tpu.matmul %161, %36, %cst_103 {dimension_numbers = #tpu.dot_dimension_numbers<[1], [0], [0], [1], [0, 0, 1, 1], [], []>} : vector<8x32xf32>, vector<32x32xf32>, vector<8x32xf32> -> vector<8x32xf32>
    %189 = vector.broadcast %42 : vector<1x32xf32> to vector<8x32xf32>
    %190 = arith.addf %188, %189 : vector<8x32xf32>
    %cst_104 = arith.constant dense<0.000000e+00> : vector<8x32xf32>
    %191 = tpu.matmul %161, %38, %cst_104 {dimension_numbers = #tpu.dot_dimension_numbers<[1], [0], [0], [1], [0, 0, 1, 1], [], []>} : vector<8x32xf32>, vector<32x32xf32>, vector<8x32xf32> -> vector<8x32xf32>
    %192 = vector.broadcast %44 : vector<1x32xf32> to vector<8x32xf32>
    %193 = arith.addf %191, %192 : vector<8x32xf32>
    %cst_105 = arith.constant dense<0.000000e+00> : vector<8x32xf32>
    %194 = tpu.matmul %161, %40, %cst_105 {dimension_numbers = #tpu.dot_dimension_numbers<[1], [0], [0], [1], [0, 0, 1, 1], [], []>} : vector<8x32xf32>, vector<32x32xf32>, vector<8x32xf32> -> vector<8x32xf32>
    %195 = vector.broadcast %46 : vector<1x32xf32> to vector<8x32xf32>
    %196 = arith.addf %194, %195 : vector<8x32xf32>
    %197 = arith.addf %173, %190 : vector<8x32xf32>
    %198 = arith.negf %197 : vector<8x32xf32>
    %199 = math.exp %198 : vector<8x32xf32>
    %cst_106 = arith.constant 1.000000e+00 : f32
    %200 = vector.broadcast %cst_106 : f32 to vector<8x32xf32>
    %201 = arith.addf %200, %199 : vector<8x32xf32>
    %202 = arith.divf %200, %201 : vector<8x32xf32>
    %203 = arith.addf %180, %193 : vector<8x32xf32>
    %204 = arith.negf %203 : vector<8x32xf32>
    %205 = math.exp %204 : vector<8x32xf32>
    %cst_107 = arith.constant 1.000000e+00 : f32
    %206 = vector.broadcast %cst_107 : f32 to vector<8x32xf32>
    %207 = arith.addf %206, %205 : vector<8x32xf32>
    %208 = arith.divf %206, %207 : vector<8x32xf32>
    %209 = arith.mulf %202, %196 : vector<8x32xf32>
    %210 = arith.addf %187, %209 : vector<8x32xf32>
    %211 = math.tanh %210 : vector<8x32xf32>
    %212 = arith.subf %161, %211 : vector<8x32xf32>
    %213 = arith.mulf %208, %212 : vector<8x32xf32>
    %214 = arith.addf %211, %213 : vector<8x32xf32>
    %215 = arith.index_cast %164 : i32 to index
    %c0_108 = arith.constant 0 : index
    %216 = vector.load %arg1[%215, %c0_108] : memref<64x32xf32, #tpu.memory_space<vmem>>, vector<8x32xf32>
    %cst_109 = arith.constant 0.000000e+00 : f32
    %217 = vector.broadcast %cst_109 : f32 to vector<8x32xf32>
    %218 = arith.cmpf one, %216, %217 : vector<8x32xf32>
    %219 = arith.select %218, %214, %161 : vector<8x32xi1>, vector<8x32xf32>
    %220 = arith.index_cast %164 : i32 to index
    %c0_110 = arith.constant 0 : index
    %221 = vector.load %arg12[%220, %c0_110] : memref<64x32xf32, #tpu.memory_space<vmem>>, vector<8x32xf32>
    tpu.vector_store %arg12[%220, %c0_110], %219 {strides = array<i32>} : memref<64x32xf32, #tpu.memory_space<vmem>>, vector<8x32xf32>,
    %c3_i32 = arith.constant 3 : i32
    %c8_i32_111 = arith.constant 8 : i32
    %222 = arith.muli %c3_i32, %c8_i32_111 : i32
    %c7_i32_112 = arith.constant 7 : i32
    %223 = arith.subi %c7_i32_112, %c3_i32 : i32
    %c8_i32_113 = arith.constant 8 : i32
    %224 = arith.muli %223, %c8_i32_113 : i32
    %225 = arith.index_cast %222 : i32 to index
    %c0_114 = arith.constant 0 : index
    %226 = vector.load %arg9[%225, %c0_114] : memref<64x32xf32, #tpu.memory_space<vmem>>, vector<8x32xf32>
    %227 = arith.index_cast %224 : i32 to index
    %c0_115 = arith.constant 0 : index
    %228 = vector.load %arg9[%227, %c0_115] : memref<64x32xf32, #tpu.memory_space<vmem>>, vector<8x32xf32>
    %229 = vector.shape_cast %2 : vector<1x32xi1> to vector<1x32xi1>
    %230 = vector.broadcast %229 : vector<1x32xi1> to vector<8x32xi1>
    %231 = arith.select %230, %226, %228 : vector<8x32xi1>, vector<8x32xf32>
    %232 = arith.index_cast %222 : i32 to index
    %c0_116 = arith.constant 0 : index
    %233 = vector.load %arg10[%232, %c0_116] : memref<64x32xf32, #tpu.memory_space<vmem>>, vector<8x32xf32>
    %234 = arith.index_cast %224 : i32 to index
    %c0_117 = arith.constant 0 : index
    %235 = vector.load %arg10[%234, %c0_117] : memref<64x32xf32, #tpu.memory_space<vmem>>, vector<8x32xf32>
    %236 = vector.shape_cast %2 : vector<1x32xi1> to vector<1x32xi1>
    %237 = vector.broadcast %236 : vector<1x32xi1> to vector<8x32xi1>
    %238 = arith.select %237, %233, %235 : vector<8x32xi1>, vector<8x32xf32>
    %239 = arith.index_cast %222 : i32 to index
    %c0_118 = arith.constant 0 : index
    %240 = vector.load %arg11[%239, %c0_118] : memref<64x32xf32, #tpu.memory_space<vmem>>, vector<8x32xf32>
    %241 = arith.index_cast %224 : i32 to index
    %c0_119 = arith.constant 0 : index
    %242 = vector.load %arg11[%241, %c0_119] : memref<64x32xf32, #tpu.memory_space<vmem>>, vector<8x32xf32>
    %243 = vector.shape_cast %2 : vector<1x32xi1> to vector<1x32xi1>
    %244 = vector.broadcast %243 : vector<1x32xi1> to vector<8x32xi1>
    %245 = arith.select %244, %240, %242 : vector<8x32xi1>, vector<8x32xf32>
    %cst_120 = arith.constant dense<0.000000e+00> : vector<8x32xf32>
    %246 = tpu.matmul %219, %36, %cst_120 {dimension_numbers = #tpu.dot_dimension_numbers<[1], [0], [0], [1], [0, 0, 1, 1], [], []>} : vector<8x32xf32>, vector<32x32xf32>, vector<8x32xf32> -> vector<8x32xf32>
    %247 = vector.broadcast %42 : vector<1x32xf32> to vector<8x32xf32>
    %248 = arith.addf %246, %247 : vector<8x32xf32>
    %cst_121 = arith.constant dense<0.000000e+00> : vector<8x32xf32>
    %249 = tpu.matmul %219, %38, %cst_121 {dimension_numbers = #tpu.dot_dimension_numbers<[1], [0], [0], [1], [0, 0, 1, 1], [], []>} : vector<8x32xf32>, vector<32x32xf32>, vector<8x32xf32> -> vector<8x32xf32>
    %250 = vector.broadcast %44 : vector<1x32xf32> to vector<8x32xf32>
    %251 = arith.addf %249, %250 : vector<8x32xf32>
    %cst_122 = arith.constant dense<0.000000e+00> : vector<8x32xf32>
    %252 = tpu.matmul %219, %40, %cst_122 {dimension_numbers = #tpu.dot_dimension_numbers<[1], [0], [0], [1], [0, 0, 1, 1], [], []>} : vector<8x32xf32>, vector<32x32xf32>, vector<8x32xf32> -> vector<8x32xf32>
    %253 = vector.broadcast %46 : vector<1x32xf32> to vector<8x32xf32>
    %254 = arith.addf %252, %253 : vector<8x32xf32>
    %255 = arith.addf %231, %248 : vector<8x32xf32>
    %256 = arith.negf %255 : vector<8x32xf32>
    %257 = math.exp %256 : vector<8x32xf32>
    %cst_123 = arith.constant 1.000000e+00 : f32
    %258 = vector.broadcast %cst_123 : f32 to vector<8x32xf32>
    %259 = arith.addf %258, %257 : vector<8x32xf32>
    %260 = arith.divf %258, %259 : vector<8x32xf32>
    %261 = arith.addf %238, %251 : vector<8x32xf32>
    %262 = arith.negf %261 : vector<8x32xf32>
    %263 = math.exp %262 : vector<8x32xf32>
    %cst_124 = arith.constant 1.000000e+00 : f32
    %264 = vector.broadcast %cst_124 : f32 to vector<8x32xf32>
    %265 = arith.addf %264, %263 : vector<8x32xf32>
    %266 = arith.divf %264, %265 : vector<8x32xf32>
    %267 = arith.mulf %260, %254 : vector<8x32xf32>
    %268 = arith.addf %245, %267 : vector<8x32xf32>
    %269 = math.tanh %268 : vector<8x32xf32>
    %270 = arith.subf %219, %269 : vector<8x32xf32>
    %271 = arith.mulf %266, %270 : vector<8x32xf32>
    %272 = arith.addf %269, %271 : vector<8x32xf32>
    %273 = arith.index_cast %222 : i32 to index
    %c0_125 = arith.constant 0 : index
    %274 = vector.load %arg1[%273, %c0_125] : memref<64x32xf32, #tpu.memory_space<vmem>>, vector<8x32xf32>
    %cst_126 = arith.constant 0.000000e+00 : f32
    %275 = vector.broadcast %cst_126 : f32 to vector<8x32xf32>
    %276 = arith.cmpf one, %274, %275 : vector<8x32xf32>
    %277 = arith.select %276, %272, %219 : vector<8x32xi1>, vector<8x32xf32>
    %278 = arith.index_cast %222 : i32 to index
    %c0_127 = arith.constant 0 : index
    %279 = vector.load %arg12[%278, %c0_127] : memref<64x32xf32, #tpu.memory_space<vmem>>, vector<8x32xf32>
    tpu.vector_store %arg12[%278, %c0_127], %277 {strides = array<i32>} : memref<64x32xf32, #tpu.memory_space<vmem>>, vector<8x32xf32>,
    %c4_i32 = arith.constant 4 : i32
    %c8_i32_128 = arith.constant 8 : i32
    %280 = arith.muli %c4_i32, %c8_i32_128 : i32
    %c7_i32_129 = arith.constant 7 : i32
    %281 = arith.subi %c7_i32_129, %c4_i32 : i32
    %c8_i32_130 = arith.constant 8 : i32
    %282 = arith.muli %281, %c8_i32_130 : i32
    %283 = arith.index_cast %280 : i32 to index
    %c0_131 = arith.constant 0 : index
    %284 = vector.load %arg9[%283, %c0_131] : memref<64x32xf32, #tpu.memory_space<vmem>>, vector<8x32xf32>
    %285 = arith.index_cast %282 : i32 to index
    %c0_132 = arith.constant 0 : index
    %286 = vector.load %arg9[%285, %c0_132] : memref<64x32xf32, #tpu.memory_space<vmem>>, vector<8x32xf32>
    %287 = vector.shape_cast %2 : vector<1x32xi1> to vector<1x32xi1>
    %288 = vector.broadcast %287 : vector<1x32xi1> to vector<8x32xi1>
    %289 = arith.select %288, %284, %286 : vector<8x32xi1>, vector<8x32xf32>
    %290 = arith.index_cast %280 : i32 to index
    %c0_133 = arith.constant 0 : index
    %291 = vector.load %arg10[%290, %c0_133] : memref<64x32xf32, #tpu.memory_space<vmem>>, vector<8x32xf32>
    %292 = arith.index_cast %282 : i32 to index
    %c0_134 = arith.constant 0 : index
    %293 = vector.load %arg10[%292, %c0_134] : memref<64x32xf32, #tpu.memory_space<vmem>>, vector<8x32xf32>
    %294 = vector.shape_cast %2 : vector<1x32xi1> to vector<1x32xi1>
    %295 = vector.broadcast %294 : vector<1x32xi1> to vector<8x32xi1>
    %296 = arith.select %295, %291, %293 : vector<8x32xi1>, vector<8x32xf32>
    %297 = arith.index_cast %280 : i32 to index
    %c0_135 = arith.constant 0 : index
    %298 = vector.load %arg11[%297, %c0_135] : memref<64x32xf32, #tpu.memory_space<vmem>>, vector<8x32xf32>
    %299 = arith.index_cast %282 : i32 to index
    %c0_136 = arith.constant 0 : index
    %300 = vector.load %arg11[%299, %c0_136] : memref<64x32xf32, #tpu.memory_space<vmem>>, vector<8x32xf32>
    %301 = vector.shape_cast %2 : vector<1x32xi1> to vector<1x32xi1>
    %302 = vector.broadcast %301 : vector<1x32xi1> to vector<8x32xi1>
    %303 = arith.select %302, %298, %300 : vector<8x32xi1>, vector<8x32xf32>
    %cst_137 = arith.constant dense<0.000000e+00> : vector<8x32xf32>
    %304 = tpu.matmul %277, %36, %cst_137 {dimension_numbers = #tpu.dot_dimension_numbers<[1], [0], [0], [1], [0, 0, 1, 1], [], []>} : vector<8x32xf32>, vector<32x32xf32>, vector<8x32xf32> -> vector<8x32xf32>
    %305 = vector.broadcast %42 : vector<1x32xf32> to vector<8x32xf32>
    %306 = arith.addf %304, %305 : vector<8x32xf32>
    %cst_138 = arith.constant dense<0.000000e+00> : vector<8x32xf32>
    %307 = tpu.matmul %277, %38, %cst_138 {dimension_numbers = #tpu.dot_dimension_numbers<[1], [0], [0], [1], [0, 0, 1, 1], [], []>} : vector<8x32xf32>, vector<32x32xf32>, vector<8x32xf32> -> vector<8x32xf32>
    %308 = vector.broadcast %44 : vector<1x32xf32> to vector<8x32xf32>
    %309 = arith.addf %307, %308 : vector<8x32xf32>
    %cst_139 = arith.constant dense<0.000000e+00> : vector<8x32xf32>
    %310 = tpu.matmul %277, %40, %cst_139 {dimension_numbers = #tpu.dot_dimension_numbers<[1], [0], [0], [1], [0, 0, 1, 1], [], []>} : vector<8x32xf32>, vector<32x32xf32>, vector<8x32xf32> -> vector<8x32xf32>
    %311 = vector.broadcast %46 : vector<1x32xf32> to vector<8x32xf32>
    %312 = arith.addf %310, %311 : vector<8x32xf32>
    %313 = arith.addf %289, %306 : vector<8x32xf32>
    %314 = arith.negf %313 : vector<8x32xf32>
    %315 = math.exp %314 : vector<8x32xf32>
    %cst_140 = arith.constant 1.000000e+00 : f32
    %316 = vector.broadcast %cst_140 : f32 to vector<8x32xf32>
    %317 = arith.addf %316, %315 : vector<8x32xf32>
    %318 = arith.divf %316, %317 : vector<8x32xf32>
    %319 = arith.addf %296, %309 : vector<8x32xf32>
    %320 = arith.negf %319 : vector<8x32xf32>
    %321 = math.exp %320 : vector<8x32xf32>
    %cst_141 = arith.constant 1.000000e+00 : f32
    %322 = vector.broadcast %cst_141 : f32 to vector<8x32xf32>
    %323 = arith.addf %322, %321 : vector<8x32xf32>
    %324 = arith.divf %322, %323 : vector<8x32xf32>
    %325 = arith.mulf %318, %312 : vector<8x32xf32>
    %326 = arith.addf %303, %325 : vector<8x32xf32>
    %327 = math.tanh %326 : vector<8x32xf32>
    %328 = arith.subf %277, %327 : vector<8x32xf32>
    %329 = arith.mulf %324, %328 : vector<8x32xf32>
    %330 = arith.addf %327, %329 : vector<8x32xf32>
    %331 = arith.index_cast %280 : i32 to index
    %c0_142 = arith.constant 0 : index
    %332 = vector.load %arg1[%331, %c0_142] : memref<64x32xf32, #tpu.memory_space<vmem>>, vector<8x32xf32>
    %cst_143 = arith.constant 0.000000e+00 : f32
    %333 = vector.broadcast %cst_143 : f32 to vector<8x32xf32>
    %334 = arith.cmpf one, %332, %333 : vector<8x32xf32>
    %335 = arith.select %334, %330, %277 : vector<8x32xi1>, vector<8x32xf32>
    %336 = arith.index_cast %280 : i32 to index
    %c0_144 = arith.constant 0 : index
    %337 = vector.load %arg12[%336, %c0_144] : memref<64x32xf32, #tpu.memory_space<vmem>>, vector<8x32xf32>
    tpu.vector_store %arg12[%336, %c0_144], %335 {strides = array<i32>} : memref<64x32xf32, #tpu.memory_space<vmem>>, vector<8x32xf32>,
    %c5_i32 = arith.constant 5 : i32
    %c8_i32_145 = arith.constant 8 : i32
    %338 = arith.muli %c5_i32, %c8_i32_145 : i32
    %c7_i32_146 = arith.constant 7 : i32
    %339 = arith.subi %c7_i32_146, %c5_i32 : i32
    %c8_i32_147 = arith.constant 8 : i32
    %340 = arith.muli %339, %c8_i32_147 : i32
    %341 = arith.index_cast %338 : i32 to index
    %c0_148 = arith.constant 0 : index
    %342 = vector.load %arg9[%341, %c0_148] : memref<64x32xf32, #tpu.memory_space<vmem>>, vector<8x32xf32>
    %343 = arith.index_cast %340 : i32 to index
    %c0_149 = arith.constant 0 : index
    %344 = vector.load %arg9[%343, %c0_149] : memref<64x32xf32, #tpu.memory_space<vmem>>, vector<8x32xf32>
    %345 = vector.shape_cast %2 : vector<1x32xi1> to vector<1x32xi1>
    %346 = vector.broadcast %345 : vector<1x32xi1> to vector<8x32xi1>
    %347 = arith.select %346, %342, %344 : vector<8x32xi1>, vector<8x32xf32>
    %348 = arith.index_cast %338 : i32 to index
    %c0_150 = arith.constant 0 : index
    %349 = vector.load %arg10[%348, %c0_150] : memref<64x32xf32, #tpu.memory_space<vmem>>, vector<8x32xf32>
    %350 = arith.index_cast %340 : i32 to index
    %c0_151 = arith.constant 0 : index
    %351 = vector.load %arg10[%350, %c0_151] : memref<64x32xf32, #tpu.memory_space<vmem>>, vector<8x32xf32>
    %352 = vector.shape_cast %2 : vector<1x32xi1> to vector<1x32xi1>
    %353 = vector.broadcast %352 : vector<1x32xi1> to vector<8x32xi1>
    %354 = arith.select %353, %349, %351 : vector<8x32xi1>, vector<8x32xf32>
    %355 = arith.index_cast %338 : i32 to index
    %c0_152 = arith.constant 0 : index
    %356 = vector.load %arg11[%355, %c0_152] : memref<64x32xf32, #tpu.memory_space<vmem>>, vector<8x32xf32>
    %357 = arith.index_cast %340 : i32 to index
    %c0_153 = arith.constant 0 : index
    %358 = vector.load %arg11[%357, %c0_153] : memref<64x32xf32, #tpu.memory_space<vmem>>, vector<8x32xf32>
    %359 = vector.shape_cast %2 : vector<1x32xi1> to vector<1x32xi1>
    %360 = vector.broadcast %359 : vector<1x32xi1> to vector<8x32xi1>
    %361 = arith.select %360, %356, %358 : vector<8x32xi1>, vector<8x32xf32>
    %cst_154 = arith.constant dense<0.000000e+00> : vector<8x32xf32>
    %362 = tpu.matmul %335, %36, %cst_154 {dimension_numbers = #tpu.dot_dimension_numbers<[1], [0], [0], [1], [0, 0, 1, 1], [], []>} : vector<8x32xf32>, vector<32x32xf32>, vector<8x32xf32> -> vector<8x32xf32>
    %363 = vector.broadcast %42 : vector<1x32xf32> to vector<8x32xf32>
    %364 = arith.addf %362, %363 : vector<8x32xf32>
    %cst_155 = arith.constant dense<0.000000e+00> : vector<8x32xf32>
    %365 = tpu.matmul %335, %38, %cst_155 {dimension_numbers = #tpu.dot_dimension_numbers<[1], [0], [0], [1], [0, 0, 1, 1], [], []>} : vector<8x32xf32>, vector<32x32xf32>, vector<8x32xf32> -> vector<8x32xf32>
    %366 = vector.broadcast %44 : vector<1x32xf32> to vector<8x32xf32>
    %367 = arith.addf %365, %366 : vector<8x32xf32>
    %cst_156 = arith.constant dense<0.000000e+00> : vector<8x32xf32>
    %368 = tpu.matmul %335, %40, %cst_156 {dimension_numbers = #tpu.dot_dimension_numbers<[1], [0], [0], [1], [0, 0, 1, 1], [], []>} : vector<8x32xf32>, vector<32x32xf32>, vector<8x32xf32> -> vector<8x32xf32>
    %369 = vector.broadcast %46 : vector<1x32xf32> to vector<8x32xf32>
    %370 = arith.addf %368, %369 : vector<8x32xf32>
    %371 = arith.addf %347, %364 : vector<8x32xf32>
    %372 = arith.negf %371 : vector<8x32xf32>
    %373 = math.exp %372 : vector<8x32xf32>
    %cst_157 = arith.constant 1.000000e+00 : f32
    %374 = vector.broadcast %cst_157 : f32 to vector<8x32xf32>
    %375 = arith.addf %374, %373 : vector<8x32xf32>
    %376 = arith.divf %374, %375 : vector<8x32xf32>
    %377 = arith.addf %354, %367 : vector<8x32xf32>
    %378 = arith.negf %377 : vector<8x32xf32>
    %379 = math.exp %378 : vector<8x32xf32>
    %cst_158 = arith.constant 1.000000e+00 : f32
    %380 = vector.broadcast %cst_158 : f32 to vector<8x32xf32>
    %381 = arith.addf %380, %379 : vector<8x32xf32>
    %382 = arith.divf %380, %381 : vector<8x32xf32>
    %383 = arith.mulf %376, %370 : vector<8x32xf32>
    %384 = arith.addf %361, %383 : vector<8x32xf32>
    %385 = math.tanh %384 : vector<8x32xf32>
    %386 = arith.subf %335, %385 : vector<8x32xf32>
    %387 = arith.mulf %382, %386 : vector<8x32xf32>
    %388 = arith.addf %385, %387 : vector<8x32xf32>
    %389 = arith.index_cast %338 : i32 to index
    %c0_159 = arith.constant 0 : index
    %390 = vector.load %arg1[%389, %c0_159] : memref<64x32xf32, #tpu.memory_space<vmem>>, vector<8x32xf32>
    %cst_160 = arith.constant 0.000000e+00 : f32
    %391 = vector.broadcast %cst_160 : f32 to vector<8x32xf32>
    %392 = arith.cmpf one, %390, %391 : vector<8x32xf32>
    %393 = arith.select %392, %388, %335 : vector<8x32xi1>, vector<8x32xf32>
    %394 = arith.index_cast %338 : i32 to index
    %c0_161 = arith.constant 0 : index
    %395 = vector.load %arg12[%394, %c0_161] : memref<64x32xf32, #tpu.memory_space<vmem>>, vector<8x32xf32>
    tpu.vector_store %arg12[%394, %c0_161], %393 {strides = array<i32>} : memref<64x32xf32, #tpu.memory_space<vmem>>, vector<8x32xf32>,
    %c6_i32 = arith.constant 6 : i32
    %c8_i32_162 = arith.constant 8 : i32
    %396 = arith.muli %c6_i32, %c8_i32_162 : i32
    %c7_i32_163 = arith.constant 7 : i32
    %397 = arith.subi %c7_i32_163, %c6_i32 : i32
    %c8_i32_164 = arith.constant 8 : i32
    %398 = arith.muli %397, %c8_i32_164 : i32
    %399 = arith.index_cast %396 : i32 to index
    %c0_165 = arith.constant 0 : index
    %400 = vector.load %arg9[%399, %c0_165] : memref<64x32xf32, #tpu.memory_space<vmem>>, vector<8x32xf32>
    %401 = arith.index_cast %398 : i32 to index
    %c0_166 = arith.constant 0 : index
    %402 = vector.load %arg9[%401, %c0_166] : memref<64x32xf32, #tpu.memory_space<vmem>>, vector<8x32xf32>
    %403 = vector.shape_cast %2 : vector<1x32xi1> to vector<1x32xi1>
    %404 = vector.broadcast %403 : vector<1x32xi1> to vector<8x32xi1>
    %405 = arith.select %404, %400, %402 : vector<8x32xi1>, vector<8x32xf32>
    %406 = arith.index_cast %396 : i32 to index
    %c0_167 = arith.constant 0 : index
    %407 = vector.load %arg10[%406, %c0_167] : memref<64x32xf32, #tpu.memory_space<vmem>>, vector<8x32xf32>
    %408 = arith.index_cast %398 : i32 to index
    %c0_168 = arith.constant 0 : index
    %409 = vector.load %arg10[%408, %c0_168] : memref<64x32xf32, #tpu.memory_space<vmem>>, vector<8x32xf32>
    %410 = vector.shape_cast %2 : vector<1x32xi1> to vector<1x32xi1>
    %411 = vector.broadcast %410 : vector<1x32xi1> to vector<8x32xi1>
    %412 = arith.select %411, %407, %409 : vector<8x32xi1>, vector<8x32xf32>
    %413 = arith.index_cast %396 : i32 to index
    %c0_169 = arith.constant 0 : index
    %414 = vector.load %arg11[%413, %c0_169] : memref<64x32xf32, #tpu.memory_space<vmem>>, vector<8x32xf32>
    %415 = arith.index_cast %398 : i32 to index
    %c0_170 = arith.constant 0 : index
    %416 = vector.load %arg11[%415, %c0_170] : memref<64x32xf32, #tpu.memory_space<vmem>>, vector<8x32xf32>
    %417 = vector.shape_cast %2 : vector<1x32xi1> to vector<1x32xi1>
    %418 = vector.broadcast %417 : vector<1x32xi1> to vector<8x32xi1>
    %419 = arith.select %418, %414, %416 : vector<8x32xi1>, vector<8x32xf32>
    %cst_171 = arith.constant dense<0.000000e+00> : vector<8x32xf32>
    %420 = tpu.matmul %393, %36, %cst_171 {dimension_numbers = #tpu.dot_dimension_numbers<[1], [0], [0], [1], [0, 0, 1, 1], [], []>} : vector<8x32xf32>, vector<32x32xf32>, vector<8x32xf32> -> vector<8x32xf32>
    %421 = vector.broadcast %42 : vector<1x32xf32> to vector<8x32xf32>
    %422 = arith.addf %420, %421 : vector<8x32xf32>
    %cst_172 = arith.constant dense<0.000000e+00> : vector<8x32xf32>
    %423 = tpu.matmul %393, %38, %cst_172 {dimension_numbers = #tpu.dot_dimension_numbers<[1], [0], [0], [1], [0, 0, 1, 1], [], []>} : vector<8x32xf32>, vector<32x32xf32>, vector<8x32xf32> -> vector<8x32xf32>
    %424 = vector.broadcast %44 : vector<1x32xf32> to vector<8x32xf32>
    %425 = arith.addf %423, %424 : vector<8x32xf32>
    %cst_173 = arith.constant dense<0.000000e+00> : vector<8x32xf32>
    %426 = tpu.matmul %393, %40, %cst_173 {dimension_numbers = #tpu.dot_dimension_numbers<[1], [0], [0], [1], [0, 0, 1, 1], [], []>} : vector<8x32xf32>, vector<32x32xf32>, vector<8x32xf32> -> vector<8x32xf32>
    %427 = vector.broadcast %46 : vector<1x32xf32> to vector<8x32xf32>
    %428 = arith.addf %426, %427 : vector<8x32xf32>
    %429 = arith.addf %405, %422 : vector<8x32xf32>
    %430 = arith.negf %429 : vector<8x32xf32>
    %431 = math.exp %430 : vector<8x32xf32>
    %cst_174 = arith.constant 1.000000e+00 : f32
    %432 = vector.broadcast %cst_174 : f32 to vector<8x32xf32>
    %433 = arith.addf %432, %431 : vector<8x32xf32>
    %434 = arith.divf %432, %433 : vector<8x32xf32>
    %435 = arith.addf %412, %425 : vector<8x32xf32>
    %436 = arith.negf %435 : vector<8x32xf32>
    %437 = math.exp %436 : vector<8x32xf32>
    %cst_175 = arith.constant 1.000000e+00 : f32
    %438 = vector.broadcast %cst_175 : f32 to vector<8x32xf32>
    %439 = arith.addf %438, %437 : vector<8x32xf32>
    %440 = arith.divf %438, %439 : vector<8x32xf32>
    %441 = arith.mulf %434, %428 : vector<8x32xf32>
    %442 = arith.addf %419, %441 : vector<8x32xf32>
    %443 = math.tanh %442 : vector<8x32xf32>
    %444 = arith.subf %393, %443 : vector<8x32xf32>
    %445 = arith.mulf %440, %444 : vector<8x32xf32>
    %446 = arith.addf %443, %445 : vector<8x32xf32>
    %447 = arith.index_cast %396 : i32 to index
    %c0_176 = arith.constant 0 : index
    %448 = vector.load %arg1[%447, %c0_176] : memref<64x32xf32, #tpu.memory_space<vmem>>, vector<8x32xf32>
    %cst_177 = arith.constant 0.000000e+00 : f32
    %449 = vector.broadcast %cst_177 : f32 to vector<8x32xf32>
    %450 = arith.cmpf one, %448, %449 : vector<8x32xf32>
    %451 = arith.select %450, %446, %393 : vector<8x32xi1>, vector<8x32xf32>
    %452 = arith.index_cast %396 : i32 to index
    %c0_178 = arith.constant 0 : index
    %453 = vector.load %arg12[%452, %c0_178] : memref<64x32xf32, #tpu.memory_space<vmem>>, vector<8x32xf32>
    tpu.vector_store %arg12[%452, %c0_178], %451 {strides = array<i32>} : memref<64x32xf32, #tpu.memory_space<vmem>>, vector<8x32xf32>,
    %c7_i32_179 = arith.constant 7 : i32
    %c8_i32_180 = arith.constant 8 : i32
    %454 = arith.muli %c7_i32_179, %c8_i32_180 : i32
    %c7_i32_181 = arith.constant 7 : i32
    %455 = arith.subi %c7_i32_181, %c7_i32_179 : i32
    %c8_i32_182 = arith.constant 8 : i32
    %456 = arith.muli %455, %c8_i32_182 : i32
    %457 = arith.index_cast %454 : i32 to index
    %c0_183 = arith.constant 0 : index
    %458 = vector.load %arg9[%457, %c0_183] : memref<64x32xf32, #tpu.memory_space<vmem>>, vector<8x32xf32>
    %459 = arith.index_cast %456 : i32 to index
    %c0_184 = arith.constant 0 : index
    %460 = vector.load %arg9[%459, %c0_184] : memref<64x32xf32, #tpu.memory_space<vmem>>, vector<8x32xf32>
    %461 = vector.shape_cast %2 : vector<1x32xi1> to vector<1x32xi1>
    %462 = vector.broadcast %461 : vector<1x32xi1> to vector<8x32xi1>
    %463 = arith.select %462, %458, %460 : vector<8x32xi1>, vector<8x32xf32>
    %464 = arith.index_cast %454 : i32 to index
    %c0_185 = arith.constant 0 : index
    %465 = vector.load %arg10[%464, %c0_185] : memref<64x32xf32, #tpu.memory_space<vmem>>, vector<8x32xf32>
    %466 = arith.index_cast %456 : i32 to index
    %c0_186 = arith.constant 0 : index
    %467 = vector.load %arg10[%466, %c0_186] : memref<64x32xf32, #tpu.memory_space<vmem>>, vector<8x32xf32>
    %468 = vector.shape_cast %2 : vector<1x32xi1> to vector<1x32xi1>
    %469 = vector.broadcast %468 : vector<1x32xi1> to vector<8x32xi1>
    %470 = arith.select %469, %465, %467 : vector<8x32xi1>, vector<8x32xf32>
    %471 = arith.index_cast %454 : i32 to index
    %c0_187 = arith.constant 0 : index
    %472 = vector.load %arg11[%471, %c0_187] : memref<64x32xf32, #tpu.memory_space<vmem>>, vector<8x32xf32>
    %473 = arith.index_cast %456 : i32 to index
    %c0_188 = arith.constant 0 : index
    %474 = vector.load %arg11[%473, %c0_188] : memref<64x32xf32, #tpu.memory_space<vmem>>, vector<8x32xf32>
    %475 = vector.shape_cast %2 : vector<1x32xi1> to vector<1x32xi1>
    %476 = vector.broadcast %475 : vector<1x32xi1> to vector<8x32xi1>
    %477 = arith.select %476, %472, %474 : vector<8x32xi1>, vector<8x32xf32>
    %cst_189 = arith.constant dense<0.000000e+00> : vector<8x32xf32>
    %478 = tpu.matmul %451, %36, %cst_189 {dimension_numbers = #tpu.dot_dimension_numbers<[1], [0], [0], [1], [0, 0, 1, 1], [], []>} : vector<8x32xf32>, vector<32x32xf32>, vector<8x32xf32> -> vector<8x32xf32>
    %479 = vector.broadcast %42 : vector<1x32xf32> to vector<8x32xf32>
    %480 = arith.addf %478, %479 : vector<8x32xf32>
    %cst_190 = arith.constant dense<0.000000e+00> : vector<8x32xf32>
    %481 = tpu.matmul %451, %38, %cst_190 {dimension_numbers = #tpu.dot_dimension_numbers<[1], [0], [0], [1], [0, 0, 1, 1], [], []>} : vector<8x32xf32>, vector<32x32xf32>, vector<8x32xf32> -> vector<8x32xf32>
    %482 = vector.broadcast %44 : vector<1x32xf32> to vector<8x32xf32>
    %483 = arith.addf %481, %482 : vector<8x32xf32>
    %cst_191 = arith.constant dense<0.000000e+00> : vector<8x32xf32>
    %484 = tpu.matmul %451, %40, %cst_191 {dimension_numbers = #tpu.dot_dimension_numbers<[1], [0], [0], [1], [0, 0, 1, 1], [], []>} : vector<8x32xf32>, vector<32x32xf32>, vector<8x32xf32> -> vector<8x32xf32>
    %485 = vector.broadcast %46 : vector<1x32xf32> to vector<8x32xf32>
    %486 = arith.addf %484, %485 : vector<8x32xf32>
    %487 = arith.addf %463, %480 : vector<8x32xf32>
    %488 = arith.negf %487 : vector<8x32xf32>
    %489 = math.exp %488 : vector<8x32xf32>
    %cst_192 = arith.constant 1.000000e+00 : f32
    %490 = vector.broadcast %cst_192 : f32 to vector<8x32xf32>
    %491 = arith.addf %490, %489 : vector<8x32xf32>
    %492 = arith.divf %490, %491 : vector<8x32xf32>
    %493 = arith.addf %470, %483 : vector<8x32xf32>
    %494 = arith.negf %493 : vector<8x32xf32>
    %495 = math.exp %494 : vector<8x32xf32>
    %cst_193 = arith.constant 1.000000e+00 : f32
    %496 = vector.broadcast %cst_193 : f32 to vector<8x32xf32>
    %497 = arith.addf %496, %495 : vector<8x32xf32>
    %498 = arith.divf %496, %497 : vector<8x32xf32>
    %499 = arith.mulf %492, %486 : vector<8x32xf32>
    %500 = arith.addf %477, %499 : vector<8x32xf32>
    %501 = math.tanh %500 : vector<8x32xf32>
    %502 = arith.subf %451, %501 : vector<8x32xf32>
    %503 = arith.mulf %498, %502 : vector<8x32xf32>
    %504 = arith.addf %501, %503 : vector<8x32xf32>
    %505 = arith.index_cast %454 : i32 to index
    %c0_194 = arith.constant 0 : index
    %506 = vector.load %arg1[%505, %c0_194] : memref<64x32xf32, #tpu.memory_space<vmem>>, vector<8x32xf32>
    %cst_195 = arith.constant 0.000000e+00 : f32
    %507 = vector.broadcast %cst_195 : f32 to vector<8x32xf32>
    %508 = arith.cmpf one, %506, %507 : vector<8x32xf32>
    %509 = arith.select %508, %504, %451 : vector<8x32xi1>, vector<8x32xf32>
    %510 = arith.index_cast %454 : i32 to index
    %c0_196 = arith.constant 0 : index
    %511 = vector.load %arg12[%510, %c0_196] : memref<64x32xf32, #tpu.memory_space<vmem>>, vector<8x32xf32>
    tpu.vector_store %arg12[%510, %c0_196], %509 {strides = array<i32>} : memref<64x32xf32, #tpu.memory_space<vmem>>, vector<8x32xf32>,
    %c8_i32_197 = arith.constant 8 : i32
    %c0_198 = arith.constant 0 : index
    %c0_199 = arith.constant 0 : index
    %512 = vector.load %arg12[%c0_198, %c0_199] : memref<64x32xf32, #tpu.memory_space<vmem>>, vector<64x32xf32>
    %513 = vector.extract_strided_slice %512 {offsets = [0, 0], sizes = [8, 32], strides = [1, 1]} : vector<64x32xf32> to vector<8x32xf32>
    %514 = vector.extract_strided_slice %512 {offsets = [56, 0], sizes = [8, 32], strides = [1, 1]} : vector<64x32xf32> to vector<8x32xf32>
    %515 = vector.shape_cast %2 : vector<1x32xi1> to vector<1x32xi1>
    %516 = vector.broadcast %515 : vector<1x32xi1> to vector<8x32xi1>
    %517 = arith.select %516, %513, %514 : vector<8x32xi1>, vector<8x32xf32>
    %518 = vector.extract_strided_slice %512 {offsets = [8, 0], sizes = [8, 32], strides = [1, 1]} : vector<64x32xf32> to vector<8x32xf32>
    %519 = vector.extract_strided_slice %512 {offsets = [48, 0], sizes = [8, 32], strides = [1, 1]} : vector<64x32xf32> to vector<8x32xf32>
    %520 = vector.shape_cast %2 : vector<1x32xi1> to vector<1x32xi1>
    %521 = vector.broadcast %520 : vector<1x32xi1> to vector<8x32xi1>
    %522 = arith.select %521, %518, %519 : vector<8x32xi1>, vector<8x32xf32>
    %523 = vector.extract_strided_slice %512 {offsets = [16, 0], sizes = [8, 32], strides = [1, 1]} : vector<64x32xf32> to vector<8x32xf32>
    %524 = vector.extract_strided_slice %512 {offsets = [40, 0], sizes = [8, 32], strides = [1, 1]} : vector<64x32xf32> to vector<8x32xf32>
    %525 = vector.shape_cast %2 : vector<1x32xi1> to vector<1x32xi1>
    %526 = vector.broadcast %525 : vector<1x32xi1> to vector<8x32xi1>
    %527 = arith.select %526, %523, %524 : vector<8x32xi1>, vector<8x32xf32>
    %528 = vector.extract_strided_slice %512 {offsets = [24, 0], sizes = [8, 32], strides = [1, 1]} : vector<64x32xf32> to vector<8x32xf32>
    %529 = vector.extract_strided_slice %512 {offsets = [32, 0], sizes = [8, 32], strides = [1, 1]} : vector<64x32xf32> to vector<8x32xf32>
    %530 = vector.shape_cast %2 : vector<1x32xi1> to vector<1x32xi1>
    %531 = vector.broadcast %530 : vector<1x32xi1> to vector<8x32xi1>
    %532 = arith.select %531, %528, %529 : vector<8x32xi1>, vector<8x32xf32>
    %533 = vector.extract_strided_slice %512 {offsets = [32, 0], sizes = [8, 32], strides = [1, 1]} : vector<64x32xf32> to vector<8x32xf32>
    %534 = vector.extract_strided_slice %512 {offsets = [24, 0], sizes = [8, 32], strides = [1, 1]} : vector<64x32xf32> to vector<8x32xf32>
    %535 = vector.shape_cast %2 : vector<1x32xi1> to vector<1x32xi1>
    %536 = vector.broadcast %535 : vector<1x32xi1> to vector<8x32xi1>
    %537 = arith.select %536, %533, %534 : vector<8x32xi1>, vector<8x32xf32>
    %538 = vector.extract_strided_slice %512 {offsets = [40, 0], sizes = [8, 32], strides = [1, 1]} : vector<64x32xf32> to vector<8x32xf32>
    %539 = vector.extract_strided_slice %512 {offsets = [16, 0], sizes = [8, 32], strides = [1, 1]} : vector<64x32xf32> to vector<8x32xf32>
    %540 = vector.shape_cast %2 : vector<1x32xi1> to vector<1x32xi1>
    %541 = vector.broadcast %540 : vector<1x32xi1> to vector<8x32xi1>
    %542 = arith.select %541, %538, %539 : vector<8x32xi1>, vector<8x32xf32>
    %543 = vector.extract_strided_slice %512 {offsets = [48, 0], sizes = [8, 32], strides = [1, 1]} : vector<64x32xf32> to vector<8x32xf32>
    %544 = vector.extract_strided_slice %512 {offsets = [8, 0], sizes = [8, 32], strides = [1, 1]} : vector<64x32xf32> to vector<8x32xf32>
    %545 = vector.shape_cast %2 : vector<1x32xi1> to vector<1x32xi1>
    %546 = vector.broadcast %545 : vector<1x32xi1> to vector<8x32xi1>
    %547 = arith.select %546, %543, %544 : vector<8x32xi1>, vector<8x32xf32>
    %548 = vector.extract_strided_slice %512 {offsets = [56, 0], sizes = [8, 32], strides = [1, 1]} : vector<64x32xf32> to vector<8x32xf32>
    %549 = vector.extract_strided_slice %512 {offsets = [0, 0], sizes = [8, 32], strides = [1, 1]} : vector<64x32xf32> to vector<8x32xf32>
    %550 = vector.shape_cast %2 : vector<1x32xi1> to vector<1x32xi1>
    %551 = vector.broadcast %550 : vector<1x32xi1> to vector<8x32xi1>
    %552 = arith.select %551, %548, %549 : vector<8x32xi1>, vector<8x32xf32>
    %553 = tpu.concatenate %517, %522, %527, %532, %537, %542, %547, %552 in 0 : vector<8x32xf32>, vector<8x32xf32>, vector<8x32xf32>, vector<8x32xf32>, vector<8x32xf32>, vector<8x32xf32>, vector<8x32xf32>, vector<8x32xf32> -> vector<64x32xf32>
    %c1_200 = arith.constant 1 : index
    %c0_201 = arith.constant 0 : index
    %c0_202 = arith.constant 0 : index
    %c0_203 = arith.constant 0 : index
    %554 = vector.load %arg4[%c1_200, %c0_201, %c0_202, %c0_203] : memref<2x3x32x32xf32, #tpu.memory_space<vmem>>, vector<1x1x32x32xf32>
    %555 = vector.shape_cast %554 : vector<1x1x32x32xf32> to vector<32x32xf32>
    %cst_204 = arith.constant dense<0.000000e+00> : vector<64x32xf32>
    %556 = tpu.matmul %553, %555, %cst_204 {dimension_numbers = #tpu.dot_dimension_numbers<[1], [0], [0], [1], [0, 0, 1, 1], [], []>} : vector<64x32xf32>, vector<32x32xf32>, vector<64x32xf32> -> vector<64x32xf32>
    %c1_205 = arith.constant 1 : index
    %c0_206 = arith.constant 0 : index
    %c0_207 = arith.constant 0 : index
    %c0_208 = arith.constant 0 : index
    %557 = vector.load %arg5[%c1_205, %c0_206, %c0_207, %c0_208] : memref<2x3x1x32xf32, #tpu.memory_space<vmem>>, vector<1x1x1x32xf32>
    %558 = vector.shape_cast %557 : vector<1x1x1x32xf32> to vector<1x32xf32>
    %559 = vector.broadcast %558 : vector<1x32xf32> to vector<64x32xf32>
    %560 = arith.addf %556, %559 : vector<64x32xf32>
    %c0_209 = arith.constant 0 : index
    %c0_210 = arith.constant 0 : index
    %561 = vector.load %arg9[%c0_209, %c0_210] : memref<64x32xf32, #tpu.memory_space<vmem>>, vector<64x32xf32>
    tpu.vector_store %arg9[%c0_209, %c0_210], %560 {strides = array<i32>} : memref<64x32xf32, #tpu.memory_space<vmem>>, vector<64x32xf32>,
    %c1_211 = arith.constant 1 : index
    %c1_212 = arith.constant 1 : index
    %c0_213 = arith.constant 0 : index
    %c0_214 = arith.constant 0 : index
    %562 = vector.load %arg4[%c1_211, %c1_212, %c0_213, %c0_214] : memref<2x3x32x32xf32, #tpu.memory_space<vmem>>, vector<1x1x32x32xf32>
    %563 = vector.shape_cast %562 : vector<1x1x32x32xf32> to vector<32x32xf32>
    %cst_215 = arith.constant dense<0.000000e+00> : vector<64x32xf32>
    %564 = tpu.matmul %553, %563, %cst_215 {dimension_numbers = #tpu.dot_dimension_numbers<[1], [0], [0], [1], [0, 0, 1, 1], [], []>} : vector<64x32xf32>, vector<32x32xf32>, vector<64x32xf32> -> vector<64x32xf32>
    %c1_216 = arith.constant 1 : index
    %c1_217 = arith.constant 1 : index
    %c0_218 = arith.constant 0 : index
    %c0_219 = arith.constant 0 : index
    %565 = vector.load %arg5[%c1_216, %c1_217, %c0_218, %c0_219] : memref<2x3x1x32xf32, #tpu.memory_space<vmem>>, vector<1x1x1x32xf32>
    %566 = vector.shape_cast %565 : vector<1x1x1x32xf32> to vector<1x32xf32>
    %567 = vector.broadcast %566 : vector<1x32xf32> to vector<64x32xf32>
    %568 = arith.addf %564, %567 : vector<64x32xf32>
    %c0_220 = arith.constant 0 : index
    %c0_221 = arith.constant 0 : index
    %569 = vector.load %arg10[%c0_220, %c0_221] : memref<64x32xf32, #tpu.memory_space<vmem>>, vector<64x32xf32>
    tpu.vector_store %arg10[%c0_220, %c0_221], %568 {strides = array<i32>} : memref<64x32xf32, #tpu.memory_space<vmem>>, vector<64x32xf32>,
    %c1_222 = arith.constant 1 : index
    %c2_223 = arith.constant 2 : index
    %c0_224 = arith.constant 0 : index
    %c0_225 = arith.constant 0 : index
    %570 = vector.load %arg4[%c1_222, %c2_223, %c0_224, %c0_225] : memref<2x3x32x32xf32, #tpu.memory_space<vmem>>, vector<1x1x32x32xf32>
    %571 = vector.shape_cast %570 : vector<1x1x32x32xf32> to vector<32x32xf32>
    %cst_226 = arith.constant dense<0.000000e+00> : vector<64x32xf32>
    %572 = tpu.matmul %553, %571, %cst_226 {dimension_numbers = #tpu.dot_dimension_numbers<[1], [0], [0], [1], [0, 0, 1, 1], [], []>} : vector<64x32xf32>, vector<32x32xf32>, vector<64x32xf32> -> vector<64x32xf32>
    %c1_227 = arith.constant 1 : index
    %c2_228 = arith.constant 2 : index
    %c0_229 = arith.constant 0 : index
    %c0_230 = arith.constant 0 : index
    %573 = vector.load %arg5[%c1_227, %c2_228, %c0_229, %c0_230] : memref<2x3x1x32xf32, #tpu.memory_space<vmem>>, vector<1x1x1x32xf32>
    %574 = vector.shape_cast %573 : vector<1x1x1x32xf32> to vector<1x32xf32>
    %575 = vector.broadcast %574 : vector<1x32xf32> to vector<64x32xf32>
    %576 = arith.addf %572, %575 : vector<64x32xf32>
    %c0_231 = arith.constant 0 : index
    %c0_232 = arith.constant 0 : index
    %577 = vector.load %arg11[%c0_231, %c0_232] : memref<64x32xf32, #tpu.memory_space<vmem>>, vector<64x32xf32>
    tpu.vector_store %arg11[%c0_231, %c0_232], %576 {strides = array<i32>} : memref<64x32xf32, #tpu.memory_space<vmem>>, vector<64x32xf32>,
    %c1_233 = arith.constant 1 : index
    %c0_234 = arith.constant 0 : index
    %c0_235 = arith.constant 0 : index
    %c0_236 = arith.constant 0 : index
    %578 = vector.load %arg6[%c1_233, %c0_234, %c0_235, %c0_236] : memref<2x3x32x32xf32, #tpu.memory_space<vmem>>, vector<1x1x32x32xf32>
    %579 = vector.shape_cast %578 : vector<1x1x32x32xf32> to vector<32x32xf32>
    %c1_237 = arith.constant 1 : index
    %c1_238 = arith.constant 1 : index
    %c0_239 = arith.constant 0 : index
    %c0_240 = arith.constant 0 : index
    %580 = vector.load %arg6[%c1_237, %c1_238, %c0_239, %c0_240] : memref<2x3x32x32xf32, #tpu.memory_space<vmem>>, vector<1x1x32x32xf32>
    %581 = vector.shape_cast %580 : vector<1x1x32x32xf32> to vector<32x32xf32>
    %c1_241 = arith.constant 1 : index
    %c2_242 = arith.constant 2 : index
    %c0_243 = arith.constant 0 : index
    %c0_244 = arith.constant 0 : index
    %582 = vector.load %arg6[%c1_241, %c2_242, %c0_243, %c0_244] : memref<2x3x32x32xf32, #tpu.memory_space<vmem>>, vector<1x1x32x32xf32>
    %583 = vector.shape_cast %582 : vector<1x1x32x32xf32> to vector<32x32xf32>
    %c1_245 = arith.constant 1 : index
    %c0_246 = arith.constant 0 : index
    %c0_247 = arith.constant 0 : index
    %c0_248 = arith.constant 0 : index
    %584 = vector.load %arg7[%c1_245, %c0_246, %c0_247, %c0_248] : memref<2x3x1x32xf32, #tpu.memory_space<vmem>>, vector<1x1x1x32xf32>
    %585 = vector.shape_cast %584 : vector<1x1x1x32xf32> to vector<1x32xf32>
    %c1_249 = arith.constant 1 : index
    %c1_250 = arith.constant 1 : index
    %c0_251 = arith.constant 0 : index
    %c0_252 = arith.constant 0 : index
    %586 = vector.load %arg7[%c1_249, %c1_250, %c0_251, %c0_252] : memref<2x3x1x32xf32, #tpu.memory_space<vmem>>, vector<1x1x1x32xf32>
    %587 = vector.shape_cast %586 : vector<1x1x1x32xf32> to vector<1x32xf32>
    %c1_253 = arith.constant 1 : index
    %c2_254 = arith.constant 2 : index
    %c0_255 = arith.constant 0 : index
    %c0_256 = arith.constant 0 : index
    %588 = vector.load %arg7[%c1_253, %c2_254, %c0_255, %c0_256] : memref<2x3x1x32xf32, #tpu.memory_space<vmem>>, vector<1x1x1x32xf32>
    %589 = vector.shape_cast %588 : vector<1x1x1x32xf32> to vector<1x32xf32>
    %cst_257 = arith.constant 0.000000e+00 : f32
    %590 = vector.broadcast %cst_257 : f32 to vector<8x32xf32>
    %c0_i32_258 = arith.constant 0 : i32
    %c8_i32_259 = arith.constant 8 : i32
    %591 = arith.muli %c0_i32_258, %c8_i32_259 : i32
    %c7_i32_260 = arith.constant 7 : i32
    %592 = arith.subi %c7_i32_260, %c0_i32_258 : i32
    %c8_i32_261 = arith.constant 8 : i32
    %593 = arith.muli %592, %c8_i32_261 : i32
    %594 = arith.index_cast %591 : i32 to index
    %c0_262 = arith.constant 0 : index
    %595 = vector.load %arg9[%594, %c0_262] : memref<64x32xf32, #tpu.memory_space<vmem>>, vector<8x32xf32>
    %596 = arith.index_cast %593 : i32 to index
    %c0_263 = arith.constant 0 : index
    %597 = vector.load %arg9[%596, %c0_263] : memref<64x32xf32, #tpu.memory_space<vmem>>, vector<8x32xf32>
    %598 = vector.shape_cast %2 : vector<1x32xi1> to vector<1x32xi1>
    %599 = vector.broadcast %598 : vector<1x32xi1> to vector<8x32xi1>
    %600 = arith.select %599, %595, %597 : vector<8x32xi1>, vector<8x32xf32>
    %601 = arith.index_cast %591 : i32 to index
    %c0_264 = arith.constant 0 : index
    %602 = vector.load %arg10[%601, %c0_264] : memref<64x32xf32, #tpu.memory_space<vmem>>, vector<8x32xf32>
    %603 = arith.index_cast %593 : i32 to index
    %c0_265 = arith.constant 0 : index
    %604 = vector.load %arg10[%603, %c0_265] : memref<64x32xf32, #tpu.memory_space<vmem>>, vector<8x32xf32>
    %605 = vector.shape_cast %2 : vector<1x32xi1> to vector<1x32xi1>
    %606 = vector.broadcast %605 : vector<1x32xi1> to vector<8x32xi1>
    %607 = arith.select %606, %602, %604 : vector<8x32xi1>, vector<8x32xf32>
    %608 = arith.index_cast %591 : i32 to index
    %c0_266 = arith.constant 0 : index
    %609 = vector.load %arg11[%608, %c0_266] : memref<64x32xf32, #tpu.memory_space<vmem>>, vector<8x32xf32>
    %610 = arith.index_cast %593 : i32 to index
    %c0_267 = arith.constant 0 : index
    %611 = vector.load %arg11[%610, %c0_267] : memref<64x32xf32, #tpu.memory_space<vmem>>, vector<8x32xf32>
    %612 = vector.shape_cast %2 : vector<1x32xi1> to vector<1x32xi1>
    %613 = vector.broadcast %612 : vector<1x32xi1> to vector<8x32xi1>
    %614 = arith.select %613, %609, %611 : vector<8x32xi1>, vector<8x32xf32>
    %cst_268 = arith.constant dense<0.000000e+00> : vector<8x32xf32>
    %615 = tpu.matmul %590, %579, %cst_268 {dimension_numbers = #tpu.dot_dimension_numbers<[1], [0], [0], [1], [0, 0, 1, 1], [], []>} : vector<8x32xf32>, vector<32x32xf32>, vector<8x32xf32> -> vector<8x32xf32>
    %616 = vector.broadcast %585 : vector<1x32xf32> to vector<8x32xf32>
    %617 = arith.addf %615, %616 : vector<8x32xf32>
    %cst_269 = arith.constant dense<0.000000e+00> : vector<8x32xf32>
    %618 = tpu.matmul %590, %581, %cst_269 {dimension_numbers = #tpu.dot_dimension_numbers<[1], [0], [0], [1], [0, 0, 1, 1], [], []>} : vector<8x32xf32>, vector<32x32xf32>, vector<8x32xf32> -> vector<8x32xf32>
    %619 = vector.broadcast %587 : vector<1x32xf32> to vector<8x32xf32>
    %620 = arith.addf %618, %619 : vector<8x32xf32>
    %cst_270 = arith.constant dense<0.000000e+00> : vector<8x32xf32>
    %621 = tpu.matmul %590, %583, %cst_270 {dimension_numbers = #tpu.dot_dimension_numbers<[1], [0], [0], [1], [0, 0, 1, 1], [], []>} : vector<8x32xf32>, vector<32x32xf32>, vector<8x32xf32> -> vector<8x32xf32>
    %622 = vector.broadcast %589 : vector<1x32xf32> to vector<8x32xf32>
    %623 = arith.addf %621, %622 : vector<8x32xf32>
    %624 = arith.addf %600, %617 : vector<8x32xf32>
    %625 = arith.negf %624 : vector<8x32xf32>
    %626 = math.exp %625 : vector<8x32xf32>
    %cst_271 = arith.constant 1.000000e+00 : f32
    %627 = vector.broadcast %cst_271 : f32 to vector<8x32xf32>
    %628 = arith.addf %627, %626 : vector<8x32xf32>
    %629 = arith.divf %627, %628 : vector<8x32xf32>
    %630 = arith.addf %607, %620 : vector<8x32xf32>
    %631 = arith.negf %630 : vector<8x32xf32>
    %632 = math.exp %631 : vector<8x32xf32>
    %cst_272 = arith.constant 1.000000e+00 : f32
    %633 = vector.broadcast %cst_272 : f32 to vector<8x32xf32>
    %634 = arith.addf %633, %632 : vector<8x32xf32>
    %635 = arith.divf %633, %634 : vector<8x32xf32>
    %636 = arith.mulf %629, %623 : vector<8x32xf32>
    %637 = arith.addf %614, %636 : vector<8x32xf32>
    %638 = math.tanh %637 : vector<8x32xf32>
    %639 = arith.subf %590, %638 : vector<8x32xf32>
    %640 = arith.mulf %635, %639 : vector<8x32xf32>
    %641 = arith.addf %638, %640 : vector<8x32xf32>
    %642 = arith.index_cast %591 : i32 to index
    %c0_273 = arith.constant 0 : index
    %643 = vector.load %arg1[%642, %c0_273] : memref<64x32xf32, #tpu.memory_space<vmem>>, vector<8x32xf32>
    %cst_274 = arith.constant 0.000000e+00 : f32
    %644 = vector.broadcast %cst_274 : f32 to vector<8x32xf32>
    %645 = arith.cmpf one, %643, %644 : vector<8x32xf32>
    %646 = arith.select %645, %641, %590 : vector<8x32xi1>, vector<8x32xf32>
    %c1_i32_275 = arith.constant 1 : i32
    %c8_i32_276 = arith.constant 8 : i32
    %647 = arith.muli %c1_i32_275, %c8_i32_276 : i32
    %c7_i32_277 = arith.constant 7 : i32
    %648 = arith.subi %c7_i32_277, %c1_i32_275 : i32
    %c8_i32_278 = arith.constant 8 : i32
    %649 = arith.muli %648, %c8_i32_278 : i32
    %650 = arith.index_cast %647 : i32 to index
    %c0_279 = arith.constant 0 : index
    %651 = vector.load %arg9[%650, %c0_279] : memref<64x32xf32, #tpu.memory_space<vmem>>, vector<8x32xf32>
    %652 = arith.index_cast %649 : i32 to index
    %c0_280 = arith.constant 0 : index
    %653 = vector.load %arg9[%652, %c0_280] : memref<64x32xf32, #tpu.memory_space<vmem>>, vector<8x32xf32>
    %654 = vector.shape_cast %2 : vector<1x32xi1> to vector<1x32xi1>
    %655 = vector.broadcast %654 : vector<1x32xi1> to vector<8x32xi1>
    %656 = arith.select %655, %651, %653 : vector<8x32xi1>, vector<8x32xf32>
    %657 = arith.index_cast %647 : i32 to index
    %c0_281 = arith.constant 0 : index
    %658 = vector.load %arg10[%657, %c0_281] : memref<64x32xf32, #tpu.memory_space<vmem>>, vector<8x32xf32>
    %659 = arith.index_cast %649 : i32 to index
    %c0_282 = arith.constant 0 : index
    %660 = vector.load %arg10[%659, %c0_282] : memref<64x32xf32, #tpu.memory_space<vmem>>, vector<8x32xf32>
    %661 = vector.shape_cast %2 : vector<1x32xi1> to vector<1x32xi1>
    %662 = vector.broadcast %661 : vector<1x32xi1> to vector<8x32xi1>
    %663 = arith.select %662, %658, %660 : vector<8x32xi1>, vector<8x32xf32>
    %664 = arith.index_cast %647 : i32 to index
    %c0_283 = arith.constant 0 : index
    %665 = vector.load %arg11[%664, %c0_283] : memref<64x32xf32, #tpu.memory_space<vmem>>, vector<8x32xf32>
    %666 = arith.index_cast %649 : i32 to index
    %c0_284 = arith.constant 0 : index
    %667 = vector.load %arg11[%666, %c0_284] : memref<64x32xf32, #tpu.memory_space<vmem>>, vector<8x32xf32>
    %668 = vector.shape_cast %2 : vector<1x32xi1> to vector<1x32xi1>
    %669 = vector.broadcast %668 : vector<1x32xi1> to vector<8x32xi1>
    %670 = arith.select %669, %665, %667 : vector<8x32xi1>, vector<8x32xf32>
    %cst_285 = arith.constant dense<0.000000e+00> : vector<8x32xf32>
    %671 = tpu.matmul %646, %579, %cst_285 {dimension_numbers = #tpu.dot_dimension_numbers<[1], [0], [0], [1], [0, 0, 1, 1], [], []>} : vector<8x32xf32>, vector<32x32xf32>, vector<8x32xf32> -> vector<8x32xf32>
    %672 = vector.broadcast %585 : vector<1x32xf32> to vector<8x32xf32>
    %673 = arith.addf %671, %672 : vector<8x32xf32>
    %cst_286 = arith.constant dense<0.000000e+00> : vector<8x32xf32>
    %674 = tpu.matmul %646, %581, %cst_286 {dimension_numbers = #tpu.dot_dimension_numbers<[1], [0], [0], [1], [0, 0, 1, 1], [], []>} : vector<8x32xf32>, vector<32x32xf32>, vector<8x32xf32> -> vector<8x32xf32>
    %675 = vector.broadcast %587 : vector<1x32xf32> to vector<8x32xf32>
    %676 = arith.addf %674, %675 : vector<8x32xf32>
    %cst_287 = arith.constant dense<0.000000e+00> : vector<8x32xf32>
    %677 = tpu.matmul %646, %583, %cst_287 {dimension_numbers = #tpu.dot_dimension_numbers<[1], [0], [0], [1], [0, 0, 1, 1], [], []>} : vector<8x32xf32>, vector<32x32xf32>, vector<8x32xf32> -> vector<8x32xf32>
    %678 = vector.broadcast %589 : vector<1x32xf32> to vector<8x32xf32>
    %679 = arith.addf %677, %678 : vector<8x32xf32>
    %680 = arith.addf %656, %673 : vector<8x32xf32>
    %681 = arith.negf %680 : vector<8x32xf32>
    %682 = math.exp %681 : vector<8x32xf32>
    %cst_288 = arith.constant 1.000000e+00 : f32
    %683 = vector.broadcast %cst_288 : f32 to vector<8x32xf32>
    %684 = arith.addf %683, %682 : vector<8x32xf32>
    %685 = arith.divf %683, %684 : vector<8x32xf32>
    %686 = arith.addf %663, %676 : vector<8x32xf32>
    %687 = arith.negf %686 : vector<8x32xf32>
    %688 = math.exp %687 : vector<8x32xf32>
    %cst_289 = arith.constant 1.000000e+00 : f32
    %689 = vector.broadcast %cst_289 : f32 to vector<8x32xf32>
    %690 = arith.addf %689, %688 : vector<8x32xf32>
    %691 = arith.divf %689, %690 : vector<8x32xf32>
    %692 = arith.mulf %685, %679 : vector<8x32xf32>
    %693 = arith.addf %670, %692 : vector<8x32xf32>
    %694 = math.tanh %693 : vector<8x32xf32>
    %695 = arith.subf %646, %694 : vector<8x32xf32>
    %696 = arith.mulf %691, %695 : vector<8x32xf32>
    %697 = arith.addf %694, %696 : vector<8x32xf32>
    %698 = arith.index_cast %647 : i32 to index
    %c0_290 = arith.constant 0 : index
    %699 = vector.load %arg1[%698, %c0_290] : memref<64x32xf32, #tpu.memory_space<vmem>>, vector<8x32xf32>
    %cst_291 = arith.constant 0.000000e+00 : f32
    %700 = vector.broadcast %cst_291 : f32 to vector<8x32xf32>
    %701 = arith.cmpf one, %699, %700 : vector<8x32xf32>
    %702 = arith.select %701, %697, %646 : vector<8x32xi1>, vector<8x32xf32>
    %c2_i32_292 = arith.constant 2 : i32
    %c8_i32_293 = arith.constant 8 : i32
    %703 = arith.muli %c2_i32_292, %c8_i32_293 : i32
    %c7_i32_294 = arith.constant 7 : i32
    %704 = arith.subi %c7_i32_294, %c2_i32_292 : i32
    %c8_i32_295 = arith.constant 8 : i32
    %705 = arith.muli %704, %c8_i32_295 : i32
    %706 = arith.index_cast %703 : i32 to index
    %c0_296 = arith.constant 0 : index
    %707 = vector.load %arg9[%706, %c0_296] : memref<64x32xf32, #tpu.memory_space<vmem>>, vector<8x32xf32>
    %708 = arith.index_cast %705 : i32 to index
    %c0_297 = arith.constant 0 : index
    %709 = vector.load %arg9[%708, %c0_297] : memref<64x32xf32, #tpu.memory_space<vmem>>, vector<8x32xf32>
    %710 = vector.shape_cast %2 : vector<1x32xi1> to vector<1x32xi1>
    %711 = vector.broadcast %710 : vector<1x32xi1> to vector<8x32xi1>
    %712 = arith.select %711, %707, %709 : vector<8x32xi1>, vector<8x32xf32>
    %713 = arith.index_cast %703 : i32 to index
    %c0_298 = arith.constant 0 : index
    %714 = vector.load %arg10[%713, %c0_298] : memref<64x32xf32, #tpu.memory_space<vmem>>, vector<8x32xf32>
    %715 = arith.index_cast %705 : i32 to index
    %c0_299 = arith.constant 0 : index
    %716 = vector.load %arg10[%715, %c0_299] : memref<64x32xf32, #tpu.memory_space<vmem>>, vector<8x32xf32>
    %717 = vector.shape_cast %2 : vector<1x32xi1> to vector<1x32xi1>
    %718 = vector.broadcast %717 : vector<1x32xi1> to vector<8x32xi1>
    %719 = arith.select %718, %714, %716 : vector<8x32xi1>, vector<8x32xf32>
    %720 = arith.index_cast %703 : i32 to index
    %c0_300 = arith.constant 0 : index
    %721 = vector.load %arg11[%720, %c0_300] : memref<64x32xf32, #tpu.memory_space<vmem>>, vector<8x32xf32>
    %722 = arith.index_cast %705 : i32 to index
    %c0_301 = arith.constant 0 : index
    %723 = vector.load %arg11[%722, %c0_301] : memref<64x32xf32, #tpu.memory_space<vmem>>, vector<8x32xf32>
    %724 = vector.shape_cast %2 : vector<1x32xi1> to vector<1x32xi1>
    %725 = vector.broadcast %724 : vector<1x32xi1> to vector<8x32xi1>
    %726 = arith.select %725, %721, %723 : vector<8x32xi1>, vector<8x32xf32>
    %cst_302 = arith.constant dense<0.000000e+00> : vector<8x32xf32>
    %727 = tpu.matmul %702, %579, %cst_302 {dimension_numbers = #tpu.dot_dimension_numbers<[1], [0], [0], [1], [0, 0, 1, 1], [], []>} : vector<8x32xf32>, vector<32x32xf32>, vector<8x32xf32> -> vector<8x32xf32>
    %728 = vector.broadcast %585 : vector<1x32xf32> to vector<8x32xf32>
    %729 = arith.addf %727, %728 : vector<8x32xf32>
    %cst_303 = arith.constant dense<0.000000e+00> : vector<8x32xf32>
    %730 = tpu.matmul %702, %581, %cst_303 {dimension_numbers = #tpu.dot_dimension_numbers<[1], [0], [0], [1], [0, 0, 1, 1], [], []>} : vector<8x32xf32>, vector<32x32xf32>, vector<8x32xf32> -> vector<8x32xf32>
    %731 = vector.broadcast %587 : vector<1x32xf32> to vector<8x32xf32>
    %732 = arith.addf %730, %731 : vector<8x32xf32>
    %cst_304 = arith.constant dense<0.000000e+00> : vector<8x32xf32>
    %733 = tpu.matmul %702, %583, %cst_304 {dimension_numbers = #tpu.dot_dimension_numbers<[1], [0], [0], [1], [0, 0, 1, 1], [], []>} : vector<8x32xf32>, vector<32x32xf32>, vector<8x32xf32> -> vector<8x32xf32>
    %734 = vector.broadcast %589 : vector<1x32xf32> to vector<8x32xf32>
    %735 = arith.addf %733, %734 : vector<8x32xf32>
    %736 = arith.addf %712, %729 : vector<8x32xf32>
    %737 = arith.negf %736 : vector<8x32xf32>
    %738 = math.exp %737 : vector<8x32xf32>
    %cst_305 = arith.constant 1.000000e+00 : f32
    %739 = vector.broadcast %cst_305 : f32 to vector<8x32xf32>
    %740 = arith.addf %739, %738 : vector<8x32xf32>
    %741 = arith.divf %739, %740 : vector<8x32xf32>
    %742 = arith.addf %719, %732 : vector<8x32xf32>
    %743 = arith.negf %742 : vector<8x32xf32>
    %744 = math.exp %743 : vector<8x32xf32>
    %cst_306 = arith.constant 1.000000e+00 : f32
    %745 = vector.broadcast %cst_306 : f32 to vector<8x32xf32>
    %746 = arith.addf %745, %744 : vector<8x32xf32>
    %747 = arith.divf %745, %746 : vector<8x32xf32>
    %748 = arith.mulf %741, %735 : vector<8x32xf32>
    %749 = arith.addf %726, %748 : vector<8x32xf32>
    %750 = math.tanh %749 : vector<8x32xf32>
    %751 = arith.subf %702, %750 : vector<8x32xf32>
    %752 = arith.mulf %747, %751 : vector<8x32xf32>
    %753 = arith.addf %750, %752 : vector<8x32xf32>
    %754 = arith.index_cast %703 : i32 to index
    %c0_307 = arith.constant 0 : index
    %755 = vector.load %arg1[%754, %c0_307] : memref<64x32xf32, #tpu.memory_space<vmem>>, vector<8x32xf32>
    %cst_308 = arith.constant 0.000000e+00 : f32
    %756 = vector.broadcast %cst_308 : f32 to vector<8x32xf32>
    %757 = arith.cmpf one, %755, %756 : vector<8x32xf32>
    %758 = arith.select %757, %753, %702 : vector<8x32xi1>, vector<8x32xf32>
    %c3_i32_309 = arith.constant 3 : i32
    %c8_i32_310 = arith.constant 8 : i32
    %759 = arith.muli %c3_i32_309, %c8_i32_310 : i32
    %c7_i32_311 = arith.constant 7 : i32
    %760 = arith.subi %c7_i32_311, %c3_i32_309 : i32
    %c8_i32_312 = arith.constant 8 : i32
    %761 = arith.muli %760, %c8_i32_312 : i32
    %762 = arith.index_cast %759 : i32 to index
    %c0_313 = arith.constant 0 : index
    %763 = vector.load %arg9[%762, %c0_313] : memref<64x32xf32, #tpu.memory_space<vmem>>, vector<8x32xf32>
    %764 = arith.index_cast %761 : i32 to index
    %c0_314 = arith.constant 0 : index
    %765 = vector.load %arg9[%764, %c0_314] : memref<64x32xf32, #tpu.memory_space<vmem>>, vector<8x32xf32>
    %766 = vector.shape_cast %2 : vector<1x32xi1> to vector<1x32xi1>
    %767 = vector.broadcast %766 : vector<1x32xi1> to vector<8x32xi1>
    %768 = arith.select %767, %763, %765 : vector<8x32xi1>, vector<8x32xf32>
    %769 = arith.index_cast %759 : i32 to index
    %c0_315 = arith.constant 0 : index
    %770 = vector.load %arg10[%769, %c0_315] : memref<64x32xf32, #tpu.memory_space<vmem>>, vector<8x32xf32>
    %771 = arith.index_cast %761 : i32 to index
    %c0_316 = arith.constant 0 : index
    %772 = vector.load %arg10[%771, %c0_316] : memref<64x32xf32, #tpu.memory_space<vmem>>, vector<8x32xf32>
    %773 = vector.shape_cast %2 : vector<1x32xi1> to vector<1x32xi1>
    %774 = vector.broadcast %773 : vector<1x32xi1> to vector<8x32xi1>
    %775 = arith.select %774, %770, %772 : vector<8x32xi1>, vector<8x32xf32>
    %776 = arith.index_cast %759 : i32 to index
    %c0_317 = arith.constant 0 : index
    %777 = vector.load %arg11[%776, %c0_317] : memref<64x32xf32, #tpu.memory_space<vmem>>, vector<8x32xf32>
    %778 = arith.index_cast %761 : i32 to index
    %c0_318 = arith.constant 0 : index
    %779 = vector.load %arg11[%778, %c0_318] : memref<64x32xf32, #tpu.memory_space<vmem>>, vector<8x32xf32>
    %780 = vector.shape_cast %2 : vector<1x32xi1> to vector<1x32xi1>
    %781 = vector.broadcast %780 : vector<1x32xi1> to vector<8x32xi1>
    %782 = arith.select %781, %777, %779 : vector<8x32xi1>, vector<8x32xf32>
    %cst_319 = arith.constant dense<0.000000e+00> : vector<8x32xf32>
    %783 = tpu.matmul %758, %579, %cst_319 {dimension_numbers = #tpu.dot_dimension_numbers<[1], [0], [0], [1], [0, 0, 1, 1], [], []>} : vector<8x32xf32>, vector<32x32xf32>, vector<8x32xf32> -> vector<8x32xf32>
    %784 = vector.broadcast %585 : vector<1x32xf32> to vector<8x32xf32>
    %785 = arith.addf %783, %784 : vector<8x32xf32>
    %cst_320 = arith.constant dense<0.000000e+00> : vector<8x32xf32>
    %786 = tpu.matmul %758, %581, %cst_320 {dimension_numbers = #tpu.dot_dimension_numbers<[1], [0], [0], [1], [0, 0, 1, 1], [], []>} : vector<8x32xf32>, vector<32x32xf32>, vector<8x32xf32> -> vector<8x32xf32>
    %787 = vector.broadcast %587 : vector<1x32xf32> to vector<8x32xf32>
    %788 = arith.addf %786, %787 : vector<8x32xf32>
    %cst_321 = arith.constant dense<0.000000e+00> : vector<8x32xf32>
    %789 = tpu.matmul %758, %583, %cst_321 {dimension_numbers = #tpu.dot_dimension_numbers<[1], [0], [0], [1], [0, 0, 1, 1], [], []>} : vector<8x32xf32>, vector<32x32xf32>, vector<8x32xf32> -> vector<8x32xf32>
    %790 = vector.broadcast %589 : vector<1x32xf32> to vector<8x32xf32>
    %791 = arith.addf %789, %790 : vector<8x32xf32>
    %792 = arith.addf %768, %785 : vector<8x32xf32>
    %793 = arith.negf %792 : vector<8x32xf32>
    %794 = math.exp %793 : vector<8x32xf32>
    %cst_322 = arith.constant 1.000000e+00 : f32
    %795 = vector.broadcast %cst_322 : f32 to vector<8x32xf32>
    %796 = arith.addf %795, %794 : vector<8x32xf32>
    %797 = arith.divf %795, %796 : vector<8x32xf32>
    %798 = arith.addf %775, %788 : vector<8x32xf32>
    %799 = arith.negf %798 : vector<8x32xf32>
    %800 = math.exp %799 : vector<8x32xf32>
    %cst_323 = arith.constant 1.000000e+00 : f32
    %801 = vector.broadcast %cst_323 : f32 to vector<8x32xf32>
    %802 = arith.addf %801, %800 : vector<8x32xf32>
    %803 = arith.divf %801, %802 : vector<8x32xf32>
    %804 = arith.mulf %797, %791 : vector<8x32xf32>
    %805 = arith.addf %782, %804 : vector<8x32xf32>
    %806 = math.tanh %805 : vector<8x32xf32>
    %807 = arith.subf %758, %806 : vector<8x32xf32>
    %808 = arith.mulf %803, %807 : vector<8x32xf32>
    %809 = arith.addf %806, %808 : vector<8x32xf32>
    %810 = arith.index_cast %759 : i32 to index
    %c0_324 = arith.constant 0 : index
    %811 = vector.load %arg1[%810, %c0_324] : memref<64x32xf32, #tpu.memory_space<vmem>>, vector<8x32xf32>
    %cst_325 = arith.constant 0.000000e+00 : f32
    %812 = vector.broadcast %cst_325 : f32 to vector<8x32xf32>
    %813 = arith.cmpf one, %811, %812 : vector<8x32xf32>
    %814 = arith.select %813, %809, %758 : vector<8x32xi1>, vector<8x32xf32>
    %c4_i32_326 = arith.constant 4 : i32
    %c8_i32_327 = arith.constant 8 : i32
    %815 = arith.muli %c4_i32_326, %c8_i32_327 : i32
    %c7_i32_328 = arith.constant 7 : i32
    %816 = arith.subi %c7_i32_328, %c4_i32_326 : i32
    %c8_i32_329 = arith.constant 8 : i32
    %817 = arith.muli %816, %c8_i32_329 : i32
    %818 = arith.index_cast %815 : i32 to index
    %c0_330 = arith.constant 0 : index
    %819 = vector.load %arg9[%818, %c0_330] : memref<64x32xf32, #tpu.memory_space<vmem>>, vector<8x32xf32>
    %820 = arith.index_cast %817 : i32 to index
    %c0_331 = arith.constant 0 : index
    %821 = vector.load %arg9[%820, %c0_331] : memref<64x32xf32, #tpu.memory_space<vmem>>, vector<8x32xf32>
    %822 = vector.shape_cast %2 : vector<1x32xi1> to vector<1x32xi1>
    %823 = vector.broadcast %822 : vector<1x32xi1> to vector<8x32xi1>
    %824 = arith.select %823, %819, %821 : vector<8x32xi1>, vector<8x32xf32>
    %825 = arith.index_cast %815 : i32 to index
    %c0_332 = arith.constant 0 : index
    %826 = vector.load %arg10[%825, %c0_332] : memref<64x32xf32, #tpu.memory_space<vmem>>, vector<8x32xf32>
    %827 = arith.index_cast %817 : i32 to index
    %c0_333 = arith.constant 0 : index
    %828 = vector.load %arg10[%827, %c0_333] : memref<64x32xf32, #tpu.memory_space<vmem>>, vector<8x32xf32>
    %829 = vector.shape_cast %2 : vector<1x32xi1> to vector<1x32xi1>
    %830 = vector.broadcast %829 : vector<1x32xi1> to vector<8x32xi1>
    %831 = arith.select %830, %826, %828 : vector<8x32xi1>, vector<8x32xf32>
    %832 = arith.index_cast %815 : i32 to index
    %c0_334 = arith.constant 0 : index
    %833 = vector.load %arg11[%832, %c0_334] : memref<64x32xf32, #tpu.memory_space<vmem>>, vector<8x32xf32>
    %834 = arith.index_cast %817 : i32 to index
    %c0_335 = arith.constant 0 : index
    %835 = vector.load %arg11[%834, %c0_335] : memref<64x32xf32, #tpu.memory_space<vmem>>, vector<8x32xf32>
    %836 = vector.shape_cast %2 : vector<1x32xi1> to vector<1x32xi1>
    %837 = vector.broadcast %836 : vector<1x32xi1> to vector<8x32xi1>
    %838 = arith.select %837, %833, %835 : vector<8x32xi1>, vector<8x32xf32>
    %cst_336 = arith.constant dense<0.000000e+00> : vector<8x32xf32>
    %839 = tpu.matmul %814, %579, %cst_336 {dimension_numbers = #tpu.dot_dimension_numbers<[1], [0], [0], [1], [0, 0, 1, 1], [], []>} : vector<8x32xf32>, vector<32x32xf32>, vector<8x32xf32> -> vector<8x32xf32>
    %840 = vector.broadcast %585 : vector<1x32xf32> to vector<8x32xf32>
    %841 = arith.addf %839, %840 : vector<8x32xf32>
    %cst_337 = arith.constant dense<0.000000e+00> : vector<8x32xf32>
    %842 = tpu.matmul %814, %581, %cst_337 {dimension_numbers = #tpu.dot_dimension_numbers<[1], [0], [0], [1], [0, 0, 1, 1], [], []>} : vector<8x32xf32>, vector<32x32xf32>, vector<8x32xf32> -> vector<8x32xf32>
    %843 = vector.broadcast %587 : vector<1x32xf32> to vector<8x32xf32>
    %844 = arith.addf %842, %843 : vector<8x32xf32>
    %cst_338 = arith.constant dense<0.000000e+00> : vector<8x32xf32>
    %845 = tpu.matmul %814, %583, %cst_338 {dimension_numbers = #tpu.dot_dimension_numbers<[1], [0], [0], [1], [0, 0, 1, 1], [], []>} : vector<8x32xf32>, vector<32x32xf32>, vector<8x32xf32> -> vector<8x32xf32>
    %846 = vector.broadcast %589 : vector<1x32xf32> to vector<8x32xf32>
    %847 = arith.addf %845, %846 : vector<8x32xf32>
    %848 = arith.addf %824, %841 : vector<8x32xf32>
    %849 = arith.negf %848 : vector<8x32xf32>
    %850 = math.exp %849 : vector<8x32xf32>
    %cst_339 = arith.constant 1.000000e+00 : f32
    %851 = vector.broadcast %cst_339 : f32 to vector<8x32xf32>
    %852 = arith.addf %851, %850 : vector<8x32xf32>
    %853 = arith.divf %851, %852 : vector<8x32xf32>
    %854 = arith.addf %831, %844 : vector<8x32xf32>
    %855 = arith.negf %854 : vector<8x32xf32>
    %856 = math.exp %855 : vector<8x32xf32>
    %cst_340 = arith.constant 1.000000e+00 : f32
    %857 = vector.broadcast %cst_340 : f32 to vector<8x32xf32>
    %858 = arith.addf %857, %856 : vector<8x32xf32>
    %859 = arith.divf %857, %858 : vector<8x32xf32>
    %860 = arith.mulf %853, %847 : vector<8x32xf32>
    %861 = arith.addf %838, %860 : vector<8x32xf32>
    %862 = math.tanh %861 : vector<8x32xf32>
    %863 = arith.subf %814, %862 : vector<8x32xf32>
    %864 = arith.mulf %859, %863 : vector<8x32xf32>
    %865 = arith.addf %862, %864 : vector<8x32xf32>
    %866 = arith.index_cast %815 : i32 to index
    %c0_341 = arith.constant 0 : index
    %867 = vector.load %arg1[%866, %c0_341] : memref<64x32xf32, #tpu.memory_space<vmem>>, vector<8x32xf32>
    %cst_342 = arith.constant 0.000000e+00 : f32
    %868 = vector.broadcast %cst_342 : f32 to vector<8x32xf32>
    %869 = arith.cmpf one, %867, %868 : vector<8x32xf32>
    %870 = arith.select %869, %865, %814 : vector<8x32xi1>, vector<8x32xf32>
    %c5_i32_343 = arith.constant 5 : i32
    %c8_i32_344 = arith.constant 8 : i32
    %871 = arith.muli %c5_i32_343, %c8_i32_344 : i32
    %c7_i32_345 = arith.constant 7 : i32
    %872 = arith.subi %c7_i32_345, %c5_i32_343 : i32
    %c8_i32_346 = arith.constant 8 : i32
    %873 = arith.muli %872, %c8_i32_346 : i32
    %874 = arith.index_cast %871 : i32 to index
    %c0_347 = arith.constant 0 : index
    %875 = vector.load %arg9[%874, %c0_347] : memref<64x32xf32, #tpu.memory_space<vmem>>, vector<8x32xf32>
    %876 = arith.index_cast %873 : i32 to index
    %c0_348 = arith.constant 0 : index
    %877 = vector.load %arg9[%876, %c0_348] : memref<64x32xf32, #tpu.memory_space<vmem>>, vector<8x32xf32>
    %878 = vector.shape_cast %2 : vector<1x32xi1> to vector<1x32xi1>
    %879 = vector.broadcast %878 : vector<1x32xi1> to vector<8x32xi1>
    %880 = arith.select %879, %875, %877 : vector<8x32xi1>, vector<8x32xf32>
    %881 = arith.index_cast %871 : i32 to index
    %c0_349 = arith.constant 0 : index
    %882 = vector.load %arg10[%881, %c0_349] : memref<64x32xf32, #tpu.memory_space<vmem>>, vector<8x32xf32>
    %883 = arith.index_cast %873 : i32 to index
    %c0_350 = arith.constant 0 : index
    %884 = vector.load %arg10[%883, %c0_350] : memref<64x32xf32, #tpu.memory_space<vmem>>, vector<8x32xf32>
    %885 = vector.shape_cast %2 : vector<1x32xi1> to vector<1x32xi1>
    %886 = vector.broadcast %885 : vector<1x32xi1> to vector<8x32xi1>
    %887 = arith.select %886, %882, %884 : vector<8x32xi1>, vector<8x32xf32>
    %888 = arith.index_cast %871 : i32 to index
    %c0_351 = arith.constant 0 : index
    %889 = vector.load %arg11[%888, %c0_351] : memref<64x32xf32, #tpu.memory_space<vmem>>, vector<8x32xf32>
    %890 = arith.index_cast %873 : i32 to index
    %c0_352 = arith.constant 0 : index
    %891 = vector.load %arg11[%890, %c0_352] : memref<64x32xf32, #tpu.memory_space<vmem>>, vector<8x32xf32>
    %892 = vector.shape_cast %2 : vector<1x32xi1> to vector<1x32xi1>
    %893 = vector.broadcast %892 : vector<1x32xi1> to vector<8x32xi1>
    %894 = arith.select %893, %889, %891 : vector<8x32xi1>, vector<8x32xf32>
    %cst_353 = arith.constant dense<0.000000e+00> : vector<8x32xf32>
    %895 = tpu.matmul %870, %579, %cst_353 {dimension_numbers = #tpu.dot_dimension_numbers<[1], [0], [0], [1], [0, 0, 1, 1], [], []>} : vector<8x32xf32>, vector<32x32xf32>, vector<8x32xf32> -> vector<8x32xf32>
    %896 = vector.broadcast %585 : vector<1x32xf32> to vector<8x32xf32>
    %897 = arith.addf %895, %896 : vector<8x32xf32>
    %cst_354 = arith.constant dense<0.000000e+00> : vector<8x32xf32>
    %898 = tpu.matmul %870, %581, %cst_354 {dimension_numbers = #tpu.dot_dimension_numbers<[1], [0], [0], [1], [0, 0, 1, 1], [], []>} : vector<8x32xf32>, vector<32x32xf32>, vector<8x32xf32> -> vector<8x32xf32>
    %899 = vector.broadcast %587 : vector<1x32xf32> to vector<8x32xf32>
    %900 = arith.addf %898, %899 : vector<8x32xf32>
    %cst_355 = arith.constant dense<0.000000e+00> : vector<8x32xf32>
    %901 = tpu.matmul %870, %583, %cst_355 {dimension_numbers = #tpu.dot_dimension_numbers<[1], [0], [0], [1], [0, 0, 1, 1], [], []>} : vector<8x32xf32>, vector<32x32xf32>, vector<8x32xf32> -> vector<8x32xf32>
    %902 = vector.broadcast %589 : vector<1x32xf32> to vector<8x32xf32>
    %903 = arith.addf %901, %902 : vector<8x32xf32>
    %904 = arith.addf %880, %897 : vector<8x32xf32>
    %905 = arith.negf %904 : vector<8x32xf32>
    %906 = math.exp %905 : vector<8x32xf32>
    %cst_356 = arith.constant 1.000000e+00 : f32
    %907 = vector.broadcast %cst_356 : f32 to vector<8x32xf32>
    %908 = arith.addf %907, %906 : vector<8x32xf32>
    %909 = arith.divf %907, %908 : vector<8x32xf32>
    %910 = arith.addf %887, %900 : vector<8x32xf32>
    %911 = arith.negf %910 : vector<8x32xf32>
    %912 = math.exp %911 : vector<8x32xf32>
    %cst_357 = arith.constant 1.000000e+00 : f32
    %913 = vector.broadcast %cst_357 : f32 to vector<8x32xf32>
    %914 = arith.addf %913, %912 : vector<8x32xf32>
    %915 = arith.divf %913, %914 : vector<8x32xf32>
    %916 = arith.mulf %909, %903 : vector<8x32xf32>
    %917 = arith.addf %894, %916 : vector<8x32xf32>
    %918 = math.tanh %917 : vector<8x32xf32>
    %919 = arith.subf %870, %918 : vector<8x32xf32>
    %920 = arith.mulf %915, %919 : vector<8x32xf32>
    %921 = arith.addf %918, %920 : vector<8x32xf32>
    %922 = arith.index_cast %871 : i32 to index
    %c0_358 = arith.constant 0 : index
    %923 = vector.load %arg1[%922, %c0_358] : memref<64x32xf32, #tpu.memory_space<vmem>>, vector<8x32xf32>
    %cst_359 = arith.constant 0.000000e+00 : f32
    %924 = vector.broadcast %cst_359 : f32 to vector<8x32xf32>
    %925 = arith.cmpf one, %923, %924 : vector<8x32xf32>
    %926 = arith.select %925, %921, %870 : vector<8x32xi1>, vector<8x32xf32>
    %c6_i32_360 = arith.constant 6 : i32
    %c8_i32_361 = arith.constant 8 : i32
    %927 = arith.muli %c6_i32_360, %c8_i32_361 : i32
    %c7_i32_362 = arith.constant 7 : i32
    %928 = arith.subi %c7_i32_362, %c6_i32_360 : i32
    %c8_i32_363 = arith.constant 8 : i32
    %929 = arith.muli %928, %c8_i32_363 : i32
    %930 = arith.index_cast %927 : i32 to index
    %c0_364 = arith.constant 0 : index
    %931 = vector.load %arg9[%930, %c0_364] : memref<64x32xf32, #tpu.memory_space<vmem>>, vector<8x32xf32>
    %932 = arith.index_cast %929 : i32 to index
    %c0_365 = arith.constant 0 : index
    %933 = vector.load %arg9[%932, %c0_365] : memref<64x32xf32, #tpu.memory_space<vmem>>, vector<8x32xf32>
    %934 = vector.shape_cast %2 : vector<1x32xi1> to vector<1x32xi1>
    %935 = vector.broadcast %934 : vector<1x32xi1> to vector<8x32xi1>
    %936 = arith.select %935, %931, %933 : vector<8x32xi1>, vector<8x32xf32>
    %937 = arith.index_cast %927 : i32 to index
    %c0_366 = arith.constant 0 : index
    %938 = vector.load %arg10[%937, %c0_366] : memref<64x32xf32, #tpu.memory_space<vmem>>, vector<8x32xf32>
    %939 = arith.index_cast %929 : i32 to index
    %c0_367 = arith.constant 0 : index
    %940 = vector.load %arg10[%939, %c0_367] : memref<64x32xf32, #tpu.memory_space<vmem>>, vector<8x32xf32>
    %941 = vector.shape_cast %2 : vector<1x32xi1> to vector<1x32xi1>
    %942 = vector.broadcast %941 : vector<1x32xi1> to vector<8x32xi1>
    %943 = arith.select %942, %938, %940 : vector<8x32xi1>, vector<8x32xf32>
    %944 = arith.index_cast %927 : i32 to index
    %c0_368 = arith.constant 0 : index
    %945 = vector.load %arg11[%944, %c0_368] : memref<64x32xf32, #tpu.memory_space<vmem>>, vector<8x32xf32>
    %946 = arith.index_cast %929 : i32 to index
    %c0_369 = arith.constant 0 : index
    %947 = vector.load %arg11[%946, %c0_369] : memref<64x32xf32, #tpu.memory_space<vmem>>, vector<8x32xf32>
    %948 = vector.shape_cast %2 : vector<1x32xi1> to vector<1x32xi1>
    %949 = vector.broadcast %948 : vector<1x32xi1> to vector<8x32xi1>
    %950 = arith.select %949, %945, %947 : vector<8x32xi1>, vector<8x32xf32>
    %cst_370 = arith.constant dense<0.000000e+00> : vector<8x32xf32>
    %951 = tpu.matmul %926, %579, %cst_370 {dimension_numbers = #tpu.dot_dimension_numbers<[1], [0], [0], [1], [0, 0, 1, 1], [], []>} : vector<8x32xf32>, vector<32x32xf32>, vector<8x32xf32> -> vector<8x32xf32>
    %952 = vector.broadcast %585 : vector<1x32xf32> to vector<8x32xf32>
    %953 = arith.addf %951, %952 : vector<8x32xf32>
    %cst_371 = arith.constant dense<0.000000e+00> : vector<8x32xf32>
    %954 = tpu.matmul %926, %581, %cst_371 {dimension_numbers = #tpu.dot_dimension_numbers<[1], [0], [0], [1], [0, 0, 1, 1], [], []>} : vector<8x32xf32>, vector<32x32xf32>, vector<8x32xf32> -> vector<8x32xf32>
    %955 = vector.broadcast %587 : vector<1x32xf32> to vector<8x32xf32>
    %956 = arith.addf %954, %955 : vector<8x32xf32>
    %cst_372 = arith.constant dense<0.000000e+00> : vector<8x32xf32>
    %957 = tpu.matmul %926, %583, %cst_372 {dimension_numbers = #tpu.dot_dimension_numbers<[1], [0], [0], [1], [0, 0, 1, 1], [], []>} : vector<8x32xf32>, vector<32x32xf32>, vector<8x32xf32> -> vector<8x32xf32>
    %958 = vector.broadcast %589 : vector<1x32xf32> to vector<8x32xf32>
    %959 = arith.addf %957, %958 : vector<8x32xf32>
    %960 = arith.addf %936, %953 : vector<8x32xf32>
    %961 = arith.negf %960 : vector<8x32xf32>
    %962 = math.exp %961 : vector<8x32xf32>
    %cst_373 = arith.constant 1.000000e+00 : f32
    %963 = vector.broadcast %cst_373 : f32 to vector<8x32xf32>
    %964 = arith.addf %963, %962 : vector<8x32xf32>
    %965 = arith.divf %963, %964 : vector<8x32xf32>
    %966 = arith.addf %943, %956 : vector<8x32xf32>
    %967 = arith.negf %966 : vector<8x32xf32>
    %968 = math.exp %967 : vector<8x32xf32>
    %cst_374 = arith.constant 1.000000e+00 : f32
    %969 = vector.broadcast %cst_374 : f32 to vector<8x32xf32>
    %970 = arith.addf %969, %968 : vector<8x32xf32>
    %971 = arith.divf %969, %970 : vector<8x32xf32>
    %972 = arith.mulf %965, %959 : vector<8x32xf32>
    %973 = arith.addf %950, %972 : vector<8x32xf32>
    %974 = math.tanh %973 : vector<8x32xf32>
    %975 = arith.subf %926, %974 : vector<8x32xf32>
    %976 = arith.mulf %971, %975 : vector<8x32xf32>
    %977 = arith.addf %974, %976 : vector<8x32xf32>
    %978 = arith.index_cast %927 : i32 to index
    %c0_375 = arith.constant 0 : index
    %979 = vector.load %arg1[%978, %c0_375] : memref<64x32xf32, #tpu.memory_space<vmem>>, vector<8x32xf32>
    %cst_376 = arith.constant 0.000000e+00 : f32
    %980 = vector.broadcast %cst_376 : f32 to vector<8x32xf32>
    %981 = arith.cmpf one, %979, %980 : vector<8x32xf32>
    %982 = arith.select %981, %977, %926 : vector<8x32xi1>, vector<8x32xf32>
    %c7_i32_377 = arith.constant 7 : i32
    %c8_i32_378 = arith.constant 8 : i32
    %983 = arith.muli %c7_i32_377, %c8_i32_378 : i32
    %c7_i32_379 = arith.constant 7 : i32
    %984 = arith.subi %c7_i32_379, %c7_i32_377 : i32
    %c8_i32_380 = arith.constant 8 : i32
    %985 = arith.muli %984, %c8_i32_380 : i32
    %986 = arith.index_cast %983 : i32 to index
    %c0_381 = arith.constant 0 : index
    %987 = vector.load %arg9[%986, %c0_381] : memref<64x32xf32, #tpu.memory_space<vmem>>, vector<8x32xf32>
    %988 = arith.index_cast %985 : i32 to index
    %c0_382 = arith.constant 0 : index
    %989 = vector.load %arg9[%988, %c0_382] : memref<64x32xf32, #tpu.memory_space<vmem>>, vector<8x32xf32>
    %990 = vector.shape_cast %2 : vector<1x32xi1> to vector<1x32xi1>
    %991 = vector.broadcast %990 : vector<1x32xi1> to vector<8x32xi1>
    %992 = arith.select %991, %987, %989 : vector<8x32xi1>, vector<8x32xf32>
    %993 = arith.index_cast %983 : i32 to index
    %c0_383 = arith.constant 0 : index
    %994 = vector.load %arg10[%993, %c0_383] : memref<64x32xf32, #tpu.memory_space<vmem>>, vector<8x32xf32>
    %995 = arith.index_cast %985 : i32 to index
    %c0_384 = arith.constant 0 : index
    %996 = vector.load %arg10[%995, %c0_384] : memref<64x32xf32, #tpu.memory_space<vmem>>, vector<8x32xf32>
    %997 = vector.shape_cast %2 : vector<1x32xi1> to vector<1x32xi1>
    %998 = vector.broadcast %997 : vector<1x32xi1> to vector<8x32xi1>
    %999 = arith.select %998, %994, %996 : vector<8x32xi1>, vector<8x32xf32>
    %1000 = arith.index_cast %983 : i32 to index
    %c0_385 = arith.constant 0 : index
    %1001 = vector.load %arg11[%1000, %c0_385] : memref<64x32xf32, #tpu.memory_space<vmem>>, vector<8x32xf32>
    %1002 = arith.index_cast %985 : i32 to index
    %c0_386 = arith.constant 0 : index
    %1003 = vector.load %arg11[%1002, %c0_386] : memref<64x32xf32, #tpu.memory_space<vmem>>, vector<8x32xf32>
    %1004 = vector.shape_cast %2 : vector<1x32xi1> to vector<1x32xi1>
    %1005 = vector.broadcast %1004 : vector<1x32xi1> to vector<8x32xi1>
    %1006 = arith.select %1005, %1001, %1003 : vector<8x32xi1>, vector<8x32xf32>
    %cst_387 = arith.constant dense<0.000000e+00> : vector<8x32xf32>
    %1007 = tpu.matmul %982, %579, %cst_387 {dimension_numbers = #tpu.dot_dimension_numbers<[1], [0], [0], [1], [0, 0, 1, 1], [], []>} : vector<8x32xf32>, vector<32x32xf32>, vector<8x32xf32> -> vector<8x32xf32>
    %1008 = vector.broadcast %585 : vector<1x32xf32> to vector<8x32xf32>
    %1009 = arith.addf %1007, %1008 : vector<8x32xf32>
    %cst_388 = arith.constant dense<0.000000e+00> : vector<8x32xf32>
    %1010 = tpu.matmul %982, %581, %cst_388 {dimension_numbers = #tpu.dot_dimension_numbers<[1], [0], [0], [1], [0, 0, 1, 1], [], []>} : vector<8x32xf32>, vector<32x32xf32>, vector<8x32xf32> -> vector<8x32xf32>
    %1011 = vector.broadcast %587 : vector<1x32xf32> to vector<8x32xf32>
    %1012 = arith.addf %1010, %1011 : vector<8x32xf32>
    %cst_389 = arith.constant dense<0.000000e+00> : vector<8x32xf32>
    %1013 = tpu.matmul %982, %583, %cst_389 {dimension_numbers = #tpu.dot_dimension_numbers<[1], [0], [0], [1], [0, 0, 1, 1], [], []>} : vector<8x32xf32>, vector<32x32xf32>, vector<8x32xf32> -> vector<8x32xf32>
    %1014 = vector.broadcast %589 : vector<1x32xf32> to vector<8x32xf32>
    %1015 = arith.addf %1013, %1014 : vector<8x32xf32>
    %1016 = arith.addf %992, %1009 : vector<8x32xf32>
    %1017 = arith.negf %1016 : vector<8x32xf32>
    %1018 = math.exp %1017 : vector<8x32xf32>
    %cst_390 = arith.constant 1.000000e+00 : f32
    %1019 = vector.broadcast %cst_390 : f32 to vector<8x32xf32>
    %1020 = arith.addf %1019, %1018 : vector<8x32xf32>
    %1021 = arith.divf %1019, %1020 : vector<8x32xf32>
    %1022 = arith.addf %999, %1012 : vector<8x32xf32>
    %1023 = arith.negf %1022 : vector<8x32xf32>
    %1024 = math.exp %1023 : vector<8x32xf32>
    %cst_391 = arith.constant 1.000000e+00 : f32
    %1025 = vector.broadcast %cst_391 : f32 to vector<8x32xf32>
    %1026 = arith.addf %1025, %1024 : vector<8x32xf32>
    %1027 = arith.divf %1025, %1026 : vector<8x32xf32>
    %1028 = arith.mulf %1021, %1015 : vector<8x32xf32>
    %1029 = arith.addf %1006, %1028 : vector<8x32xf32>
    %1030 = math.tanh %1029 : vector<8x32xf32>
    %1031 = arith.subf %982, %1030 : vector<8x32xf32>
    %1032 = arith.mulf %1027, %1031 : vector<8x32xf32>
    %1033 = arith.addf %1030, %1032 : vector<8x32xf32>
    %1034 = arith.index_cast %983 : i32 to index
    %c0_392 = arith.constant 0 : index
    %1035 = vector.load %arg1[%1034, %c0_392] : memref<64x32xf32, #tpu.memory_space<vmem>>, vector<8x32xf32>
    %cst_393 = arith.constant 0.000000e+00 : f32
    %1036 = vector.broadcast %cst_393 : f32 to vector<8x32xf32>
    %1037 = arith.cmpf one, %1035, %1036 : vector<8x32xf32>
    %1038 = arith.select %1037, %1033, %982 : vector<8x32xi1>, vector<8x32xf32>
    %c8_i32_394 = arith.constant 8 : i32
    %1039 = arith.addf %509, %1038 : vector<8x32xf32>
    %c0_395 = arith.constant 0 : index
    %c0_396 = arith.constant 0 : index
    %1040 = vector.load %arg8[%c0_395, %c0_396] : memref<8x32xf32, #tpu.memory_space<vmem>>, vector<8x32xf32>
    tpu.vector_store %arg8[%c0_395, %c0_396], %1039 {strides = array<i32>} : memref<8x32xf32, #tpu.memory_space<vmem>>, vector<8x32xf32>,
    return
  }
}

</mosaic_0001>

<llo_original>
// kernel: tpu_custom_call.1
$region0: #{tpu_custom_call.1}
  #allocation0 [shape = 'u32[]', space=smem, size = 0x4, offset = 0x4, fixed_abs, tag = 'smem constant byte address 0x4 - core index']
  #allocation1 [shape = 'u32[72,128]{1,0:T(1,128)}', space=vmem, size = 0x9000, scoped, tag = 'internal scratch']
  #allocation2 [shape = 'f32[64,32]{1,0:T(8,128)}', space=vmem, size = 0x8000, scoped, tag = 'scratch operand']
  #allocation3 [shape = 'f32[64,32]{1,0:T(8,128)}', space=vmem, size = 0x8000, scoped, tag = 'scratch operand']
  #allocation4 [shape = 'f32[64,32]{1,0:T(8,128)}', space=vmem, size = 0x8000, scoped, tag = 'scratch operand']
  #allocation5 [shape = 'f32[64,32]{1,0:T(8,128)}', space=vmem, size = 0x8000, scoped, tag = 'scratch operand']
  %s0 = inlined_call_operand.vmem [shape: f32[64,32], index: 0, kind: input, shape index: {}]
  %s1 = inlined_call_operand.vmem [shape: f32[64,32], index: 1, kind: input, shape index: {}]
  %s2 = inlined_call_operand.vmem [shape: f32[32,32], index: 2, kind: input, shape index: {}]
  %s3 = inlined_call_operand.vmem [shape: f32[1,32], index: 3, kind: input, shape index: {}]
  %s4 = inlined_call_operand.hbm [shape: f32[2,3,32,32], index: 4, kind: input, shape index: {}]
  %s5 = inlined_call_operand.vmem [shape: f32[2,3,1,32], index: 5, kind: input, shape index: {}]
  %s6 = inlined_call_operand.hbm [shape: f32[2,3,32,32], index: 6, kind: input, shape index: {}]
  %s7 = inlined_call_operand.vmem [shape: f32[2,3,1,32], index: 7, kind: input, shape index: {}]
  %s8 = inlined_call_operand.hbm [shape: f32[8,32], index: 8, kind: output, shape index: {}]
  %s9 = sld [smem:[#allocation0]]
  $region50: #{tpu_custom_call.1} parent=0
    _
  %s11 = ssub.s32 1, %s9
  %s12 = scalar_select 0, %s11, %s9
  $region1: #{tpu_custom_call.1} parent=0
    #allocation6 [shape = 'u8[98304]{0}', space=vmem, size = 0x18000, scoped, tag = 'input window, operand 4, single buffered']
    #allocation7 [shape = 's32[1]{0}', space=sflag, size = 0x4, scoped, tag = 'scoped memory for tpu_custom_call.1']
    #allocation8 [shape = 's32[1]{0}', space=sflag, size = 0x4, scoped, tag = 'scoped memory for tpu_custom_call.1']
    #allocation9 [shape = 'u8[98304]{0}', space=vmem, size = 0x18000, scoped, tag = 'input window, operand 6, single buffered']
    #allocation10 [shape = 's32[1]{0}', space=sflag, size = 0x4, scoped, tag = 'scoped memory for tpu_custom_call.1']
    #allocation11 [shape = 'u8[4096]{0}', space=vmem, size = 0x1000, scoped, tag = 'output window, operand 0, single buffered']
    %13 = vsyncpa [#allocation7], 0
    %14 = vsyncpa [#allocation10], 0
    %15 = vsyncpa [#allocation8], 0
    // Predicated region
    $region2: #{tpu_custom_call.1} parent=1 // pred_check
      _
    $region3: #{tpu_custom_call.1} parent=1 // pred_check_branch
      %17 = sbr.rel (0) target = $region5
    $region4: #{tpu_custom_call.1} parent=1 // pred_region
      _
    $region5: #{tpu_custom_call.1} parent=1 // pred_fallthru
      _
    // Predicated region
    $region6: #{tpu_custom_call.1} parent=1 // pred_check
      _
    $region7: #{tpu_custom_call.1} parent=1 // pred_check_branch
      %19 = sbr.rel (0) target = $region9
    $region8: #{tpu_custom_call.1} parent=1 // pred_region
      _
    $region9: #{tpu_custom_call.1} parent=1 // pred_fallthru
      _
    // Predicated region
    $region10: #{tpu_custom_call.1} parent=1 // pred_check
      _
    $region11: #{tpu_custom_call.1} parent=1 // pred_check_branch
      %21 = sbr.rel (0) target = $region13
    $region12: #{tpu_custom_call.1} parent=1 // pred_region
      _
    $region13: #{tpu_custom_call.1} parent=1 // pred_fallthru
      _
    // Predicated region
    $region14: #{tpu_custom_call.1} parent=1 // pred_check
      _
    $region15: #{tpu_custom_call.1} parent=1 // pred_check_branch
      %23 = sbr.rel (0) target = $region17
    $region16: #{tpu_custom_call.1} parent=1 // pred_region
      _
    $region17: #{tpu_custom_call.1} parent=1 // pred_fallthru
      _
    // Predicated region
    $region18: #{tpu_custom_call.1} parent=1 // pred_check
      _
    $region19: #{tpu_custom_call.1} parent=1 // pred_check_branch
      %25 = sbr.rel (0) target = $region21
    $region20: #{tpu_custom_call.1} parent=1 // pred_region
      %27 = vsyncadd [#allocation7], 0
      %s28 = sshll.u32 %s4, 4
      %s29 = int_to_ptr.hbm [resolvable:$true] %s28
      %s30 = sshll.u32 [#allocation6], 4
      %s31 = int_to_ptr.vmem [resolvable:$true] %s30
      %36 = dma.hbm_to_vmem [thread:$0]  %s29, 3072, %s31, [#allocation7], 128, 128, 8
    $region21: #{tpu_custom_call.1} parent=1 // pred_fallthru
      _
    // Predicated region
    $region22: #{tpu_custom_call.1} parent=1 // pred_check
      _
    $region23: #{tpu_custom_call.1} parent=1 // pred_check_branch
      %38 = sbr.rel (0) target = $region25
    $region24: #{tpu_custom_call.1} parent=1 // pred_region
      _
    $region25: #{tpu_custom_call.1} parent=1 // pred_fallthru
      _
    // Predicated region
    $region26: #{tpu_custom_call.1} parent=1 // pred_check
      _
    $region27: #{tpu_custom_call.1} parent=1 // pred_check_branch
      %40 = sbr.rel (0) target = $region29
    $region28: #{tpu_custom_call.1} parent=1 // pred_region
      %42 = vsyncadd [#allocation10], 0
      %s43 = sshll.u32 %s6, 4
      %s44 = int_to_ptr.hbm [resolvable:$true] %s43
      %s45 = sshll.u32 [#allocation9], 4
      %s46 = int_to_ptr.vmem [resolvable:$true] %s45
      %51 = dma.hbm_to_vmem [thread:$0]  %s44, 3072, %s46, [#allocation10], 128, 128, 8
    $region29: #{tpu_custom_call.1} parent=1 // pred_fallthru
      _
    // Predicated region
    $region30: #{tpu_custom_call.1} parent=1 // pred_check
      _
    $region31: #{tpu_custom_call.1} parent=1 // pred_check_branch
      %53 = sbr.rel (0) target = $region33
    $region32: #{tpu_custom_call.1} parent=1 // pred_region
      _
    $region33: #{tpu_custom_call.1} parent=1 // pred_fallthru
      _
    // Predicated region
    $region34: #{tpu_custom_call.1} parent=1 // pred_check
      _
    $region35: #{tpu_custom_call.1} parent=1 // pred_check_branch
      %55 = sbr.rel (0) target = $region37
    $region36: #{tpu_custom_call.1} parent=1 // pred_region
      %57 = dma.done [#allocation7], 3072
    $region37: #{tpu_custom_call.1} parent=1 // pred_fallthru
      _
    // Predicated region
    $region38: #{tpu_custom_call.1} parent=1 // pred_check
      _
    $region39: #{tpu_custom_call.1} parent=1 // pred_check_branch
      %59 = sbr.rel (0) target = $region41
    $region40: #{tpu_custom_call.1} parent=1 // pred_region
      %61 = dma.done [#allocation10], 3072
    $region41: #{tpu_custom_call.1} parent=1 // pred_fallthru
      _
    %v62 = vlaneseq
    %v63 = vand.u32 %v62, 127
    %vm64 = vcmp.lt.s32.totalorder %v63, 16
    %v65 = vld [vmem:[%s0] sm:$0xff]
    %v66 = vld [vmem:[%s0 + $0x8] sm:$0xff]
    %v67 = vld [vmem:[%s0 + $0x10] sm:$0xff]
    %v68 = vld [vmem:[%s0 + $0x18] sm:$0xff]
    %v69 = vld [vmem:[%s0 + $0x20] sm:$0xff]
    %v70 = vld [vmem:[%s0 + $0x28] sm:$0xff]
    %v71 = vld [vmem:[%s0 + $0x30] sm:$0xff]
    %v72 = vld [vmem:[%s0 + $0x38] sm:$0xff]
    %v73 = vld [vmem:[%s2] sm:$0xff]
    %v74 = vld [vmem:[%s2 + $0x8] sm:$0xff]
    %v75 = vld [vmem:[%s2 + $0x10] sm:$0xff]
    %v76 = vld [vmem:[%s2 + $0x18] sm:$0xff]
    %v77 = vld [vmem:[%s3] sm:$0x1]
    %v79 = vperm.slane %v77, 0
    %vm81 = vcmask 261120
    %v83 = vsel %vm81, %v65, 0
    %v86 = vsel %vm81, %v66, 0
    %v89 = vsel %vm81, %v67, 0
    %v92 = vsel %vm81, %v68, 0
    %v95 = vsel %vm81, %v69, 0
    %v98 = vsel %vm81, %v70, 0
    %v101 = vsel %vm81, %v71, 0
    %v104 = vsel %vm81, %v72, 0
    %106 = vmatpush.msra.mxu0 0.0
    %107 = vmatpush.msra.mxu0 0.0
    %108 = vmatpush.msra.mxu0 0.0
    %109 = vmatpush.msra.mxu0 0.0
    %110 = vmatpush.msra.mxu0 0.0
    %111 = vmatpush.msra.mxu0 0.0
    %112 = vmatpush.msra.mxu0 0.0
    %113 = vmatpush.msra.mxu0 0.0
    %114 = vmatpush.msra.mxu0 0.0
    %115 = vmatpush.msra.mxu0 0.0
    %116 = vmatpush.msra.mxu0 0.0
    %117 = vmatpush.msra.mxu0 0.0
    %118 = vmatpush.msra.mxu0 %v76
    %119 = vmatpush.msra.mxu0 %v75
    %120 = vmatpush.msra.mxu0 %v74
    %121 = vmatpush.msra.mxu0 %v73
    %122 = vmatmul.f32.gmra.mxu0 %v83
    %v123 = vpop.f32.mrf.mxu0
    %v124 = vadd.f32 %v79, %v123
    %125 = vmatmul.f32.gmra.mxu0 %v86
    %v126 = vpop.f32.mrf.mxu0
    %v127 = vadd.f32 %v79, %v126
    %128 = vmatmul.f32.gmra.mxu0 %v89
    %v129 = vpop.f32.mrf.mxu0
    %v130 = vadd.f32 %v79, %v129
    %131 = vmatmul.f32.gmra.mxu0 %v92
    %v132 = vpop.f32.mrf.mxu0
    %v133 = vadd.f32 %v79, %v132
    %134 = vmatmul.f32.gmra.mxu0 %v95
    %v135 = vpop.f32.mrf.mxu0
    %v136 = vadd.f32 %v79, %v135
    %137 = vmatmul.f32.gmra.mxu0 %v98
    %v138 = vpop.f32.mrf.mxu0
    %v139 = vadd.f32 %v79, %v138
    %140 = vmatmul.f32.gmra.mxu0 %v101
    %v141 = vpop.f32.mrf.mxu0
    %v142 = vadd.f32 %v79, %v141
    %143 = vmatmul.f32.gmra.mxu0 %v104
    %v144 = vpop.f32.mrf.mxu0
    %v145 = vadd.f32 %v79, %v144
    %146 = vdwg.mxu0
    %v147 = vmax.f32 %v124, 0.0
    %v148 = vmax.f32 %v127, 0.0
    %v149 = vmax.f32 %v130, 0.0
    %v150 = vmax.f32 %v133, 0.0
    %v151 = vmax.f32 %v136, 0.0
    %v152 = vmax.f32 %v139, 0.0
    %v153 = vmax.f32 %v142, 0.0
    %v154 = vmax.f32 %v145, 0.0
    %v155 = vld [vmem:[#allocation6] sm:$0xff]
    %v156 = vld [vmem:[#allocation6 + $0x8] sm:$0xff]
    %v157 = vld [vmem:[#allocation6 + $0x10] sm:$0xff]
    %v158 = vld [vmem:[#allocation6 + $0x18] sm:$0xff]
    %v159 = vld [vmem:[%s5] sm:$0x1]
    %v161 = vperm.slane %v159, 0
    %v164 = vsel %vm81, %v147, 0
    %v167 = vsel %vm81, %v148, 0
    %v170 = vsel %vm81, %v149, 0
    %v173 = vsel %vm81, %v150, 0
    %v176 = vsel %vm81, %v151, 0
    %v179 = vsel %vm81, %v152, 0
    %v182 = vsel %vm81, %v153, 0
    %v185 = vsel %vm81, %v154, 0
    %187 = vmatpush.msra.mxu0 0.0
    %188 = vmatpush.msra.mxu0 0.0
    %189 = vmatpush.msra.mxu0 0.0
    %190 = vmatpush.msra.mxu0 0.0
    %191 = vmatpush.msra.mxu0 0.0
    %192 = vmatpush.msra.mxu0 0.0
    %193 = vmatpush.msra.mxu0 0.0
    %194 = vmatpush.msra.mxu0 0.0
    %195 = vmatpush.msra.mxu0 0.0
    %196 = vmatpush.msra.mxu0 0.0
    %197 = vmatpush.msra.mxu0 0.0
    %198 = vmatpush.msra.mxu0 0.0
    %199 = vmatpush.msra.mxu0 %v158
    %200 = vmatpush.msra.mxu0 %v157
    %201 = vmatpush.msra.mxu0 %v156
    %202 = vmatpush.msra.mxu0 %v155
    %203 = vmatmul.f32.gmra.mxu0 %v164
    %v204 = vpop.f32.mrf.mxu0
    %v205 = vadd.f32 %v161, %v204
    %206 = vmatmul.f32.gmra.mxu0 %v167
    %v207 = vpop.f32.mrf.mxu0
    %v208 = vadd.f32 %v161, %v207
    %209 = vmatmul.f32.gmra.mxu0 %v170
    %v210 = vpop.f32.mrf.mxu0
    %v211 = vadd.f32 %v161, %v210
    %212 = vmatmul.f32.gmra.mxu0 %v173
    %v213 = vpop.f32.mrf.mxu0
    %v214 = vadd.f32 %v161, %v213
    %215 = vmatmul.f32.gmra.mxu0 %v176
    %v216 = vpop.f32.mrf.mxu0
    %v217 = vadd.f32 %v161, %v216
    %218 = vmatmul.f32.gmra.mxu0 %v179
    %v219 = vpop.f32.mrf.mxu0
    %v220 = vadd.f32 %v161, %v219
    %221 = vmatmul.f32.gmra.mxu0 %v182
    %v222 = vpop.f32.mrf.mxu0
    %v223 = vadd.f32 %v161, %v222
    %224 = vmatmul.f32.gmra.mxu0 %v185
    %v225 = vpop.f32.mrf.mxu0
    %v226 = vadd.f32 %v161, %v225
    %227 = vdwg.mxu0
    %228 = vst.msk [vmem:[#allocation2] sm:$0xff] %vm81, %v205
    %229 = vst.msk [vmem:[#allocation2 + $0x8] sm:$0xff] %vm81, %v208
    %230 = vst.msk [vmem:[#allocation2 + $0x10] sm:$0xff] %vm81, %v211
    %231 = vst.msk [vmem:[#allocation2 + $0x18] sm:$0xff] %vm81, %v214
    %232 = vst.msk [vmem:[#allocation2 + $0x20] sm:$0xff] %vm81, %v217
    %233 = vst.msk [vmem:[#allocation2 + $0x28] sm:$0xff] %vm81, %v220
    %234 = vst.msk [vmem:[#allocation2 + $0x30] sm:$0xff] %vm81, %v223
    %235 = vst.msk [vmem:[#allocation2 + $0x38] sm:$0xff] %vm81, %v226
    %s236 = scalar_lea.vmem [#allocation6], 32
    %v237 = vld [vmem:[%s236] sm:$0xff]
    %v238 = vld [vmem:[%s236 + $0x8] sm:$0xff]
    %v239 = vld [vmem:[%s236 + $0x10] sm:$0xff]
    %v240 = vld [vmem:[%s236 + $0x18] sm:$0xff]
    %s241 = scalar_lea.vmem %s5, 1
    %v242 = vld [vmem:[%s241] sm:$0x1]
    %v244 = vperm.slane %v242, 0
    %246 = vmatpush.msra.mxu0 0.0
    %247 = vmatpush.msra.mxu0 0.0
    %248 = vmatpush.msra.mxu0 0.0
    %249 = vmatpush.msra.mxu0 0.0
    %250 = vmatpush.msra.mxu0 0.0
    %251 = vmatpush.msra.mxu0 0.0
    %252 = vmatpush.msra.mxu0 0.0
    %253 = vmatpush.msra.mxu0 0.0
    %254 = vmatpush.msra.mxu0 0.0
    %255 = vmatpush.msra.mxu0 0.0
    %256 = vmatpush.msra.mxu0 0.0
    %257 = vmatpush.msra.mxu0 0.0
    %258 = vmatpush.msra.mxu0 %v240
    %259 = vmatpush.msra.mxu0 %v239
    %260 = vmatpush.msra.mxu0 %v238
    %261 = vmatpush.msra.mxu0 %v237
    %262 = vmatmul.f32.gmra.mxu0 %v164
    %v263 = vpop.f32.mrf.mxu0
    %v264 = vadd.f32 %v244, %v263
    %265 = vmatmul.f32.gmra.mxu0 %v167
    %v266 = vpop.f32.mrf.mxu0
    %v267 = vadd.f32 %v244, %v266
    %268 = vmatmul.f32.gmra.mxu0 %v170
    %v269 = vpop.f32.mrf.mxu0
    %v270 = vadd.f32 %v244, %v269
    %271 = vmatmul.f32.gmra.mxu0 %v173
    %v272 = vpop.f32.mrf.mxu0
    %v273 = vadd.f32 %v244, %v272
    %274 = vmatmul.f32.gmra.mxu0 %v176
    %v275 = vpop.f32.mrf.mxu0
    %v276 = vadd.f32 %v244, %v275
    %277 = vmatmul.f32.gmra.mxu0 %v179
    %v278 = vpop.f32.mrf.mxu0
    %v279 = vadd.f32 %v244, %v278
    %280 = vmatmul.f32.gmra.mxu0 %v182
    %v281 = vpop.f32.mrf.mxu0
    %v282 = vadd.f32 %v244, %v281
    %283 = vmatmul.f32.gmra.mxu0 %v185
    %v284 = vpop.f32.mrf.mxu0
    %v285 = vadd.f32 %v244, %v284
    %286 = vdwg.mxu0
    %287 = vst.msk [vmem:[#allocation3] sm:$0xff] %vm81, %v264
    %288 = vst.msk [vmem:[#allocation3 + $0x8] sm:$0xff] %vm81, %v267
    %289 = vst.msk [vmem:[#allocation3 + $0x10] sm:$0xff] %vm81, %v270
    %290 = vst.msk [vmem:[#allocation3 + $0x18] sm:$0xff] %vm81, %v273
    %291 = vst.msk [vmem:[#allocation3 + $0x20] sm:$0xff] %vm81, %v276
    %292 = vst.msk [vmem:[#allocation3 + $0x28] sm:$0xff] %vm81, %v279
    %293 = vst.msk [vmem:[#allocation3 + $0x30] sm:$0xff] %vm81, %v282
    %294 = vst.msk [vmem:[#allocation3 + $0x38] sm:$0xff] %vm81, %v285
    %s295 = scalar_lea.vmem [#allocation6], 64
    %v296 = vld [vmem:[%s295] sm:$0xff]
    %v297 = vld [vmem:[%s295 + $0x8] sm:$0xff]
    %v298 = vld [vmem:[%s295 + $0x10] sm:$0xff]
    %v299 = vld [vmem:[%s295 + $0x18] sm:$0xff]
    %s300 = scalar_lea.vmem %s5, 2
    %v301 = vld [vmem:[%s300] sm:$0x1]
    %v303 = vperm.slane %v301, 0
    %305 = vmatpush.msra.mxu0 0.0
    %306 = vmatpush.msra.mxu0 0.0
    %307 = vmatpush.msra.mxu0 0.0
    %308 = vmatpush.msra.mxu0 0.0
    %309 = vmatpush.msra.mxu0 0.0
    %310 = vmatpush.msra.mxu0 0.0
    %311 = vmatpush.msra.mxu0 0.0
    %312 = vmatpush.msra.mxu0 0.0
    %313 = vmatpush.msra.mxu0 0.0
    %314 = vmatpush.msra.mxu0 0.0
    %315 = vmatpush.msra.mxu0 0.0
    %316 = vmatpush.msra.mxu0 0.0
    %317 = vmatpush.msra.mxu0 %v299
    %318 = vmatpush.msra.mxu0 %v298
    %319 = vmatpush.msra.mxu0 %v297
    %320 = vmatpush.msra.mxu0 %v296
    %321 = vmatmul.f32.gmra.mxu0 %v164
    %v322 = vpop.f32.mrf.mxu0
    %v323 = vadd.f32 %v303, %v322
    %324 = vmatmul.f32.gmra.mxu0 %v167
    %v325 = vpop.f32.mrf.mxu0
    %v326 = vadd.f32 %v303, %v325
    %327 = vmatmul.f32.gmra.mxu0 %v170
    %v328 = vpop.f32.mrf.mxu0
    %v329 = vadd.f32 %v303, %v328
    %330 = vmatmul.f32.gmra.mxu0 %v173
    %v331 = vpop.f32.mrf.mxu0
    %v332 = vadd.f32 %v303, %v331
    %333 = vmatmul.f32.gmra.mxu0 %v176
    %v334 = vpop.f32.mrf.mxu0
    %v335 = vadd.f32 %v303, %v334
    %336 = vmatmul.f32.gmra.mxu0 %v179
    %v337 = vpop.f32.mrf.mxu0
    %v338 = vadd.f32 %v303, %v337
    %339 = vmatmul.f32.gmra.mxu0 %v182
    %v340 = vpop.f32.mrf.mxu0
    %v341 = vadd.f32 %v303, %v340
    %342 = vmatmul.f32.gmra.mxu0 %v185
    %v343 = vpop.f32.mrf.mxu0
    %v344 = vadd.f32 %v303, %v343
    %345 = vdwg.mxu0
    %346 = vst.msk [vmem:[#allocation4] sm:$0xff] %vm81, %v323
    %347 = vst.msk [vmem:[#allocation4 + $0x8] sm:$0xff] %vm81, %v326
    %348 = vst.msk [vmem:[#allocation4 + $0x10] sm:$0xff] %vm81, %v329
    %349 = vst.msk [vmem:[#allocation4 + $0x18] sm:$0xff] %vm81, %v332
    %350 = vst.msk [vmem:[#allocation4 + $0x20] sm:$0xff] %vm81, %v335
    %351 = vst.msk [vmem:[#allocation4 + $0x28] sm:$0xff] %vm81, %v338
    %352 = vst.msk [vmem:[#allocation4 + $0x30] sm:$0xff] %vm81, %v341
    %353 = vst.msk [vmem:[#allocation4 + $0x38] sm:$0xff] %vm81, %v344
    %v354 = vld [vmem:[#allocation9] sm:$0xff]
    %v355 = vld [vmem:[#allocation9 + $0x8] sm:$0xff]
    %v356 = vld [vmem:[#allocation9 + $0x10] sm:$0xff]
    %v357 = vld [vmem:[#allocation9 + $0x18] sm:$0xff]
    %s358 = scalar_lea.vmem [#allocation9], 32
    %v359 = vld [vmem:[%s358] sm:$0xff]
    %v360 = vld [vmem:[%s358 + $0x8] sm:$0xff]
    %v361 = vld [vmem:[%s358 + $0x10] sm:$0xff]
    %v362 = vld [vmem:[%s358 + $0x18] sm:$0xff]
    %s363 = scalar_lea.vmem [#allocation9], 64
    %v364 = vld [vmem:[%s363] sm:$0xff]
    %v365 = vld [vmem:[%s363 + $0x8] sm:$0xff]
    %v366 = vld [vmem:[%s363 + $0x10] sm:$0xff]
    %v367 = vld [vmem:[%s363 + $0x18] sm:$0xff]
    %v368 = vld [vmem:[%s7] sm:$0x1]
    %s369 = scalar_lea.vmem %s7, 1
    %v370 = vld [vmem:[%s369] sm:$0x1]
    %s371 = scalar_lea.vmem %s7, 2
    %v372 = vld [vmem:[%s371] sm:$0x1]
    %v373 = vld [vmem:[#allocation2] sm:$0xff]
    %v374 = vld [vmem:[#allocation2 + $0x38] sm:$0xff]
    %v375 = vsel %vm64, 1, 0
    %vm376 = vcmp.eq.s32.totalorder %v375, 1
    %v377 = vsel %vm376, %v373, %v374
    %v378 = vld [vmem:[#allocation3] sm:$0xff]
    %v379 = vld [vmem:[#allocation3 + $0x38] sm:$0xff]
    %v380 = vsel %vm376, %v378, %v379
    %v381 = vld [vmem:[#allocation4] sm:$0xff]
    %v382 = vld [vmem:[#allocation4 + $0x38] sm:$0xff]
    %v383 = vsel %vm376, %v381, %v382
    %v385 = vperm.slane %v368, 0
    %v388 = vsel %vm81, 0.0, 0
    %390 = vmatpush.msra.mxu0 0.0
    %391 = vmatpush.msra.mxu0 0.0
    %392 = vmatpush.msra.mxu0 0.0
    %393 = vmatpush.msra.mxu0 0.0
    %394 = vmatpush.msra.mxu0 0.0
    %395 = vmatpush.msra.mxu0 0.0
    %396 = vmatpush.msra.mxu0 0.0
    %397 = vmatpush.msra.mxu0 0.0
    %398 = vmatpush.msra.mxu0 0.0
    %399 = vmatpush.msra.mxu0 0.0
    %400 = vmatpush.msra.mxu0 0.0
    %401 = vmatpush.msra.mxu0 0.0
    %402 = vmatpush.msra.mxu0 %v357
    %403 = vmatpush.msra.mxu0 %v356
    %404 = vmatpush.msra.mxu0 %v355
    %405 = vmatpush.msra.mxu0 %v354
    %406 = vmatmul.f32.gmra.mxu0 %v388
    %v407 = vpop.f32.mrf.mxu0
    %v408 = vadd.f32 %v385, %v407
    %409 = vdwg.mxu0
    %v411 = vperm.slane %v370, 0
    %413 = vmatpush.msra.mxu0 0.0
    %414 = vmatpush.msra.mxu0 0.0
    %415 = vmatpush.msra.mxu0 0.0
    %416 = vmatpush.msra.mxu0 0.0
    %417 = vmatpush.msra.mxu0 0.0
    %418 = vmatpush.msra.mxu0 0.0
    %419 = vmatpush.msra.mxu0 0.0
    %420 = vmatpush.msra.mxu0 0.0
    %421 = vmatpush.msra.mxu0 0.0
    %422 = vmatpush.msra.mxu0 0.0
    %423 = vmatpush.msra.mxu0 0.0
    %424 = vmatpush.msra.mxu0 0.0
    %425 = vmatpush.msra.mxu0 %v362
    %426 = vmatpush.msra.mxu0 %v361
    %427 = vmatpush.msra.mxu0 %v360
    %428 = vmatpush.msra.mxu0 %v359
    %429 = vmatmul.f32.gmra.mxu0 %v388
    %v430 = vpop.f32.mrf.mxu0
    %v431 = vadd.f32 %v411, %v430
    %432 = vdwg.mxu0
    %v434 = vperm.slane %v372, 0
    %436 = vmatpush.msra.mxu0 0.0
    %437 = vmatpush.msra.mxu0 0.0
    %438 = vmatpush.msra.mxu0 0.0
    %439 = vmatpush.msra.mxu0 0.0
    %440 = vmatpush.msra.mxu0 0.0
    %441 = vmatpush.msra.mxu0 0.0
    %442 = vmatpush.msra.mxu0 0.0
    %443 = vmatpush.msra.mxu0 0.0
    %444 = vmatpush.msra.mxu0 0.0
    %445 = vmatpush.msra.mxu0 0.0
    %446 = vmatpush.msra.mxu0 0.0
    %447 = vmatpush.msra.mxu0 0.0
    %448 = vmatpush.msra.mxu0 %v367
    %449 = vmatpush.msra.mxu0 %v366
    %450 = vmatpush.msra.mxu0 %v365
    %451 = vmatpush.msra.mxu0 %v364
    %452 = vmatmul.f32.gmra.mxu0 %v388
    %v453 = vpop.f32.mrf.mxu0
    %v454 = vadd.f32 %v434, %v453
    %455 = vdwg.mxu0
    %v456 = vadd.f32 %v377, %v408
    %v457 = vxor.u32 %v456, 2147483648
    %v458 = vmul.f32 %v457, 1.442695
    %v459 = vpow.pop %v458
    %v460 = vadd.f32 %v459, 1.0
    %v461 = vrcp.pop %v460
    %v462 = vmul.f32 %v460, %v461
    %v463 = vsub.f32 1.0, %v462
    %v464 = vmul.f32 %v461, %v463
    %v465 = vadd.f32 %v461, %v464
    %vm466 = vweird.f32 %v460
    %vm467 = vweird.f32 %v461
    %vm468 = vmor %vm466, %vm467
    %v469 = vsel %vm468, %v461, %v465
    %v470 = vand.u32 2147483647, %v460
    %vm471 = vcmp.eq.f32.partialorder %v470, 8.507059e+37
    %v472 = vand.u32 %v460, 2147483648
    %v473 = vor.u32 1.1754944e-38, %v472
    %v474 = vsel %vm471, %v473, %v469
    %v475 = vmul.f32 1.0, %v474
    %v476 = vadd.f32 %v380, %v431
    %v477 = vxor.u32 %v476, 2147483648
    %v478 = vmul.f32 %v477, 1.442695
    %v479 = vpow.pop %v478
    %v480 = vadd.f32 %v479, 1.0
    %v481 = vrcp.pop %v480
    %v482 = vmul.f32 %v480, %v481
    %v483 = vsub.f32 1.0, %v482
    %v484 = vmul.f32 %v481, %v483
    %v485 = vadd.f32 %v481, %v484
    %vm486 = vweird.f32 %v480
    %vm487 = vweird.f32 %v481
    %vm488 = vmor %vm486, %vm487
    %v489 = vsel %vm488, %v481, %v485
    %v490 = vand.u32 2147483647, %v480
    %vm491 = vcmp.eq.f32.partialorder %v490, 8.507059e+37
    %v492 = vand.u32 %v480, 2147483648
    %v493 = vor.u32 1.1754944e-38, %v492
    %v494 = vsel %vm491, %v493, %v489
    %v495 = vmul.f32 1.0, %v494
    %v496 = vmul.f32 %v475, %v454
    %v497 = vadd.f32 %v383, %v496
    %v498 = vtanh.pop %v497
    %v499 = vsub.f32 0.0, %v498
    %v500 = vmul.f32 %v495, %v499
    %v501 = vadd.f32 %v498, %v500
    %v502 = vld [vmem:[%s1] sm:$0xff]
    %vm503 = vcmp.ne.f32.partialorder %v502, 0.0
    %v504 = vsel %vm503, %v501, 0.0
    %505 = vst.msk [vmem:[#allocation5] sm:$0xff] %vm81, %v504
    %v506 = vld [vmem:[#allocation2 + $0x8] sm:$0xff]
    %v507 = vld [vmem:[#allocation2 + $0x30] sm:$0xff]
    %v508 = vsel %vm376, %v506, %v507
    %v509 = vld [vmem:[#allocation3 + $0x8] sm:$0xff]
    %v510 = vld [vmem:[#allocation3 + $0x30] sm:$0xff]
    %v511 = vsel %vm376, %v509, %v510
    %v512 = vld [vmem:[#allocation4 + $0x8] sm:$0xff]
    %v513 = vld [vmem:[#allocation4 + $0x30] sm:$0xff]
    %v514 = vsel %vm376, %v512, %v513
    %v516 = vsel %vm81, %v504, 0
    %518 = vmatpush.msra.mxu0 0.0
    %519 = vmatpush.msra.mxu0 0.0
    %520 = vmatpush.msra.mxu0 0.0
    %521 = vmatpush.msra.mxu0 0.0
    %522 = vmatpush.msra.mxu0 0.0
    %523 = vmatpush.msra.mxu0 0.0
    %524 = vmatpush.msra.mxu0 0.0
    %525 = vmatpush.msra.mxu0 0.0
    %526 = vmatpush.msra.mxu0 0.0
    %527 = vmatpush.msra.mxu0 0.0
    %528 = vmatpush.msra.mxu0 0.0
    %529 = vmatpush.msra.mxu0 0.0
    %530 = vmatpush.msra.mxu0 %v357
    %531 = vmatpush.msra.mxu0 %v356
    %532 = vmatpush.msra.mxu0 %v355
    %533 = vmatpush.msra.mxu0 %v354
    %534 = vmatmul.f32.gmra.mxu0 %v516
    %v535 = vpop.f32.mrf.mxu0
    %v536 = vadd.f32 %v385, %v535
    %537 = vdwg.mxu0
    %538 = vmatpush.msra.mxu0 0.0
    %539 = vmatpush.msra.mxu0 0.0
    %540 = vmatpush.msra.mxu0 0.0
    %541 = vmatpush.msra.mxu0 0.0
    %542 = vmatpush.msra.mxu0 0.0
    %543 = vmatpush.msra.mxu0 0.0
    %544 = vmatpush.msra.mxu0 0.0
    %545 = vmatpush.msra.mxu0 0.0
    %546 = vmatpush.msra.mxu0 0.0
    %547 = vmatpush.msra.mxu0 0.0
    %548 = vmatpush.msra.mxu0 0.0
    %549 = vmatpush.msra.mxu0 0.0
    %550 = vmatpush.msra.mxu0 %v362
    %551 = vmatpush.msra.mxu0 %v361
    %552 = vmatpush.msra.mxu0 %v360
    %553 = vmatpush.msra.mxu0 %v359
    %554 = vmatmul.f32.gmra.mxu0 %v516
    %v555 = vpop.f32.mrf.mxu0
    %v556 = vadd.f32 %v411, %v555
    %557 = vdwg.mxu0
    %558 = vmatpush.msra.mxu0 0.0
    %559 = vmatpush.msra.mxu0 0.0
    %560 = vmatpush.msra.mxu0 0.0
    %561 = vmatpush.msra.mxu0 0.0
    %562 = vmatpush.msra.mxu0 0.0
    %563 = vmatpush.msra.mxu0 0.0
    %564 = vmatpush.msra.mxu0 0.0
    %565 = vmatpush.msra.mxu0 0.0
    %566 = vmatpush.msra.mxu0 0.0
    %567 = vmatpush.msra.mxu0 0.0
    %568 = vmatpush.msra.mxu0 0.0
    %569 = vmatpush.msra.mxu0 0.0
    %570 = vmatpush.msra.mxu0 %v367
    %571 = vmatpush.msra.mxu0 %v366
    %572 = vmatpush.msra.mxu0 %v365
    %573 = vmatpush.msra.mxu0 %v364
    %574 = vmatmul.f32.gmra.mxu0 %v516
    %v575 = vpop.f32.mrf.mxu0
    %v576 = vadd.f32 %v434, %v575
    %577 = vdwg.mxu0
    %v578 = vadd.f32 %v508, %v536
    %v579 = vxor.u32 %v578, 2147483648
    %v580 = vmul.f32 %v579, 1.442695
    %v581 = vpow.pop %v580
    %v582 = vadd.f32 %v581, 1.0
    %v583 = vrcp.pop %v582
    %v584 = vmul.f32 %v582, %v583
    %v585 = vsub.f32 1.0, %v584
    %v586 = vmul.f32 %v583, %v585
    %v587 = vadd.f32 %v583, %v586
    %vm588 = vweird.f32 %v582
    %vm589 = vweird.f32 %v583
    %vm590 = vmor %vm588, %vm589
    %v591 = vsel %vm590, %v583, %v587
    %v592 = vand.u32 2147483647, %v582
    %vm593 = vcmp.eq.f32.partialorder %v592, 8.507059e+37
    %v594 = vand.u32 %v582, 2147483648
    %v595 = vor.u32 1.1754944e-38, %v594
    %v596 = vsel %vm593, %v595, %v591
    %v597 = vmul.f32 1.0, %v596
    %v598 = vadd.f32 %v511, %v556
    %v599 = vxor.u32 %v598, 2147483648
    %v600 = vmul.f32 %v599, 1.442695
    %v601 = vpow.pop %v600
    %v602 = vadd.f32 %v601, 1.0
    %v603 = vrcp.pop %v602
    %v604 = vmul.f32 %v602, %v603
    %v605 = vsub.f32 1.0, %v604
    %v606 = vmul.f32 %v603, %v605
    %v607 = vadd.f32 %v603, %v606
    %vm608 = vweird.f32 %v602
    %vm609 = vweird.f32 %v603
    %vm610 = vmor %vm608, %vm609
    %v611 = vsel %vm610, %v603, %v607
    %v612 = vand.u32 2147483647, %v602
    %vm613 = vcmp.eq.f32.partialorder %v612, 8.507059e+37
    %v614 = vand.u32 %v602, 2147483648
    %v615 = vor.u32 1.1754944e-38, %v614
    %v616 = vsel %vm613, %v615, %v611
    %v617 = vmul.f32 1.0, %v616
    %v618 = vmul.f32 %v597, %v576
    %v619 = vadd.f32 %v514, %v618
    %v620 = vtanh.pop %v619
    %v621 = vsub.f32 %v504, %v620
    %v622 = vmul.f32 %v617, %v621
    %v623 = vadd.f32 %v620, %v622
    %v624 = vld [vmem:[%s1 + $0x8] sm:$0xff]
    %vm625 = vcmp.ne.f32.partialorder %v624, 0.0
    %v626 = vsel %vm625, %v623, %v504
    %627 = vst.msk [vmem:[#allocation5 + $0x8] sm:$0xff] %vm81, %v626
    %v628 = vld [vmem:[#allocation2 + $0x10] sm:$0xff]
    %v629 = vld [vmem:[#allocation2 + $0x28] sm:$0xff]
    %v630 = vsel %vm376, %v628, %v629
    %v631 = vld [vmem:[#allocation3 + $0x10] sm:$0xff]
    %v632 = vld [vmem:[#allocation3 + $0x28] sm:$0xff]
    %v633 = vsel %vm376, %v631, %v632
    %v634 = vld [vmem:[#allocation4 + $0x10] sm:$0xff]
    %v635 = vld [vmem:[#allocation4 + $0x28] sm:$0xff]
    %v636 = vsel %vm376, %v634, %v635
    %v638 = vsel %vm81, %v626, 0
    %640 = vmatpush.msra.mxu0 0.0
    %641 = vmatpush.msra.mxu0 0.0
    %642 = vmatpush.msra.mxu0 0.0
    %643 = vmatpush.msra.mxu0 0.0
    %644 = vmatpush.msra.mxu0 0.0
    %645 = vmatpush.msra.mxu0 0.0
    %646 = vmatpush.msra.mxu0 0.0
    %647 = vmatpush.msra.mxu0 0.0
    %648 = vmatpush.msra.mxu0 0.0
    %649 = vmatpush.msra.mxu0 0.0
    %650 = vmatpush.msra.mxu0 0.0
    %651 = vmatpush.msra.mxu0 0.0
    %652 = vmatpush.msra.mxu0 %v357
    %653 = vmatpush.msra.mxu0 %v356
    %654 = vmatpush.msra.mxu0 %v355
    %655 = vmatpush.msra.mxu0 %v354
    %656 = vmatmul.f32.gmra.mxu0 %v638
    %v657 = vpop.f32.mrf.mxu0
    %v658 = vadd.f32 %v385, %v657
    %659 = vdwg.mxu0
    %660 = vmatpush.msra.mxu0 0.0
    %661 = vmatpush.msra.mxu0 0.0
    %662 = vmatpush.msra.mxu0 0.0
    %663 = vmatpush.msra.mxu0 0.0
    %664 = vmatpush.msra.mxu0 0.0
    %665 = vmatpush.msra.mxu0 0.0
    %666 = vmatpush.msra.mxu0 0.0
    %667 = vmatpush.msra.mxu0 0.0
    %668 = vmatpush.msra.mxu0 0.0
    %669 = vmatpush.msra.mxu0 0.0
    %670 = vmatpush.msra.mxu0 0.0
    %671 = vmatpush.msra.mxu0 0.0
    %672 = vmatpush.msra.mxu0 %v362
    %673 = vmatpush.msra.mxu0 %v361
    %674 = vmatpush.msra.mxu0 %v360
    %675 = vmatpush.msra.mxu0 %v359
    %676 = vmatmul.f32.gmra.mxu0 %v638
    %v677 = vpop.f32.mrf.mxu0
    %v678 = vadd.f32 %v411, %v677
    %679 = vdwg.mxu0
    %680 = vmatpush.msra.mxu0 0.0
    %681 = vmatpush.msra.mxu0 0.0
    %682 = vmatpush.msra.mxu0 0.0
    %683 = vmatpush.msra.mxu0 0.0
    %684 = vmatpush.msra.mxu0 0.0
    %685 = vmatpush.msra.mxu0 0.0
    %686 = vmatpush.msra.mxu0 0.0
    %687 = vmatpush.msra.mxu0 0.0
    %688 = vmatpush.msra.mxu0 0.0
    %689 = vmatpush.msra.mxu0 0.0
    %690 = vmatpush.msra.mxu0 0.0
    %691 = vmatpush.msra.mxu0 0.0
    %692 = vmatpush.msra.mxu0 %v367
    %693 = vmatpush.msra.mxu0 %v366
    %694 = vmatpush.msra.mxu0 %v365
    %695 = vmatpush.msra.mxu0 %v364
    %696 = vmatmul.f32.gmra.mxu0 %v638
    %v697 = vpop.f32.mrf.mxu0
    %v698 = vadd.f32 %v434, %v697
    %699 = vdwg.mxu0
    %v700 = vadd.f32 %v630, %v658
    %v701 = vxor.u32 %v700, 2147483648
    %v702 = vmul.f32 %v701, 1.442695
    %v703 = vpow.pop %v702
    %v704 = vadd.f32 %v703, 1.0
    %v705 = vrcp.pop %v704
    %v706 = vmul.f32 %v704, %v705
    %v707 = vsub.f32 1.0, %v706
    %v708 = vmul.f32 %v705, %v707
    %v709 = vadd.f32 %v705, %v708
    %vm710 = vweird.f32 %v704
    %vm711 = vweird.f32 %v705
    %vm712 = vmor %vm710, %vm711
    %v713 = vsel %vm712, %v705, %v709
    %v714 = vand.u32 2147483647, %v704
    %vm715 = vcmp.eq.f32.partialorder %v714, 8.507059e+37
    %v716 = vand.u32 %v704, 2147483648
    %v717 = vor.u32 1.1754944e-38, %v716
    %v718 = vsel %vm715, %v717, %v713
    %v719 = vmul.f32 1.0, %v718
    %v720 = vadd.f32 %v633, %v678
    %v721 = vxor.u32 %v720, 2147483648
    %v722 = vmul.f32 %v721, 1.442695
    %v723 = vpow.pop %v722
    %v724 = vadd.f32 %v723, 1.0
    %v725 = vrcp.pop %v724
    %v726 = vmul.f32 %v724, %v725
    %v727 = vsub.f32 1.0, %v726
    %v728 = vmul.f32 %v725, %v727
    %v729 = vadd.f32 %v725, %v728
    %vm730 = vweird.f32 %v724
    %vm731 = vweird.f32 %v725
    %vm732 = vmor %vm730, %vm731
    %v733 = vsel %vm732, %v725, %v729
    %v734 = vand.u32 2147483647, %v724
    %vm735 = vcmp.eq.f32.partialorder %v734, 8.507059e+37
    %v736 = vand.u32 %v724, 2147483648
    %v737 = vor.u32 1.1754944e-38, %v736
    %v738 = vsel %vm735, %v737, %v733
    %v739 = vmul.f32 1.0, %v738
    %v740 = vmul.f32 %v719, %v698
    %v741 = vadd.f32 %v636, %v740
    %v742 = vtanh.pop %v741
    %v743 = vsub.f32 %v626, %v742
    %v744 = vmul.f32 %v739, %v743
    %v745 = vadd.f32 %v742, %v744
    %v746 = vld [vmem:[%s1 + $0x10] sm:$0xff]
    %vm747 = vcmp.ne.f32.partialorder %v746, 0.0
    %v748 = vsel %vm747, %v745, %v626
    %749 = vst.msk [vmem:[#allocation5 + $0x10] sm:$0xff] %vm81, %v748
    %v750 = vld [vmem:[#allocation2 + $0x18] sm:$0xff]
    %v751 = vld [vmem:[#allocation2 + $0x20] sm:$0xff]
    %v752 = vsel %vm376, %v750, %v751
    %v753 = vld [vmem:[#allocation3 + $0x18] sm:$0xff]
    %v754 = vld [vmem:[#allocation3 + $0x20] sm:$0xff]
    %v755 = vsel %vm376, %v753, %v754
    %v756 = vld [vmem:[#allocation4 + $0x18] sm:$0xff]
    %v757 = vld [vmem:[#allocation4 + $0x20] sm:$0xff]
    %v758 = vsel %vm376, %v756, %v757
    %v760 = vsel %vm81, %v748, 0
    %762 = vmatpush.msra.mxu0 0.0
    %763 = vmatpush.msra.mxu0 0.0
    %764 = vmatpush.msra.mxu0 0.0
    %765 = vmatpush.msra.mxu0 0.0
    %766 = vmatpush.msra.mxu0 0.0
    %767 = vmatpush.msra.mxu0 0.0
    %768 = vmatpush.msra.mxu0 0.0
    %769 = vmatpush.msra.mxu0 0.0
    %770 = vmatpush.msra.mxu0 0.0
    %771 = vmatpush.msra.mxu0 0.0
    %772 = vmatpush.msra.mxu0 0.0
    %773 = vmatpush.msra.mxu0 0.0
    %774 = vmatpush.msra.mxu0 %v357
    %775 = vmatpush.msra.mxu0 %v356
    %776 = vmatpush.msra.mxu0 %v355
    %777 = vmatpush.msra.mxu0 %v354
    %778 = vmatmul.f32.gmra.mxu0 %v760
    %v779 = vpop.f32.mrf.mxu0
    %v780 = vadd.f32 %v385, %v779
    %781 = vdwg.mxu0
    %782 = vmatpush.msra.mxu0 0.0
    %783 = vmatpush.msra.mxu0 0.0
    %784 = vmatpush.msra.mxu0 0.0
    %785 = vmatpush.msra.mxu0 0.0
    %786 = vmatpush.msra.mxu0 0.0
    %787 = vmatpush.msra.mxu0 0.0
    %788 = vmatpush.msra.mxu0 0.0
    %789 = vmatpush.msra.mxu0 0.0
    %790 = vmatpush.msra.mxu0 0.0
    %791 = vmatpush.msra.mxu0 0.0
    %792 = vmatpush.msra.mxu0 0.0
    %793 = vmatpush.msra.mxu0 0.0
    %794 = vmatpush.msra.mxu0 %v362
    %795 = vmatpush.msra.mxu0 %v361
    %796 = vmatpush.msra.mxu0 %v360
    %797 = vmatpush.msra.mxu0 %v359
    %798 = vmatmul.f32.gmra.mxu0 %v760
    %v799 = vpop.f32.mrf.mxu0
    %v800 = vadd.f32 %v411, %v799
    %801 = vdwg.mxu0
    %802 = vmatpush.msra.mxu0 0.0
    %803 = vmatpush.msra.mxu0 0.0
    %804 = vmatpush.msra.mxu0 0.0
    %805 = vmatpush.msra.mxu0 0.0
    %806 = vmatpush.msra.mxu0 0.0
    %807 = vmatpush.msra.mxu0 0.0
    %808 = vmatpush.msra.mxu0 0.0
    %809 = vmatpush.msra.mxu0 0.0
    %810 = vmatpush.msra.mxu0 0.0
    %811 = vmatpush.msra.mxu0 0.0
    %812 = vmatpush.msra.mxu0 0.0
    %813 = vmatpush.msra.mxu0 0.0
    %814 = vmatpush.msra.mxu0 %v367
    %815 = vmatpush.msra.mxu0 %v366
    %816 = vmatpush.msra.mxu0 %v365
    %817 = vmatpush.msra.mxu0 %v364
    %818 = vmatmul.f32.gmra.mxu0 %v760
    %v819 = vpop.f32.mrf.mxu0
    %v820 = vadd.f32 %v434, %v819
    %821 = vdwg.mxu0
    %v822 = vadd.f32 %v752, %v780
    %v823 = vxor.u32 %v822, 2147483648
    %v824 = vmul.f32 %v823, 1.442695
    %v825 = vpow.pop %v824
    %v826 = vadd.f32 %v825, 1.0
    %v827 = vrcp.pop %v826
    %v828 = vmul.f32 %v826, %v827
    %v829 = vsub.f32 1.0, %v828
    %v830 = vmul.f32 %v827, %v829
    %v831 = vadd.f32 %v827, %v830
    %vm832 = vweird.f32 %v826
    %vm833 = vweird.f32 %v827
    %vm834 = vmor %vm832, %vm833
    %v835 = vsel %vm834, %v827, %v831
    %v836 = vand.u32 2147483647, %v826
    %vm837 = vcmp.eq.f32.partialorder %v836, 8.507059e+37
    %v838 = vand.u32 %v826, 2147483648
    %v839 = vor.u32 1.1754944e-38, %v838
    %v840 = vsel %vm837, %v839, %v835
    %v841 = vmul.f32 1.0, %v840
    %v842 = vadd.f32 %v755, %v800
    %v843 = vxor.u32 %v842, 2147483648
    %v844 = vmul.f32 %v843, 1.442695
    %v845 = vpow.pop %v844
    %v846 = vadd.f32 %v845, 1.0
    %v847 = vrcp.pop %v846
    %v848 = vmul.f32 %v846, %v847
    %v849 = vsub.f32 1.0, %v848
    %v850 = vmul.f32 %v847, %v849
    %v851 = vadd.f32 %v847, %v850
    %vm852 = vweird.f32 %v846
    %vm853 = vweird.f32 %v847
    %vm854 = vmor %vm852, %vm853
    %v855 = vsel %vm854, %v847, %v851
    %v856 = vand.u32 2147483647, %v846
    %vm857 = vcmp.eq.f32.partialorder %v856, 8.507059e+37
    %v858 = vand.u32 %v846, 2147483648
    %v859 = vor.u32 1.1754944e-38, %v858
    %v860 = vsel %vm857, %v859, %v855
    %v861 = vmul.f32 1.0, %v860
    %v862 = vmul.f32 %v841, %v820
    %v863 = vadd.f32 %v758, %v862
    %v864 = vtanh.pop %v863
    %v865 = vsub.f32 %v748, %v864
    %v866 = vmul.f32 %v861, %v865
    %v867 = vadd.f32 %v864, %v866
    %v868 = vld [vmem:[%s1 + $0x18] sm:$0xff]
    %vm869 = vcmp.ne.f32.partialorder %v868, 0.0
    %v870 = vsel %vm869, %v867, %v748
    %871 = vst.msk [vmem:[#allocation5 + $0x18] sm:$0xff] %vm81, %v870
    %v872 = vld [vmem:[#allocation2 + $0x20] sm:$0xff]
    %v873 = vld [vmem:[#allocation2 + $0x18] sm:$0xff]
    %v874 = vsel %vm376, %v872, %v873
    %v875 = vld [vmem:[#allocation3 + $0x20] sm:$0xff]
    %v876 = vld [vmem:[#allocation3 + $0x18] sm:$0xff]
    %v877 = vsel %vm376, %v875, %v876
    %v878 = vld [vmem:[#allocation4 + $0x20] sm:$0xff]
    %v879 = vld [vmem:[#allocation4 + $0x18] sm:$0xff]
    %v880 = vsel %vm376, %v878, %v879
    %v882 = vsel %vm81, %v870, 0
    %884 = vmatpush.msra.mxu0 0.0
    %885 = vmatpush.msra.mxu0 0.0
    %886 = vmatpush.msra.mxu0 0.0
    %887 = vmatpush.msra.mxu0 0.0
    %888 = vmatpush.msra.mxu0 0.0
    %889 = vmatpush.msra.mxu0 0.0
    %890 = vmatpush.msra.mxu0 0.0
    %891 = vmatpush.msra.mxu0 0.0
    %892 = vmatpush.msra.mxu0 0.0
    %893 = vmatpush.msra.mxu0 0.0
    %894 = vmatpush.msra.mxu0 0.0
    %895 = vmatpush.msra.mxu0 0.0
    %896 = vmatpush.msra.mxu0 %v357
    %897 = vmatpush.msra.mxu0 %v356
    %898 = vmatpush.msra.mxu0 %v355
    %899 = vmatpush.msra.mxu0 %v354
    %900 = vmatmul.f32.gmra.mxu0 %v882
    %v901 = vpop.f32.mrf.mxu0
    %v902 = vadd.f32 %v385, %v901
    %903 = vdwg.mxu0
    %904 = vmatpush.msra.mxu0 0.0
    %905 = vmatpush.msra.mxu0 0.0
    %906 = vmatpush.msra.mxu0 0.0
    %907 = vmatpush.msra.mxu0 0.0
    %908 = vmatpush.msra.mxu0 0.0
    %909 = vmatpush.msra.mxu0 0.0
    %910 = vmatpush.msra.mxu0 0.0
    %911 = vmatpush.msra.mxu0 0.0
    %912 = vmatpush.msra.mxu0 0.0
    %913 = vmatpush.msra.mxu0 0.0
    %914 = vmatpush.msra.mxu0 0.0
    %915 = vmatpush.msra.mxu0 0.0
    %916 = vmatpush.msra.mxu0 %v362
    %917 = vmatpush.msra.mxu0 %v361
    %918 = vmatpush.msra.mxu0 %v360
    %919 = vmatpush.msra.mxu0 %v359
    %920 = vmatmul.f32.gmra.mxu0 %v882
    %v921 = vpop.f32.mrf.mxu0
    %v922 = vadd.f32 %v411, %v921
    %923 = vdwg.mxu0
    %924 = vmatpush.msra.mxu0 0.0
    %925 = vmatpush.msra.mxu0 0.0
    %926 = vmatpush.msra.mxu0 0.0
    %927 = vmatpush.msra.mxu0 0.0
    %928 = vmatpush.msra.mxu0 0.0
    %929 = vmatpush.msra.mxu0 0.0
    %930 = vmatpush.msra.mxu0 0.0
    %931 = vmatpush.msra.mxu0 0.0
    %932 = vmatpush.msra.mxu0 0.0
    %933 = vmatpush.msra.mxu0 0.0
    %934 = vmatpush.msra.mxu0 0.0
    %935 = vmatpush.msra.mxu0 0.0
    %936 = vmatpush.msra.mxu0 %v367
    %937 = vmatpush.msra.mxu0 %v366
    %938 = vmatpush.msra.mxu0 %v365
    %939 = vmatpush.msra.mxu0 %v364
    %940 = vmatmul.f32.gmra.mxu0 %v882
    %v941 = vpop.f32.mrf.mxu0
    %v942 = vadd.f32 %v434, %v941
    %943 = vdwg.mxu0
    %v944 = vadd.f32 %v874, %v902
    %v945 = vxor.u32 %v944, 2147483648
    %v946 = vmul.f32 %v945, 1.442695
    %v947 = vpow.pop %v946
    %v948 = vadd.f32 %v947, 1.0
    %v949 = vrcp.pop %v948
    %v950 = vmul.f32 %v948, %v949
    %v951 = vsub.f32 1.0, %v950
    %v952 = vmul.f32 %v949, %v951
    %v953 = vadd.f32 %v949, %v952
    %vm954 = vweird.f32 %v948
    %vm955 = vweird.f32 %v949
    %vm956 = vmor %vm954, %vm955
    %v957 = vsel %vm956, %v949, %v953
    %v958 = vand.u32 2147483647, %v948
    %vm959 = vcmp.eq.f32.partialorder %v958, 8.507059e+37
    %v960 = vand.u32 %v948, 2147483648
    %v961 = vor.u32 1.1754944e-38, %v960
    %v962 = vsel %vm959, %v961, %v957
    %v963 = vmul.f32 1.0, %v962
    %v964 = vadd.f32 %v877, %v922
    %v965 = vxor.u32 %v964, 2147483648
    %v966 = vmul.f32 %v965, 1.442695
    %v967 = vpow.pop %v966
    %v968 = vadd.f32 %v967, 1.0
    %v969 = vrcp.pop %v968
    %v970 = vmul.f32 %v968, %v969
    %v971 = vsub.f32 1.0, %v970
    %v972 = vmul.f32 %v969, %v971
    %v973 = vadd.f32 %v969, %v972
    %vm974 = vweird.f32 %v968
    %vm975 = vweird.f32 %v969
    %vm976 = vmor %vm974, %vm975
    %v977 = vsel %vm976, %v969, %v973
    %v978 = vand.u32 2147483647, %v968
    %vm979 = vcmp.eq.f32.partialorder %v978, 8.507059e+37
    %v980 = vand.u32 %v968, 2147483648
    %v981 = vor.u32 1.1754944e-38, %v980
    %v982 = vsel %vm979, %v981, %v977
    %v983 = vmul.f32 1.0, %v982
    %v984 = vmul.f32 %v963, %v942
    %v985 = vadd.f32 %v880, %v984
    %v986 = vtanh.pop %v985
    %v987 = vsub.f32 %v870, %v986
    %v988 = vmul.f32 %v983, %v987
    %v989 = vadd.f32 %v986, %v988
    %v990 = vld [vmem:[%s1 + $0x20] sm:$0xff]
    %vm991 = vcmp.ne.f32.partialorder %v990, 0.0
    %v992 = vsel %vm991, %v989, %v870
    %993 = vst.msk [vmem:[#allocation5 + $0x20] sm:$0xff] %vm81, %v992
    %v994 = vld [vmem:[#allocation2 + $0x28] sm:$0xff]
    %v995 = vld [vmem:[#allocation2 + $0x10] sm:$0xff]
    %v996 = vsel %vm376, %v994, %v995
    %v997 = vld [vmem:[#allocation3 + $0x28] sm:$0xff]
    %v998 = vld [vmem:[#allocation3 + $0x10] sm:$0xff]
    %v999 = vsel %vm376, %v997, %v998
    %v1000 = vld [vmem:[#allocation4 + $0x28] sm:$0xff]
    %v1001 = vld [vmem:[#allocation4 + $0x10] sm:$0xff]
    %v1002 = vsel %vm376, %v1000, %v1001
    %v1004 = vsel %vm81, %v992, 0
    %1006 = vmatpush.msra.mxu0 0.0
    %1007 = vmatpush.msra.mxu0 0.0
    %1008 = vmatpush.msra.mxu0 0.0
    %1009 = vmatpush.msra.mxu0 0.0
    %1010 = vmatpush.msra.mxu0 0.0
    %1011 = vmatpush.msra.mxu0 0.0
    %1012 = vmatpush.msra.mxu0 0.0
    %1013 = vmatpush.msra.mxu0 0.0
    %1014 = vmatpush.msra.mxu0 0.0
    %1015 = vmatpush.msra.mxu0 0.0
    %1016 = vmatpush.msra.mxu0 0.0
    %1017 = vmatpush.msra.mxu0 0.0
    %1018 = vmatpush.msra.mxu0 %v357
    %1019 = vmatpush.msra.mxu0 %v356
    %1020 = vmatpush.msra.mxu0 %v355
    %1021 = vmatpush.msra.mxu0 %v354
    %1022 = vmatmul.f32.gmra.mxu0 %v1004
    %v1023 = vpop.f32.mrf.mxu0
    %v1024 = vadd.f32 %v385, %v1023
    %1025 = vdwg.mxu0
    %1026 = vmatpush.msra.mxu0 0.0
    %1027 = vmatpush.msra.mxu0 0.0
    %1028 = vmatpush.msra.mxu0 0.0
    %1029 = vmatpush.msra.mxu0 0.0
    %1030 = vmatpush.msra.mxu0 0.0
    %1031 = vmatpush.msra.mxu0 0.0
    %1032 = vmatpush.msra.mxu0 0.0
    %1033 = vmatpush.msra.mxu0 0.0
    %1034 = vmatpush.msra.mxu0 0.0
    %1035 = vmatpush.msra.mxu0 0.0
    %1036 = vmatpush.msra.mxu0 0.0
    %1037 = vmatpush.msra.mxu0 0.0
    %1038 = vmatpush.msra.mxu0 %v362
    %1039 = vmatpush.msra.mxu0 %v361
    %1040 = vmatpush.msra.mxu0 %v360
    %1041 = vmatpush.msra.mxu0 %v359
    %1042 = vmatmul.f32.gmra.mxu0 %v1004
    %v1043 = vpop.f32.mrf.mxu0
    %v1044 = vadd.f32 %v411, %v1043
    %1045 = vdwg.mxu0
    %1046 = vmatpush.msra.mxu0 0.0
    %1047 = vmatpush.msra.mxu0 0.0
    %1048 = vmatpush.msra.mxu0 0.0
    %1049 = vmatpush.msra.mxu0 0.0
    %1050 = vmatpush.msra.mxu0 0.0
    %1051 = vmatpush.msra.mxu0 0.0
    %1052 = vmatpush.msra.mxu0 0.0
    %1053 = vmatpush.msra.mxu0 0.0
    %1054 = vmatpush.msra.mxu0 0.0
    %1055 = vmatpush.msra.mxu0 0.0
    %1056 = vmatpush.msra.mxu0 0.0
    %1057 = vmatpush.msra.mxu0 0.0
    %1058 = vmatpush.msra.mxu0 %v367
    %1059 = vmatpush.msra.mxu0 %v366
    %1060 = vmatpush.msra.mxu0 %v365
    %1061 = vmatpush.msra.mxu0 %v364
    %1062 = vmatmul.f32.gmra.mxu0 %v1004
    %v1063 = vpop.f32.mrf.mxu0
    %v1064 = vadd.f32 %v434, %v1063
    %1065 = vdwg.mxu0
    %v1066 = vadd.f32 %v996, %v1024
    %v1067 = vxor.u32 %v1066, 2147483648
    %v1068 = vmul.f32 %v1067, 1.442695
    %v1069 = vpow.pop %v1068
    %v1070 = vadd.f32 %v1069, 1.0
    %v1071 = vrcp.pop %v1070
    %v1072 = vmul.f32 %v1070, %v1071
    %v1073 = vsub.f32 1.0, %v1072
    %v1074 = vmul.f32 %v1071, %v1073
    %v1075 = vadd.f32 %v1071, %v1074
    %vm1076 = vweird.f32 %v1070
    %vm1077 = vweird.f32 %v1071
    %vm1078 = vmor %vm1076, %vm1077
    %v1079 = vsel %vm1078, %v1071, %v1075
    %v1080 = vand.u32 2147483647, %v1070
    %vm1081 = vcmp.eq.f32.partialorder %v1080, 8.507059e+37
    %v1082 = vand.u32 %v1070, 2147483648
    %v1083 = vor.u32 1.1754944e-38, %v1082
    %v1084 = vsel %vm1081, %v1083, %v1079
    %v1085 = vmul.f32 1.0, %v1084
    %v1086 = vadd.f32 %v999, %v1044
    %v1087 = vxor.u32 %v1086, 2147483648
    %v1088 = vmul.f32 %v1087, 1.442695
    %v1089 = vpow.pop %v1088
    %v1090 = vadd.f32 %v1089, 1.0
    %v1091 = vrcp.pop %v1090
    %v1092 = vmul.f32 %v1090, %v1091
    %v1093 = vsub.f32 1.0, %v1092
    %v1094 = vmul.f32 %v1091, %v1093
    %v1095 = vadd.f32 %v1091, %v1094
    %vm1096 = vweird.f32 %v1090
    %vm1097 = vweird.f32 %v1091
    %vm1098 = vmor %vm1096, %vm1097
    %v1099 = vsel %vm1098, %v1091, %v1095
    %v1100 = vand.u32 2147483647, %v1090
    %vm1101 = vcmp.eq.f32.partialorder %v1100, 8.507059e+37
    %v1102 = vand.u32 %v1090, 2147483648
    %v1103 = vor.u32 1.1754944e-38, %v1102
    %v1104 = vsel %vm1101, %v1103, %v1099
    %v1105 = vmul.f32 1.0, %v1104
    %v1106 = vmul.f32 %v1085, %v1064
    %v1107 = vadd.f32 %v1002, %v1106
    %v1108 = vtanh.pop %v1107
    %v1109 = vsub.f32 %v992, %v1108
    %v1110 = vmul.f32 %v1105, %v1109
    %v1111 = vadd.f32 %v1108, %v1110
    %v1112 = vld [vmem:[%s1 + $0x28] sm:$0xff]
    %vm1113 = vcmp.ne.f32.partialorder %v1112, 0.0
    %v1114 = vsel %vm1113, %v1111, %v992
    %1115 = vst.msk [vmem:[#allocation5 + $0x28] sm:$0xff] %vm81, %v1114
    %v1116 = vld [vmem:[#allocation2 + $0x30] sm:$0xff]
    %v1117 = vld [vmem:[#allocation2 + $0x8] sm:$0xff]
    %v1118 = vsel %vm376, %v1116, %v1117
    %v1119 = vld [vmem:[#allocation3 + $0x30] sm:$0xff]
    %v1120 = vld [vmem:[#allocation3 + $0x8] sm:$0xff]
    %v1121 = vsel %vm376, %v1119, %v1120
    %v1122 = vld [vmem:[#allocation4 + $0x30] sm:$0xff]
    %v1123 = vld [vmem:[#allocation4 + $0x8] sm:$0xff]
    %v1124 = vsel %vm376, %v1122, %v1123
    %v1126 = vsel %vm81, %v1114, 0
    %1128 = vmatpush.msra.mxu0 0.0
    %1129 = vmatpush.msra.mxu0 0.0
    %1130 = vmatpush.msra.mxu0 0.0
    %1131 = vmatpush.msra.mxu0 0.0
    %1132 = vmatpush.msra.mxu0 0.0
    %1133 = vmatpush.msra.mxu0 0.0
    %1134 = vmatpush.msra.mxu0 0.0
    %1135 = vmatpush.msra.mxu0 0.0
    %1136 = vmatpush.msra.mxu0 0.0
    %1137 = vmatpush.msra.mxu0 0.0
    %1138 = vmatpush.msra.mxu0 0.0
    %1139 = vmatpush.msra.mxu0 0.0
    %1140 = vmatpush.msra.mxu0 %v357
    %1141 = vmatpush.msra.mxu0 %v356
    %1142 = vmatpush.msra.mxu0 %v355
    %1143 = vmatpush.msra.mxu0 %v354
    %1144 = vmatmul.f32.gmra.mxu0 %v1126
    %v1145 = vpop.f32.mrf.mxu0
    %v1146 = vadd.f32 %v385, %v1145
    %1147 = vdwg.mxu0
    %1148 = vmatpush.msra.mxu0 0.0
    %1149 = vmatpush.msra.mxu0 0.0
    %1150 = vmatpush.msra.mxu0 0.0
    %1151 = vmatpush.msra.mxu0 0.0
    %1152 = vmatpush.msra.mxu0 0.0
    %1153 = vmatpush.msra.mxu0 0.0
    %1154 = vmatpush.msra.mxu0 0.0
    %1155 = vmatpush.msra.mxu0 0.0
    %1156 = vmatpush.msra.mxu0 0.0
    %1157 = vmatpush.msra.mxu0 0.0
    %1158 = vmatpush.msra.mxu0 0.0
    %1159 = vmatpush.msra.mxu0 0.0
    %1160 = vmatpush.msra.mxu0 %v362
    %1161 = vmatpush.msra.mxu0 %v361
    %1162 = vmatpush.msra.mxu0 %v360
    %1163 = vmatpush.msra.mxu0 %v359
    %1164 = vmatmul.f32.gmra.mxu0 %v1126
    %v1165 = vpop.f32.mrf.mxu0
    %v1166 = vadd.f32 %v411, %v1165
    %1167 = vdwg.mxu0
    %1168 = vmatpush.msra.mxu0 0.0
    %1169 = vmatpush.msra.mxu0 0.0
    %1170 = vmatpush.msra.mxu0 0.0
    %1171 = vmatpush.msra.mxu0 0.0
    %1172 = vmatpush.msra.mxu0 0.0
    %1173 = vmatpush.msra.mxu0 0.0
    %1174 = vmatpush.msra.mxu0 0.0
    %1175 = vmatpush.msra.mxu0 0.0
    %1176 = vmatpush.msra.mxu0 0.0
    %1177 = vmatpush.msra.mxu0 0.0
    %1178 = vmatpush.msra.mxu0 0.0
    %1179 = vmatpush.msra.mxu0 0.0
    %1180 = vmatpush.msra.mxu0 %v367
    %1181 = vmatpush.msra.mxu0 %v366
    %1182 = vmatpush.msra.mxu0 %v365
    %1183 = vmatpush.msra.mxu0 %v364
    %1184 = vmatmul.f32.gmra.mxu0 %v1126
    %v1185 = vpop.f32.mrf.mxu0
    %v1186 = vadd.f32 %v434, %v1185
    %1187 = vdwg.mxu0
    %v1188 = vadd.f32 %v1118, %v1146
    %v1189 = vxor.u32 %v1188, 2147483648
    %v1190 = vmul.f32 %v1189, 1.442695
    %v1191 = vpow.pop %v1190
    %v1192 = vadd.f32 %v1191, 1.0
    %v1193 = vrcp.pop %v1192
    %v1194 = vmul.f32 %v1192, %v1193
    %v1195 = vsub.f32 1.0, %v1194
    %v1196 = vmul.f32 %v1193, %v1195
    %v1197 = vadd.f32 %v1193, %v1196
    %vm1198 = vweird.f32 %v1192
    %vm1199 = vweird.f32 %v1193
    %vm1200 = vmor %vm1198, %vm1199
    %v1201 = vsel %vm1200, %v1193, %v1197
    %v1202 = vand.u32 2147483647, %v1192
    %vm1203 = vcmp.eq.f32.partialorder %v1202, 8.507059e+37
    %v1204 = vand.u32 %v1192, 2147483648
    %v1205 = vor.u32 1.1754944e-38, %v1204
    %v1206 = vsel %vm1203, %v1205, %v1201
    %v1207 = vmul.f32 1.0, %v1206
    %v1208 = vadd.f32 %v1121, %v1166
    %v1209 = vxor.u32 %v1208, 2147483648
    %v1210 = vmul.f32 %v1209, 1.442695
    %v1211 = vpow.pop %v1210
    %v1212 = vadd.f32 %v1211, 1.0
    %v1213 = vrcp.pop %v1212
    %v1214 = vmul.f32 %v1212, %v1213
    %v1215 = vsub.f32 1.0, %v1214
    %v1216 = vmul.f32 %v1213, %v1215
    %v1217 = vadd.f32 %v1213, %v1216
    %vm1218 = vweird.f32 %v1212
    %vm1219 = vweird.f32 %v1213
    %vm1220 = vmor %vm1218, %vm1219
    %v1221 = vsel %vm1220, %v1213, %v1217
    %v1222 = vand.u32 2147483647, %v1212
    %vm1223 = vcmp.eq.f32.partialorder %v1222, 8.507059e+37
    %v1224 = vand.u32 %v1212, 2147483648
    %v1225 = vor.u32 1.1754944e-38, %v1224
    %v1226 = vsel %vm1223, %v1225, %v1221
    %v1227 = vmul.f32 1.0, %v1226
    %v1228 = vmul.f32 %v1207, %v1186
    %v1229 = vadd.f32 %v1124, %v1228
    %v1230 = vtanh.pop %v1229
    %v1231 = vsub.f32 %v1114, %v1230
    %v1232 = vmul.f32 %v1227, %v1231
    %v1233 = vadd.f32 %v1230, %v1232
    %v1234 = vld [vmem:[%s1 + $0x30] sm:$0xff]
    %vm1235 = vcmp.ne.f32.partialorder %v1234, 0.0
    %v1236 = vsel %vm1235, %v1233, %v1114
    %1237 = vst.msk [vmem:[#allocation5 + $0x30] sm:$0xff] %vm81, %v1236
    %v1238 = vld [vmem:[#allocation2 + $0x38] sm:$0xff]
    %v1239 = vld [vmem:[#allocation2] sm:$0xff]
    %v1240 = vsel %vm376, %v1238, %v1239
    %v1241 = vld [vmem:[#allocation3 + $0x38] sm:$0xff]
    %v1242 = vld [vmem:[#allocation3] sm:$0xff]
    %v1243 = vsel %vm376, %v1241, %v1242
    %v1244 = vld [vmem:[#allocation4 + $0x38] sm:$0xff]
    %v1245 = vld [vmem:[#allocation4] sm:$0xff]
    %v1246 = vsel %vm376, %v1244, %v1245
    %v1248 = vsel %vm81, %v1236, 0
    %1250 = vmatpush.msra.mxu0 0.0
    %1251 = vmatpush.msra.mxu0 0.0
    %1252 = vmatpush.msra.mxu0 0.0
    %1253 = vmatpush.msra.mxu0 0.0
    %1254 = vmatpush.msra.mxu0 0.0
    %1255 = vmatpush.msra.mxu0 0.0
    %1256 = vmatpush.msra.mxu0 0.0
    %1257 = vmatpush.msra.mxu0 0.0
    %1258 = vmatpush.msra.mxu0 0.0
    %1259 = vmatpush.msra.mxu0 0.0
    %1260 = vmatpush.msra.mxu0 0.0
    %1261 = vmatpush.msra.mxu0 0.0
    %1262 = vmatpush.msra.mxu0 %v357
    %1263 = vmatpush.msra.mxu0 %v356
    %1264 = vmatpush.msra.mxu0 %v355
    %1265 = vmatpush.msra.mxu0 %v354
    %1266 = vmatmul.f32.gmra.mxu0 %v1248
    %v1267 = vpop.f32.mrf.mxu0
    %v1268 = vadd.f32 %v385, %v1267
    %1269 = vdwg.mxu0
    %1270 = vmatpush.msra.mxu0 0.0
    %1271 = vmatpush.msra.mxu0 0.0
    %1272 = vmatpush.msra.mxu0 0.0
    %1273 = vmatpush.msra.mxu0 0.0
    %1274 = vmatpush.msra.mxu0 0.0
    %1275 = vmatpush.msra.mxu0 0.0
    %1276 = vmatpush.msra.mxu0 0.0
    %1277 = vmatpush.msra.mxu0 0.0
    %1278 = vmatpush.msra.mxu0 0.0
    %1279 = vmatpush.msra.mxu0 0.0
    %1280 = vmatpush.msra.mxu0 0.0
    %1281 = vmatpush.msra.mxu0 0.0
    %1282 = vmatpush.msra.mxu0 %v362
    %1283 = vmatpush.msra.mxu0 %v361
    %1284 = vmatpush.msra.mxu0 %v360
    %1285 = vmatpush.msra.mxu0 %v359
    %1286 = vmatmul.f32.gmra.mxu0 %v1248
    %v1287 = vpop.f32.mrf.mxu0
    %v1288 = vadd.f32 %v411, %v1287
    %1289 = vdwg.mxu0
    %1290 = vmatpush.msra.mxu0 0.0
    %1291 = vmatpush.msra.mxu0 0.0
    %1292 = vmatpush.msra.mxu0 0.0
    %1293 = vmatpush.msra.mxu0 0.0
    %1294 = vmatpush.msra.mxu0 0.0
    %1295 = vmatpush.msra.mxu0 0.0
    %1296 = vmatpush.msra.mxu0 0.0
    %1297 = vmatpush.msra.mxu0 0.0
    %1298 = vmatpush.msra.mxu0 0.0
    %1299 = vmatpush.msra.mxu0 0.0
    %1300 = vmatpush.msra.mxu0 0.0
    %1301 = vmatpush.msra.mxu0 0.0
    %1302 = vmatpush.msra.mxu0 %v367
    %1303 = vmatpush.msra.mxu0 %v366
    %1304 = vmatpush.msra.mxu0 %v365
    %1305 = vmatpush.msra.mxu0 %v364
    %1306 = vmatmul.f32.gmra.mxu0 %v1248
    %v1307 = vpop.f32.mrf.mxu0
    %v1308 = vadd.f32 %v434, %v1307
    %1309 = vdwg.mxu0
    %v1310 = vadd.f32 %v1240, %v1268
    %v1311 = vxor.u32 %v1310, 2147483648
    %v1312 = vmul.f32 %v1311, 1.442695
    %v1313 = vpow.pop %v1312
    %v1314 = vadd.f32 %v1313, 1.0
    %v1315 = vrcp.pop %v1314
    %v1316 = vmul.f32 %v1314, %v1315
    %v1317 = vsub.f32 1.0, %v1316
    %v1318 = vmul.f32 %v1315, %v1317
    %v1319 = vadd.f32 %v1315, %v1318
    %vm1320 = vweird.f32 %v1314
    %vm1321 = vweird.f32 %v1315
    %vm1322 = vmor %vm1320, %vm1321
    %v1323 = vsel %vm1322, %v1315, %v1319
    %v1324 = vand.u32 2147483647, %v1314
    %vm1325 = vcmp.eq.f32.partialorder %v1324, 8.507059e+37
    %v1326 = vand.u32 %v1314, 2147483648
    %v1327 = vor.u32 1.1754944e-38, %v1326
    %v1328 = vsel %vm1325, %v1327, %v1323
    %v1329 = vmul.f32 1.0, %v1328
    %v1330 = vadd.f32 %v1243, %v1288
    %v1331 = vxor.u32 %v1330, 2147483648
    %v1332 = vmul.f32 %v1331, 1.442695
    %v1333 = vpow.pop %v1332
    %v1334 = vadd.f32 %v1333, 1.0
    %v1335 = vrcp.pop %v1334
    %v1336 = vmul.f32 %v1334, %v1335
    %v1337 = vsub.f32 1.0, %v1336
    %v1338 = vmul.f32 %v1335, %v1337
    %v1339 = vadd.f32 %v1335, %v1338
    %vm1340 = vweird.f32 %v1334
    %vm1341 = vweird.f32 %v1335
    %vm1342 = vmor %vm1340, %vm1341
    %v1343 = vsel %vm1342, %v1335, %v1339
    %v1344 = vand.u32 2147483647, %v1334
    %vm1345 = vcmp.eq.f32.partialorder %v1344, 8.507059e+37
    %v1346 = vand.u32 %v1334, 2147483648
    %v1347 = vor.u32 1.1754944e-38, %v1346
    %v1348 = vsel %vm1345, %v1347, %v1343
    %v1349 = vmul.f32 1.0, %v1348
    %v1350 = vmul.f32 %v1329, %v1308
    %v1351 = vadd.f32 %v1246, %v1350
    %v1352 = vtanh.pop %v1351
    %v1353 = vsub.f32 %v1236, %v1352
    %v1354 = vmul.f32 %v1349, %v1353
    %v1355 = vadd.f32 %v1352, %v1354
    %v1356 = vld [vmem:[%s1 + $0x38] sm:$0xff]
    %vm1357 = vcmp.ne.f32.partialorder %v1356, 0.0
    %v1358 = vsel %vm1357, %v1355, %v1236
    %1359 = vst.msk [vmem:[#allocation5 + $0x38] sm:$0xff] %vm81, %v1358
    %v1360 = vld [vmem:[#allocation5] sm:$0xff]
    %v1361 = vld [vmem:[#allocation5 + $0x8] sm:$0xff]
    %v1362 = vld [vmem:[#allocation5 + $0x10] sm:$0xff]
    %v1363 = vld [vmem:[#allocation5 + $0x18] sm:$0xff]
    %v1364 = vld [vmem:[#allocation5 + $0x20] sm:$0xff]
    %v1365 = vld [vmem:[#allocation5 + $0x28] sm:$0xff]
    %v1366 = vld [vmem:[#allocation5 + $0x30] sm:$0xff]
    %v1367 = vld [vmem:[#allocation5 + $0x38] sm:$0xff]
    %v1368 = vsel %vm376, %v1360, %v1367
    %v1369 = vsel %vm376, %v1361, %v1366
    %v1370 = vsel %vm376, %v1362, %v1365
    %v1371 = vsel %vm376, %v1363, %v1364
    %v1372 = vsel %vm376, %v1364, %v1363
    %v1373 = vsel %vm376, %v1365, %v1362
    %v1374 = vsel %vm376, %v1366, %v1361
    %v1375 = vsel %vm376, %v1367, %v1360
    %s1376 = scalar_lea.vmem [#allocation6], 96
    %v1377 = vld [vmem:[%s1376] sm:$0xff]
    %v1378 = vld [vmem:[%s1376 + $0x8] sm:$0xff]
    %v1379 = vld [vmem:[%s1376 + $0x10] sm:$0xff]
    %v1380 = vld [vmem:[%s1376 + $0x18] sm:$0xff]
    %s1381 = scalar_lea.vmem %s5, 3
    %v1382 = vld [vmem:[%s1381] sm:$0x1]
    %v1384 = vperm.slane %v1382, 0
    %v1387 = vsel %vm81, %v1368, 0
    %v1390 = vsel %vm81, %v1369, 0
    %v1393 = vsel %vm81, %v1370, 0
    %v1396 = vsel %vm81, %v1371, 0
    %v1399 = vsel %vm81, %v1372, 0
    %v1402 = vsel %vm81, %v1373, 0
    %v1405 = vsel %vm81, %v1374, 0
    %v1408 = vsel %vm81, %v1375, 0
    %1410 = vmatpush.msra.mxu0 0.0
    %1411 = vmatpush.msra.mxu0 0.0
    %1412 = vmatpush.msra.mxu0 0.0
    %1413 = vmatpush.msra.mxu0 0.0
    %1414 = vmatpush.msra.mxu0 0.0
    %1415 = vmatpush.msra.mxu0 0.0
    %1416 = vmatpush.msra.mxu0 0.0
    %1417 = vmatpush.msra.mxu0 0.0
    %1418 = vmatpush.msra.mxu0 0.0
    %1419 = vmatpush.msra.mxu0 0.0
    %1420 = vmatpush.msra.mxu0 0.0
    %1421 = vmatpush.msra.mxu0 0.0
    %1422 = vmatpush.msra.mxu0 %v1380
    %1423 = vmatpush.msra.mxu0 %v1379
    %1424 = vmatpush.msra.mxu0 %v1378
    %1425 = vmatpush.msra.mxu0 %v1377
    %1426 = vmatmul.f32.gmra.mxu0 %v1387
    %v1427 = vpop.f32.mrf.mxu0
    %v1428 = vadd.f32 %v1384, %v1427
    %1429 = vmatmul.f32.gmra.mxu0 %v1390
    %v1430 = vpop.f32.mrf.mxu0
    %v1431 = vadd.f32 %v1384, %v1430
    %1432 = vmatmul.f32.gmra.mxu0 %v1393
    %v1433 = vpop.f32.mrf.mxu0
    %v1434 = vadd.f32 %v1384, %v1433
    %1435 = vmatmul.f32.gmra.mxu0 %v1396
    %v1436 = vpop.f32.mrf.mxu0
    %v1437 = vadd.f32 %v1384, %v1436
    %1438 = vmatmul.f32.gmra.mxu0 %v1399
    %v1439 = vpop.f32.mrf.mxu0
    %v1440 = vadd.f32 %v1384, %v1439
    %1441 = vmatmul.f32.gmra.mxu0 %v1402
    %v1442 = vpop.f32.mrf.mxu0
    %v1443 = vadd.f32 %v1384, %v1442
    %1444 = vmatmul.f32.gmra.mxu0 %v1405
    %v1445 = vpop.f32.mrf.mxu0
    %v1446 = vadd.f32 %v1384, %v1445
    %1447 = vmatmul.f32.gmra.mxu0 %v1408
    %v1448 = vpop.f32.mrf.mxu0
    %v1449 = vadd.f32 %v1384, %v1448
    %1450 = vdwg.mxu0
    %1451 = vst.msk [vmem:[#allocation2] sm:$0xff] %vm81, %v1428
    %1452 = vst.msk [vmem:[#allocation2 + $0x8] sm:$0xff] %vm81, %v1431
    %1453 = vst.msk [vmem:[#allocation2 + $0x10] sm:$0xff] %vm81, %v1434
    %1454 = vst.msk [vmem:[#allocation2 + $0x18] sm:$0xff] %vm81, %v1437
    %1455 = vst.msk [vmem:[#allocation2 + $0x20] sm:$0xff] %vm81, %v1440
    %1456 = vst.msk [vmem:[#allocation2 + $0x28] sm:$0xff] %vm81, %v1443
    %1457 = vst.msk [vmem:[#allocation2 + $0x30] sm:$0xff] %vm81, %v1446
    %1458 = vst.msk [vmem:[#allocation2 + $0x38] sm:$0xff] %vm81, %v1449
    %s1459 = scalar_lea.vmem [#allocation6], 128
    %v1460 = vld [vmem:[%s1459] sm:$0xff]
    %v1461 = vld [vmem:[%s1459 + $0x8] sm:$0xff]
    %v1462 = vld [vmem:[%s1459 + $0x10] sm:$0xff]
    %v1463 = vld [vmem:[%s1459 + $0x18] sm:$0xff]
    %s1464 = scalar_lea.vmem %s5, 4
    %v1465 = vld [vmem:[%s1464] sm:$0x1]
    %v1467 = vperm.slane %v1465, 0
    %1469 = vmatpush.msra.mxu0 0.0
    %1470 = vmatpush.msra.mxu0 0.0
    %1471 = vmatpush.msra.mxu0 0.0
    %1472 = vmatpush.msra.mxu0 0.0
    %1473 = vmatpush.msra.mxu0 0.0
    %1474 = vmatpush.msra.mxu0 0.0
    %1475 = vmatpush.msra.mxu0 0.0
    %1476 = vmatpush.msra.mxu0 0.0
    %1477 = vmatpush.msra.mxu0 0.0
    %1478 = vmatpush.msra.mxu0 0.0
    %1479 = vmatpush.msra.mxu0 0.0
    %1480 = vmatpush.msra.mxu0 0.0
    %1481 = vmatpush.msra.mxu0 %v1463
    %1482 = vmatpush.msra.mxu0 %v1462
    %1483 = vmatpush.msra.mxu0 %v1461
    %1484 = vmatpush.msra.mxu0 %v1460
    %1485 = vmatmul.f32.gmra.mxu0 %v1387
    %v1486 = vpop.f32.mrf.mxu0
    %v1487 = vadd.f32 %v1467, %v1486
    %1488 = vmatmul.f32.gmra.mxu0 %v1390
    %v1489 = vpop.f32.mrf.mxu0
    %v1490 = vadd.f32 %v1467, %v1489
    %1491 = vmatmul.f32.gmra.mxu0 %v1393
    %v1492 = vpop.f32.mrf.mxu0
    %v1493 = vadd.f32 %v1467, %v1492
    %1494 = vmatmul.f32.gmra.mxu0 %v1396
    %v1495 = vpop.f32.mrf.mxu0
    %v1496 = vadd.f32 %v1467, %v1495
    %1497 = vmatmul.f32.gmra.mxu0 %v1399
    %v1498 = vpop.f32.mrf.mxu0
    %v1499 = vadd.f32 %v1467, %v1498
    %1500 = vmatmul.f32.gmra.mxu0 %v1402
    %v1501 = vpop.f32.mrf.mxu0
    %v1502 = vadd.f32 %v1467, %v1501
    %1503 = vmatmul.f32.gmra.mxu0 %v1405
    %v1504 = vpop.f32.mrf.mxu0
    %v1505 = vadd.f32 %v1467, %v1504
    %1506 = vmatmul.f32.gmra.mxu0 %v1408
    %v1507 = vpop.f32.mrf.mxu0
    %v1508 = vadd.f32 %v1467, %v1507
    %1509 = vdwg.mxu0
    %1510 = vst.msk [vmem:[#allocation3] sm:$0xff] %vm81, %v1487
    %1511 = vst.msk [vmem:[#allocation3 + $0x8] sm:$0xff] %vm81, %v1490
    %1512 = vst.msk [vmem:[#allocation3 + $0x10] sm:$0xff] %vm81, %v1493
    %1513 = vst.msk [vmem:[#allocation3 + $0x18] sm:$0xff] %vm81, %v1496
    %1514 = vst.msk [vmem:[#allocation3 + $0x20] sm:$0xff] %vm81, %v1499
    %1515 = vst.msk [vmem:[#allocation3 + $0x28] sm:$0xff] %vm81, %v1502
    %1516 = vst.msk [vmem:[#allocation3 + $0x30] sm:$0xff] %vm81, %v1505
    %1517 = vst.msk [vmem:[#allocation3 + $0x38] sm:$0xff] %vm81, %v1508
    %s1518 = scalar_lea.vmem [#allocation6], 160
    %v1519 = vld [vmem:[%s1518] sm:$0xff]
    %v1520 = vld [vmem:[%s1518 + $0x8] sm:$0xff]
    %v1521 = vld [vmem:[%s1518 + $0x10] sm:$0xff]
    %v1522 = vld [vmem:[%s1518 + $0x18] sm:$0xff]
    %s1523 = scalar_lea.vmem %s5, 5
    %v1524 = vld [vmem:[%s1523] sm:$0x1]
    %v1526 = vperm.slane %v1524, 0
    %1528 = vmatpush.msra.mxu0 0.0
    %1529 = vmatpush.msra.mxu0 0.0
    %1530 = vmatpush.msra.mxu0 0.0
    %1531 = vmatpush.msra.mxu0 0.0
    %1532 = vmatpush.msra.mxu0 0.0
    %1533 = vmatpush.msra.mxu0 0.0
    %1534 = vmatpush.msra.mxu0 0.0
    %1535 = vmatpush.msra.mxu0 0.0
    %1536 = vmatpush.msra.mxu0 0.0
    %1537 = vmatpush.msra.mxu0 0.0
    %1538 = vmatpush.msra.mxu0 0.0
    %1539 = vmatpush.msra.mxu0 0.0
    %1540 = vmatpush.msra.mxu0 %v1522
    %1541 = vmatpush.msra.mxu0 %v1521
    %1542 = vmatpush.msra.mxu0 %v1520
    %1543 = vmatpush.msra.mxu0 %v1519
    %1544 = vmatmul.f32.gmra.mxu0 %v1387
    %v1545 = vpop.f32.mrf.mxu0
    %v1546 = vadd.f32 %v1526, %v1545
    %1547 = vmatmul.f32.gmra.mxu0 %v1390
    %v1548 = vpop.f32.mrf.mxu0
    %v1549 = vadd.f32 %v1526, %v1548
    %1550 = vmatmul.f32.gmra.mxu0 %v1393
    %v1551 = vpop.f32.mrf.mxu0
    %v1552 = vadd.f32 %v1526, %v1551
    %1553 = vmatmul.f32.gmra.mxu0 %v1396
    %v1554 = vpop.f32.mrf.mxu0
    %v1555 = vadd.f32 %v1526, %v1554
    %1556 = vmatmul.f32.gmra.mxu0 %v1399
    %v1557 = vpop.f32.mrf.mxu0
    %v1558 = vadd.f32 %v1526, %v1557
    %1559 = vmatmul.f32.gmra.mxu0 %v1402
    %v1560 = vpop.f32.mrf.mxu0
    %v1561 = vadd.f32 %v1526, %v1560
    %1562 = vmatmul.f32.gmra.mxu0 %v1405
    %v1563 = vpop.f32.mrf.mxu0
    %v1564 = vadd.f32 %v1526, %v1563
    %1565 = vmatmul.f32.gmra.mxu0 %v1408
    %v1566 = vpop.f32.mrf.mxu0
    %v1567 = vadd.f32 %v1526, %v1566
    %1568 = vdwg.mxu0
    %1569 = vst.msk [vmem:[#allocation4] sm:$0xff] %vm81, %v1546
    %1570 = vst.msk [vmem:[#allocation4 + $0x8] sm:$0xff] %vm81, %v1549
    %1571 = vst.msk [vmem:[#allocation4 + $0x10] sm:$0xff] %vm81, %v1552
    %1572 = vst.msk [vmem:[#allocation4 + $0x18] sm:$0xff] %vm81, %v1555
    %1573 = vst.msk [vmem:[#allocation4 + $0x20] sm:$0xff] %vm81, %v1558
    %1574 = vst.msk [vmem:[#allocation4 + $0x28] sm:$0xff] %vm81, %v1561
    %1575 = vst.msk [vmem:[#allocation4 + $0x30] sm:$0xff] %vm81, %v1564
    %1576 = vst.msk [vmem:[#allocation4 + $0x38] sm:$0xff] %vm81, %v1567
    %s1577 = scalar_lea.vmem [#allocation9], 96
    %v1578 = vld [vmem:[%s1577] sm:$0xff]
    %v1579 = vld [vmem:[%s1577 + $0x8] sm:$0xff]
    %v1580 = vld [vmem:[%s1577 + $0x10] sm:$0xff]
    %v1581 = vld [vmem:[%s1577 + $0x18] sm:$0xff]
    %s1582 = scalar_lea.vmem [#allocation9], 128
    %v1583 = vld [vmem:[%s1582] sm:$0xff]
    %v1584 = vld [vmem:[%s1582 + $0x8] sm:$0xff]
    %v1585 = vld [vmem:[%s1582 + $0x10] sm:$0xff]
    %v1586 = vld [vmem:[%s1582 + $0x18] sm:$0xff]
    %s1587 = scalar_lea.vmem [#allocation9], 160
    %v1588 = vld [vmem:[%s1587] sm:$0xff]
    %v1589 = vld [vmem:[%s1587 + $0x8] sm:$0xff]
    %v1590 = vld [vmem:[%s1587 + $0x10] sm:$0xff]
    %v1591 = vld [vmem:[%s1587 + $0x18] sm:$0xff]
    %s1592 = scalar_lea.vmem %s7, 3
    %v1593 = vld [vmem:[%s1592] sm:$0x1]
    %s1594 = scalar_lea.vmem %s7, 4
    %v1595 = vld [vmem:[%s1594] sm:$0x1]
    %s1596 = scalar_lea.vmem %s7, 5
    %v1597 = vld [vmem:[%s1596] sm:$0x1]
    %v1598 = vld [vmem:[#allocation2] sm:$0xff]
    %v1599 = vld [vmem:[#allocation2 + $0x38] sm:$0xff]
    %v1600 = vsel %vm376, %v1598, %v1599
    %v1601 = vld [vmem:[#allocation3] sm:$0xff]
    %v1602 = vld [vmem:[#allocation3 + $0x38] sm:$0xff]
    %v1603 = vsel %vm376, %v1601, %v1602
    %v1604 = vld [vmem:[#allocation4] sm:$0xff]
    %v1605 = vld [vmem:[#allocation4 + $0x38] sm:$0xff]
    %v1606 = vsel %vm376, %v1604, %v1605
    %v1608 = vperm.slane %v1593, 0
    %1610 = vmatpush.msra.mxu0 0.0
    %1611 = vmatpush.msra.mxu0 0.0
    %1612 = vmatpush.msra.mxu0 0.0
    %1613 = vmatpush.msra.mxu0 0.0
    %1614 = vmatpush.msra.mxu0 0.0
    %1615 = vmatpush.msra.mxu0 0.0
    %1616 = vmatpush.msra.mxu0 0.0
    %1617 = vmatpush.msra.mxu0 0.0
    %1618 = vmatpush.msra.mxu0 0.0
    %1619 = vmatpush.msra.mxu0 0.0
    %1620 = vmatpush.msra.mxu0 0.0
    %1621 = vmatpush.msra.mxu0 0.0
    %1622 = vmatpush.msra.mxu0 %v1581
    %1623 = vmatpush.msra.mxu0 %v1580
    %1624 = vmatpush.msra.mxu0 %v1579
    %1625 = vmatpush.msra.mxu0 %v1578
    %1626 = vmatmul.f32.gmra.mxu0 %v388
    %v1627 = vpop.f32.mrf.mxu0
    %v1628 = vadd.f32 %v1608, %v1627
    %1629 = vdwg.mxu0
    %v1631 = vperm.slane %v1595, 0
    %1633 = vmatpush.msra.mxu0 0.0
    %1634 = vmatpush.msra.mxu0 0.0
    %1635 = vmatpush.msra.mxu0 0.0
    %1636 = vmatpush.msra.mxu0 0.0
    %1637 = vmatpush.msra.mxu0 0.0
    %1638 = vmatpush.msra.mxu0 0.0
    %1639 = vmatpush.msra.mxu0 0.0
    %1640 = vmatpush.msra.mxu0 0.0
    %1641 = vmatpush.msra.mxu0 0.0
    %1642 = vmatpush.msra.mxu0 0.0
    %1643 = vmatpush.msra.mxu0 0.0
    %1644 = vmatpush.msra.mxu0 0.0
    %1645 = vmatpush.msra.mxu0 %v1586
    %1646 = vmatpush.msra.mxu0 %v1585
    %1647 = vmatpush.msra.mxu0 %v1584
    %1648 = vmatpush.msra.mxu0 %v1583
    %1649 = vmatmul.f32.gmra.mxu0 %v388
    %v1650 = vpop.f32.mrf.mxu0
    %v1651 = vadd.f32 %v1631, %v1650
    %1652 = vdwg.mxu0
    %v1654 = vperm.slane %v1597, 0
    %1656 = vmatpush.msra.mxu0 0.0
    %1657 = vmatpush.msra.mxu0 0.0
    %1658 = vmatpush.msra.mxu0 0.0
    %1659 = vmatpush.msra.mxu0 0.0
    %1660 = vmatpush.msra.mxu0 0.0
    %1661 = vmatpush.msra.mxu0 0.0
    %1662 = vmatpush.msra.mxu0 0.0
    %1663 = vmatpush.msra.mxu0 0.0
    %1664 = vmatpush.msra.mxu0 0.0
    %1665 = vmatpush.msra.mxu0 0.0
    %1666 = vmatpush.msra.mxu0 0.0
    %1667 = vmatpush.msra.mxu0 0.0
    %1668 = vmatpush.msra.mxu0 %v1591
    %1669 = vmatpush.msra.mxu0 %v1590
    %1670 = vmatpush.msra.mxu0 %v1589
    %1671 = vmatpush.msra.mxu0 %v1588
    %1672 = vmatmul.f32.gmra.mxu0 %v388
    %v1673 = vpop.f32.mrf.mxu0
    %v1674 = vadd.f32 %v1654, %v1673
    %1675 = vdwg.mxu0
    %v1676 = vadd.f32 %v1600, %v1628
    %v1677 = vxor.u32 %v1676, 2147483648
    %v1678 = vmul.f32 %v1677, 1.442695
    %v1679 = vpow.pop %v1678
    %v1680 = vadd.f32 %v1679, 1.0
    %v1681 = vrcp.pop %v1680
    %v1682 = vmul.f32 %v1680, %v1681
    %v1683 = vsub.f32 1.0, %v1682
    %v1684 = vmul.f32 %v1681, %v1683
    %v1685 = vadd.f32 %v1681, %v1684
    %vm1686 = vweird.f32 %v1680
    %vm1687 = vweird.f32 %v1681
    %vm1688 = vmor %vm1686, %vm1687
    %v1689 = vsel %vm1688, %v1681, %v1685
    %v1690 = vand.u32 2147483647, %v1680
    %vm1691 = vcmp.eq.f32.partialorder %v1690, 8.507059e+37
    %v1692 = vand.u32 %v1680, 2147483648
    %v1693 = vor.u32 1.1754944e-38, %v1692
    %v1694 = vsel %vm1691, %v1693, %v1689
    %v1695 = vmul.f32 1.0, %v1694
    %v1696 = vadd.f32 %v1603, %v1651
    %v1697 = vxor.u32 %v1696, 2147483648
    %v1698 = vmul.f32 %v1697, 1.442695
    %v1699 = vpow.pop %v1698
    %v1700 = vadd.f32 %v1699, 1.0
    %v1701 = vrcp.pop %v1700
    %v1702 = vmul.f32 %v1700, %v1701
    %v1703 = vsub.f32 1.0, %v1702
    %v1704 = vmul.f32 %v1701, %v1703
    %v1705 = vadd.f32 %v1701, %v1704
    %vm1706 = vweird.f32 %v1700
    %vm1707 = vweird.f32 %v1701
    %vm1708 = vmor %vm1706, %vm1707
    %v1709 = vsel %vm1708, %v1701, %v1705
    %v1710 = vand.u32 2147483647, %v1700
    %vm1711 = vcmp.eq.f32.partialorder %v1710, 8.507059e+37
    %v1712 = vand.u32 %v1700, 2147483648
    %v1713 = vor.u32 1.1754944e-38, %v1712
    %v1714 = vsel %vm1711, %v1713, %v1709
    %v1715 = vmul.f32 1.0, %v1714
    %v1716 = vmul.f32 %v1695, %v1674
    %v1717 = vadd.f32 %v1606, %v1716
    %v1718 = vtanh.pop %v1717
    %v1719 = vsub.f32 0.0, %v1718
    %v1720 = vmul.f32 %v1715, %v1719
    %v1721 = vadd.f32 %v1718, %v1720
    %v1722 = vld [vmem:[%s1] sm:$0xff]
    %vm1723 = vcmp.ne.f32.partialorder %v1722, 0.0
    %v1724 = vsel %vm1723, %v1721, 0.0
    %v1725 = vld [vmem:[#allocation2 + $0x8] sm:$0xff]
    %v1726 = vld [vmem:[#allocation2 + $0x30] sm:$0xff]
    %v1727 = vsel %vm376, %v1725, %v1726
    %v1728 = vld [vmem:[#allocation3 + $0x8] sm:$0xff]
    %v1729 = vld [vmem:[#allocation3 + $0x30] sm:$0xff]
    %v1730 = vsel %vm376, %v1728, %v1729
    %v1731 = vld [vmem:[#allocation4 + $0x8] sm:$0xff]
    %v1732 = vld [vmem:[#allocation4 + $0x30] sm:$0xff]
    %v1733 = vsel %vm376, %v1731, %v1732
    %v1735 = vsel %vm81, %v1724, 0
    %1737 = vmatpush.msra.mxu0 0.0
    %1738 = vmatpush.msra.mxu0 0.0
    %1739 = vmatpush.msra.mxu0 0.0
    %1740 = vmatpush.msra.mxu0 0.0
    %1741 = vmatpush.msra.mxu0 0.0
    %1742 = vmatpush.msra.mxu0 0.0
    %1743 = vmatpush.msra.mxu0 0.0
    %1744 = vmatpush.msra.mxu0 0.0
    %1745 = vmatpush.msra.mxu0 0.0
    %1746 = vmatpush.msra.mxu0 0.0
    %1747 = vmatpush.msra.mxu0 0.0
    %1748 = vmatpush.msra.mxu0 0.0
    %1749 = vmatpush.msra.mxu0 %v1581
    %1750 = vmatpush.msra.mxu0 %v1580
    %1751 = vmatpush.msra.mxu0 %v1579
    %1752 = vmatpush.msra.mxu0 %v1578
    %1753 = vmatmul.f32.gmra.mxu0 %v1735
    %v1754 = vpop.f32.mrf.mxu0
    %v1755 = vadd.f32 %v1608, %v1754
    %1756 = vdwg.mxu0
    %1757 = vmatpush.msra.mxu0 0.0
    %1758 = vmatpush.msra.mxu0 0.0
    %1759 = vmatpush.msra.mxu0 0.0
    %1760 = vmatpush.msra.mxu0 0.0
    %1761 = vmatpush.msra.mxu0 0.0
    %1762 = vmatpush.msra.mxu0 0.0
    %1763 = vmatpush.msra.mxu0 0.0
    %1764 = vmatpush.msra.mxu0 0.0
    %1765 = vmatpush.msra.mxu0 0.0
    %1766 = vmatpush.msra.mxu0 0.0
    %1767 = vmatpush.msra.mxu0 0.0
    %1768 = vmatpush.msra.mxu0 0.0
    %1769 = vmatpush.msra.mxu0 %v1586
    %1770 = vmatpush.msra.mxu0 %v1585
    %1771 = vmatpush.msra.mxu0 %v1584
    %1772 = vmatpush.msra.mxu0 %v1583
    %1773 = vmatmul.f32.gmra.mxu0 %v1735
    %v1774 = vpop.f32.mrf.mxu0
    %v1775 = vadd.f32 %v1631, %v1774
    %1776 = vdwg.mxu0
    %1777 = vmatpush.msra.mxu0 0.0
    %1778 = vmatpush.msra.mxu0 0.0
    %1779 = vmatpush.msra.mxu0 0.0
    %1780 = vmatpush.msra.mxu0 0.0
    %1781 = vmatpush.msra.mxu0 0.0
    %1782 = vmatpush.msra.mxu0 0.0
    %1783 = vmatpush.msra.mxu0 0.0
    %1784 = vmatpush.msra.mxu0 0.0
    %1785 = vmatpush.msra.mxu0 0.0
    %1786 = vmatpush.msra.mxu0 0.0
    %1787 = vmatpush.msra.mxu0 0.0
    %1788 = vmatpush.msra.mxu0 0.0
    %1789 = vmatpush.msra.mxu0 %v1591
    %1790 = vmatpush.msra.mxu0 %v1590
    %1791 = vmatpush.msra.mxu0 %v1589
    %1792 = vmatpush.msra.mxu0 %v1588
    %1793 = vmatmul.f32.gmra.mxu0 %v1735
    %v1794 = vpop.f32.mrf.mxu0
    %v1795 = vadd.f32 %v1654, %v1794
    %1796 = vdwg.mxu0
    %v1797 = vadd.f32 %v1727, %v1755
    %v1798 = vxor.u32 %v1797, 2147483648
    %v1799 = vmul.f32 %v1798, 1.442695
    %v1800 = vpow.pop %v1799
    %v1801 = vadd.f32 %v1800, 1.0
    %v1802 = vrcp.pop %v1801
    %v1803 = vmul.f32 %v1801, %v1802
    %v1804 = vsub.f32 1.0, %v1803
    %v1805 = vmul.f32 %v1802, %v1804
    %v1806 = vadd.f32 %v1802, %v1805
    %vm1807 = vweird.f32 %v1801
    %vm1808 = vweird.f32 %v1802
    %vm1809 = vmor %vm1807, %vm1808
    %v1810 = vsel %vm1809, %v1802, %v1806
    %v1811 = vand.u32 2147483647, %v1801
    %vm1812 = vcmp.eq.f32.partialorder %v1811, 8.507059e+37
    %v1813 = vand.u32 %v1801, 2147483648
    %v1814 = vor.u32 1.1754944e-38, %v1813
    %v1815 = vsel %vm1812, %v1814, %v1810
    %v1816 = vmul.f32 1.0, %v1815
    %v1817 = vadd.f32 %v1730, %v1775
    %v1818 = vxor.u32 %v1817, 2147483648
    %v1819 = vmul.f32 %v1818, 1.442695
    %v1820 = vpow.pop %v1819
    %v1821 = vadd.f32 %v1820, 1.0
    %v1822 = vrcp.pop %v1821
    %v1823 = vmul.f32 %v1821, %v1822
    %v1824 = vsub.f32 1.0, %v1823
    %v1825 = vmul.f32 %v1822, %v1824
    %v1826 = vadd.f32 %v1822, %v1825
    %vm1827 = vweird.f32 %v1821
    %vm1828 = vweird.f32 %v1822
    %vm1829 = vmor %vm1827, %vm1828
    %v1830 = vsel %vm1829, %v1822, %v1826
    %v1831 = vand.u32 2147483647, %v1821
    %vm1832 = vcmp.eq.f32.partialorder %v1831, 8.507059e+37
    %v1833 = vand.u32 %v1821, 2147483648
    %v1834 = vor.u32 1.1754944e-38, %v1833
    %v1835 = vsel %vm1832, %v1834, %v1830
    %v1836 = vmul.f32 1.0, %v1835
    %v1837 = vmul.f32 %v1816, %v1795
    %v1838 = vadd.f32 %v1733, %v1837
    %v1839 = vtanh.pop %v1838
    %v1840 = vsub.f32 %v1724, %v1839
    %v1841 = vmul.f32 %v1836, %v1840
    %v1842 = vadd.f32 %v1839, %v1841
    %v1843 = vld [vmem:[%s1 + $0x8] sm:$0xff]
    %vm1844 = vcmp.ne.f32.partialorder %v1843, 0.0
    %v1845 = vsel %vm1844, %v1842, %v1724
    %v1846 = vld [vmem:[#allocation2 + $0x10] sm:$0xff]
    %v1847 = vld [vmem:[#allocation2 + $0x28] sm:$0xff]
    %v1848 = vsel %vm376, %v1846, %v1847
    %v1849 = vld [vmem:[#allocation3 + $0x10] sm:$0xff]
    %v1850 = vld [vmem:[#allocation3 + $0x28] sm:$0xff]
    %v1851 = vsel %vm376, %v1849, %v1850
    %v1852 = vld [vmem:[#allocation4 + $0x10] sm:$0xff]
    %v1853 = vld [vmem:[#allocation4 + $0x28] sm:$0xff]
    %v1854 = vsel %vm376, %v1852, %v1853
    %v1856 = vsel %vm81, %v1845, 0
    %1858 = vmatpush.msra.mxu0 0.0
    %1859 = vmatpush.msra.mxu0 0.0
    %1860 = vmatpush.msra.mxu0 0.0
    %1861 = vmatpush.msra.mxu0 0.0
    %1862 = vmatpush.msra.mxu0 0.0
    %1863 = vmatpush.msra.mxu0 0.0
    %1864 = vmatpush.msra.mxu0 0.0
    %1865 = vmatpush.msra.mxu0 0.0
    %1866 = vmatpush.msra.mxu0 0.0
    %1867 = vmatpush.msra.mxu0 0.0
    %1868 = vmatpush.msra.mxu0 0.0
    %1869 = vmatpush.msra.mxu0 0.0
    %1870 = vmatpush.msra.mxu0 %v1581
    %1871 = vmatpush.msra.mxu0 %v1580
    %1872 = vmatpush.msra.mxu0 %v1579
    %1873 = vmatpush.msra.mxu0 %v1578
    %1874 = vmatmul.f32.gmra.mxu0 %v1856
    %v1875 = vpop.f32.mrf.mxu0
    %v1876 = vadd.f32 %v1608, %v1875
    %1877 = vdwg.mxu0
    %1878 = vmatpush.msra.mxu0 0.0
    %1879 = vmatpush.msra.mxu0 0.0
    %1880 = vmatpush.msra.mxu0 0.0
    %1881 = vmatpush.msra.mxu0 0.0
    %1882 = vmatpush.msra.mxu0 0.0
    %1883 = vmatpush.msra.mxu0 0.0
    %1884 = vmatpush.msra.mxu0 0.0
    %1885 = vmatpush.msra.mxu0 0.0
    %1886 = vmatpush.msra.mxu0 0.0
    %1887 = vmatpush.msra.mxu0 0.0
    %1888 = vmatpush.msra.mxu0 0.0
    %1889 = vmatpush.msra.mxu0 0.0
    %1890 = vmatpush.msra.mxu0 %v1586
    %1891 = vmatpush.msra.mxu0 %v1585
    %1892 = vmatpush.msra.mxu0 %v1584
    %1893 = vmatpush.msra.mxu0 %v1583
    %1894 = vmatmul.f32.gmra.mxu0 %v1856
    %v1895 = vpop.f32.mrf.mxu0
    %v1896 = vadd.f32 %v1631, %v1895
    %1897 = vdwg.mxu0
    %1898 = vmatpush.msra.mxu0 0.0
    %1899 = vmatpush.msra.mxu0 0.0
    %1900 = vmatpush.msra.mxu0 0.0
    %1901 = vmatpush.msra.mxu0 0.0
    %1902 = vmatpush.msra.mxu0 0.0
    %1903 = vmatpush.msra.mxu0 0.0
    %1904 = vmatpush.msra.mxu0 0.0
    %1905 = vmatpush.msra.mxu0 0.0
    %1906 = vmatpush.msra.mxu0 0.0
    %1907 = vmatpush.msra.mxu0 0.0
    %1908 = vmatpush.msra.mxu0 0.0
    %1909 = vmatpush.msra.mxu0 0.0
    %1910 = vmatpush.msra.mxu0 %v1591
    %1911 = vmatpush.msra.mxu0 %v1590
    %1912 = vmatpush.msra.mxu0 %v1589
    %1913 = vmatpush.msra.mxu0 %v1588
    %1914 = vmatmul.f32.gmra.mxu0 %v1856
    %v1915 = vpop.f32.mrf.mxu0
    %v1916 = vadd.f32 %v1654, %v1915
    %1917 = vdwg.mxu0
    %v1918 = vadd.f32 %v1848, %v1876
    %v1919 = vxor.u32 %v1918, 2147483648
    %v1920 = vmul.f32 %v1919, 1.442695
    %v1921 = vpow.pop %v1920
    %v1922 = vadd.f32 %v1921, 1.0
    %v1923 = vrcp.pop %v1922
    %v1924 = vmul.f32 %v1922, %v1923
    %v1925 = vsub.f32 1.0, %v1924
    %v1926 = vmul.f32 %v1923, %v1925
    %v1927 = vadd.f32 %v1923, %v1926
    %vm1928 = vweird.f32 %v1922
    %vm1929 = vweird.f32 %v1923
    %vm1930 = vmor %vm1928, %vm1929
    %v1931 = vsel %vm1930, %v1923, %v1927
    %v1932 = vand.u32 2147483647, %v1922
    %vm1933 = vcmp.eq.f32.partialorder %v1932, 8.507059e+37
    %v1934 = vand.u32 %v1922, 2147483648
    %v1935 = vor.u32 1.1754944e-38, %v1934
    %v1936 = vsel %vm1933, %v1935, %v1931
    %v1937 = vmul.f32 1.0, %v1936
    %v1938 = vadd.f32 %v1851, %v1896
    %v1939 = vxor.u32 %v1938, 2147483648
    %v1940 = vmul.f32 %v1939, 1.442695
    %v1941 = vpow.pop %v1940
    %v1942 = vadd.f32 %v1941, 1.0
    %v1943 = vrcp.pop %v1942
    %v1944 = vmul.f32 %v1942, %v1943
    %v1945 = vsub.f32 1.0, %v1944
    %v1946 = vmul.f32 %v1943, %v1945
    %v1947 = vadd.f32 %v1943, %v1946
    %vm1948 = vweird.f32 %v1942
    %vm1949 = vweird.f32 %v1943
    %vm1950 = vmor %vm1948, %vm1949
    %v1951 = vsel %vm1950, %v1943, %v1947
    %v1952 = vand.u32 2147483647, %v1942
    %vm1953 = vcmp.eq.f32.partialorder %v1952, 8.507059e+37
    %v1954 = vand.u32 %v1942, 2147483648
    %v1955 = vor.u32 1.1754944e-38, %v1954
    %v1956 = vsel %vm1953, %v1955, %v1951
    %v1957 = vmul.f32 1.0, %v1956
    %v1958 = vmul.f32 %v1937, %v1916
    %v1959 = vadd.f32 %v1854, %v1958
    %v1960 = vtanh.pop %v1959
    %v1961 = vsub.f32 %v1845, %v1960
    %v1962 = vmul.f32 %v1957, %v1961
    %v1963 = vadd.f32 %v1960, %v1962
    %v1964 = vld [vmem:[%s1 + $0x10] sm:$0xff]
    %vm1965 = vcmp.ne.f32.partialorder %v1964, 0.0
    %v1966 = vsel %vm1965, %v1963, %v1845
    %v1967 = vld [vmem:[#allocation2 + $0x18] sm:$0xff]
    %v1968 = vld [vmem:[#allocation2 + $0x20] sm:$0xff]
    %v1969 = vsel %vm376, %v1967, %v1968
    %v1970 = vld [vmem:[#allocation3 + $0x18] sm:$0xff]
    %v1971 = vld [vmem:[#allocation3 + $0x20] sm:$0xff]
    %v1972 = vsel %vm376, %v1970, %v1971
    %v1973 = vld [vmem:[#allocation4 + $0x18] sm:$0xff]
    %v1974 = vld [vmem:[#allocation4 + $0x20] sm:$0xff]
    %v1975 = vsel %vm376, %v1973, %v1974
    %v1977 = vsel %vm81, %v1966, 0
    %1979 = vmatpush.msra.mxu0 0.0
    %1980 = vmatpush.msra.mxu0 0.0
    %1981 = vmatpush.msra.mxu0 0.0
    %1982 = vmatpush.msra.mxu0 0.0
    %1983 = vmatpush.msra.mxu0 0.0
    %1984 = vmatpush.msra.mxu0 0.0
    %1985 = vmatpush.msra.mxu0 0.0
    %1986 = vmatpush.msra.mxu0 0.0
    %1987 = vmatpush.msra.mxu0 0.0
    %1988 = vmatpush.msra.mxu0 0.0
    %1989 = vmatpush.msra.mxu0 0.0
    %1990 = vmatpush.msra.mxu0 0.0
    %1991 = vmatpush.msra.mxu0 %v1581
    %1992 = vmatpush.msra.mxu0 %v1580
    %1993 = vmatpush.msra.mxu0 %v1579
    %1994 = vmatpush.msra.mxu0 %v1578
    %1995 = vmatmul.f32.gmra.mxu0 %v1977
    %v1996 = vpop.f32.mrf.mxu0
    %v1997 = vadd.f32 %v1608, %v1996
    %1998 = vdwg.mxu0
    %1999 = vmatpush.msra.mxu0 0.0
    %2000 = vmatpush.msra.mxu0 0.0
    %2001 = vmatpush.msra.mxu0 0.0
    %2002 = vmatpush.msra.mxu0 0.0
    %2003 = vmatpush.msra.mxu0 0.0
    %2004 = vmatpush.msra.mxu0 0.0
    %2005 = vmatpush.msra.mxu0 0.0
    %2006 = vmatpush.msra.mxu0 0.0
    %2007 = vmatpush.msra.mxu0 0.0
    %2008 = vmatpush.msra.mxu0 0.0
    %2009 = vmatpush.msra.mxu0 0.0
    %2010 = vmatpush.msra.mxu0 0.0
    %2011 = vmatpush.msra.mxu0 %v1586
    %2012 = vmatpush.msra.mxu0 %v1585
    %2013 = vmatpush.msra.mxu0 %v1584
    %2014 = vmatpush.msra.mxu0 %v1583
    %2015 = vmatmul.f32.gmra.mxu0 %v1977
    %v2016 = vpop.f32.mrf.mxu0
    %v2017 = vadd.f32 %v1631, %v2016
    %2018 = vdwg.mxu0
    %2019 = vmatpush.msra.mxu0 0.0
    %2020 = vmatpush.msra.mxu0 0.0
    %2021 = vmatpush.msra.mxu0 0.0
    %2022 = vmatpush.msra.mxu0 0.0
    %2023 = vmatpush.msra.mxu0 0.0
    %2024 = vmatpush.msra.mxu0 0.0
    %2025 = vmatpush.msra.mxu0 0.0
    %2026 = vmatpush.msra.mxu0 0.0
    %2027 = vmatpush.msra.mxu0 0.0
    %2028 = vmatpush.msra.mxu0 0.0
    %2029 = vmatpush.msra.mxu0 0.0
    %2030 = vmatpush.msra.mxu0 0.0
    %2031 = vmatpush.msra.mxu0 %v1591
    %2032 = vmatpush.msra.mxu0 %v1590
    %2033 = vmatpush.msra.mxu0 %v1589
    %2034 = vmatpush.msra.mxu0 %v1588
    %2035 = vmatmul.f32.gmra.mxu0 %v1977
    %v2036 = vpop.f32.mrf.mxu0
    %v2037 = vadd.f32 %v1654, %v2036
    %2038 = vdwg.mxu0
    %v2039 = vadd.f32 %v1969, %v1997
    %v2040 = vxor.u32 %v2039, 2147483648
    %v2041 = vmul.f32 %v2040, 1.442695
    %v2042 = vpow.pop %v2041
    %v2043 = vadd.f32 %v2042, 1.0
    %v2044 = vrcp.pop %v2043
    %v2045 = vmul.f32 %v2043, %v2044
    %v2046 = vsub.f32 1.0, %v2045
    %v2047 = vmul.f32 %v2044, %v2046
    %v2048 = vadd.f32 %v2044, %v2047
    %vm2049 = vweird.f32 %v2043
    %vm2050 = vweird.f32 %v2044
    %vm2051 = vmor %vm2049, %vm2050
    %v2052 = vsel %vm2051, %v2044, %v2048
    %v2053 = vand.u32 2147483647, %v2043
    %vm2054 = vcmp.eq.f32.partialorder %v2053, 8.507059e+37
    %v2055 = vand.u32 %v2043, 2147483648
    %v2056 = vor.u32 1.1754944e-38, %v2055
    %v2057 = vsel %vm2054, %v2056, %v2052
    %v2058 = vmul.f32 1.0, %v2057
    %v2059 = vadd.f32 %v1972, %v2017
    %v2060 = vxor.u32 %v2059, 2147483648
    %v2061 = vmul.f32 %v2060, 1.442695
    %v2062 = vpow.pop %v2061
    %v2063 = vadd.f32 %v2062, 1.0
    %v2064 = vrcp.pop %v2063
    %v2065 = vmul.f32 %v2063, %v2064
    %v2066 = vsub.f32 1.0, %v2065
    %v2067 = vmul.f32 %v2064, %v2066
    %v2068 = vadd.f32 %v2064, %v2067
    %vm2069 = vweird.f32 %v2063
    %vm2070 = vweird.f32 %v2064
    %vm2071 = vmor %vm2069, %vm2070
    %v2072 = vsel %vm2071, %v2064, %v2068
    %v2073 = vand.u32 2147483647, %v2063
    %vm2074 = vcmp.eq.f32.partialorder %v2073, 8.507059e+37
    %v2075 = vand.u32 %v2063, 2147483648
    %v2076 = vor.u32 1.1754944e-38, %v2075
    %v2077 = vsel %vm2074, %v2076, %v2072
    %v2078 = vmul.f32 1.0, %v2077
    %v2079 = vmul.f32 %v2058, %v2037
    %v2080 = vadd.f32 %v1975, %v2079
    %v2081 = vtanh.pop %v2080
    %v2082 = vsub.f32 %v1966, %v2081
    %v2083 = vmul.f32 %v2078, %v2082
    %v2084 = vadd.f32 %v2081, %v2083
    %v2085 = vld [vmem:[%s1 + $0x18] sm:$0xff]
    %vm2086 = vcmp.ne.f32.partialorder %v2085, 0.0
    %v2087 = vsel %vm2086, %v2084, %v1966
    %v2088 = vsel %vm376, %v1968, %v1967
    %v2089 = vsel %vm376, %v1971, %v1970
    %v2090 = vsel %vm376, %v1974, %v1973
    %v2092 = vsel %vm81, %v2087, 0
    %2094 = vmatpush.msra.mxu0 0.0
    %2095 = vmatpush.msra.mxu0 0.0
    %2096 = vmatpush.msra.mxu0 0.0
    %2097 = vmatpush.msra.mxu0 0.0
    %2098 = vmatpush.msra.mxu0 0.0
    %2099 = vmatpush.msra.mxu0 0.0
    %2100 = vmatpush.msra.mxu0 0.0
    %2101 = vmatpush.msra.mxu0 0.0
    %2102 = vmatpush.msra.mxu0 0.0
    %2103 = vmatpush.msra.mxu0 0.0
    %2104 = vmatpush.msra.mxu0 0.0
    %2105 = vmatpush.msra.mxu0 0.0
    %2106 = vmatpush.msra.mxu0 %v1581
    %2107 = vmatpush.msra.mxu0 %v1580
    %2108 = vmatpush.msra.mxu0 %v1579
    %2109 = vmatpush.msra.mxu0 %v1578
    %2110 = vmatmul.f32.gmra.mxu0 %v2092
    %v2111 = vpop.f32.mrf.mxu0
    %v2112 = vadd.f32 %v1608, %v2111
    %2113 = vdwg.mxu0
    %2114 = vmatpush.msra.mxu0 0.0
    %2115 = vmatpush.msra.mxu0 0.0
    %2116 = vmatpush.msra.mxu0 0.0
    %2117 = vmatpush.msra.mxu0 0.0
    %2118 = vmatpush.msra.mxu0 0.0
    %2119 = vmatpush.msra.mxu0 0.0
    %2120 = vmatpush.msra.mxu0 0.0
    %2121 = vmatpush.msra.mxu0 0.0
    %2122 = vmatpush.msra.mxu0 0.0
    %2123 = vmatpush.msra.mxu0 0.0
    %2124 = vmatpush.msra.mxu0 0.0
    %2125 = vmatpush.msra.mxu0 0.0
    %2126 = vmatpush.msra.mxu0 %v1586
    %2127 = vmatpush.msra.mxu0 %v1585
    %2128 = vmatpush.msra.mxu0 %v1584
    %2129 = vmatpush.msra.mxu0 %v1583
    %2130 = vmatmul.f32.gmra.mxu0 %v2092
    %v2131 = vpop.f32.mrf.mxu0
    %v2132 = vadd.f32 %v1631, %v2131
    %2133 = vdwg.mxu0
    %2134 = vmatpush.msra.mxu0 0.0
    %2135 = vmatpush.msra.mxu0 0.0
    %2136 = vmatpush.msra.mxu0 0.0
    %2137 = vmatpush.msra.mxu0 0.0
    %2138 = vmatpush.msra.mxu0 0.0
    %2139 = vmatpush.msra.mxu0 0.0
    %2140 = vmatpush.msra.mxu0 0.0
    %2141 = vmatpush.msra.mxu0 0.0
    %2142 = vmatpush.msra.mxu0 0.0
    %2143 = vmatpush.msra.mxu0 0.0
    %2144 = vmatpush.msra.mxu0 0.0
    %2145 = vmatpush.msra.mxu0 0.0
    %2146 = vmatpush.msra.mxu0 %v1591
    %2147 = vmatpush.msra.mxu0 %v1590
    %2148 = vmatpush.msra.mxu0 %v1589
    %2149 = vmatpush.msra.mxu0 %v1588
    %2150 = vmatmul.f32.gmra.mxu0 %v2092
    %v2151 = vpop.f32.mrf.mxu0
    %v2152 = vadd.f32 %v1654, %v2151
    %2153 = vdwg.mxu0
    %v2154 = vadd.f32 %v2088, %v2112
    %v2155 = vxor.u32 %v2154, 2147483648
    %v2156 = vmul.f32 %v2155, 1.442695
    %v2157 = vpow.pop %v2156
    %v2158 = vadd.f32 %v2157, 1.0
    %v2159 = vrcp.pop %v2158
    %v2160 = vmul.f32 %v2158, %v2159
    %v2161 = vsub.f32 1.0, %v2160
    %v2162 = vmul.f32 %v2159, %v2161
    %v2163 = vadd.f32 %v2159, %v2162
    %vm2164 = vweird.f32 %v2158
    %vm2165 = vweird.f32 %v2159
    %vm2166 = vmor %vm2164, %vm2165
    %v2167 = vsel %vm2166, %v2159, %v2163
    %v2168 = vand.u32 2147483647, %v2158
    %vm2169 = vcmp.eq.f32.partialorder %v2168, 8.507059e+37
    %v2170 = vand.u32 %v2158, 2147483648
    %v2171 = vor.u32 1.1754944e-38, %v2170
    %v2172 = vsel %vm2169, %v2171, %v2167
    %v2173 = vmul.f32 1.0, %v2172
    %v2174 = vadd.f32 %v2089, %v2132
    %v2175 = vxor.u32 %v2174, 2147483648
    %v2176 = vmul.f32 %v2175, 1.442695
    %v2177 = vpow.pop %v2176
    %v2178 = vadd.f32 %v2177, 1.0
    %v2179 = vrcp.pop %v2178
    %v2180 = vmul.f32 %v2178, %v2179
    %v2181 = vsub.f32 1.0, %v2180
    %v2182 = vmul.f32 %v2179, %v2181
    %v2183 = vadd.f32 %v2179, %v2182
    %vm2184 = vweird.f32 %v2178
    %vm2185 = vweird.f32 %v2179
    %vm2186 = vmor %vm2184, %vm2185
    %v2187 = vsel %vm2186, %v2179, %v2183
    %v2188 = vand.u32 2147483647, %v2178
    %vm2189 = vcmp.eq.f32.partialorder %v2188, 8.507059e+37
    %v2190 = vand.u32 %v2178, 2147483648
    %v2191 = vor.u32 1.1754944e-38, %v2190
    %v2192 = vsel %vm2189, %v2191, %v2187
    %v2193 = vmul.f32 1.0, %v2192
    %v2194 = vmul.f32 %v2173, %v2152
    %v2195 = vadd.f32 %v2090, %v2194
    %v2196 = vtanh.pop %v2195
    %v2197 = vsub.f32 %v2087, %v2196
    %v2198 = vmul.f32 %v2193, %v2197
    %v2199 = vadd.f32 %v2196, %v2198
    %v2200 = vld [vmem:[%s1 + $0x20] sm:$0xff]
    %vm2201 = vcmp.ne.f32.partialorder %v2200, 0.0
    %v2202 = vsel %vm2201, %v2199, %v2087
    %v2203 = vsel %vm376, %v1847, %v1846
    %v2204 = vsel %vm376, %v1850, %v1849
    %v2205 = vsel %vm376, %v1853, %v1852
    %v2207 = vsel %vm81, %v2202, 0
    %2209 = vmatpush.msra.mxu0 0.0
    %2210 = vmatpush.msra.mxu0 0.0
    %2211 = vmatpush.msra.mxu0 0.0
    %2212 = vmatpush.msra.mxu0 0.0
    %2213 = vmatpush.msra.mxu0 0.0
    %2214 = vmatpush.msra.mxu0 0.0
    %2215 = vmatpush.msra.mxu0 0.0
    %2216 = vmatpush.msra.mxu0 0.0
    %2217 = vmatpush.msra.mxu0 0.0
    %2218 = vmatpush.msra.mxu0 0.0
    %2219 = vmatpush.msra.mxu0 0.0
    %2220 = vmatpush.msra.mxu0 0.0
    %2221 = vmatpush.msra.mxu0 %v1581
    %2222 = vmatpush.msra.mxu0 %v1580
    %2223 = vmatpush.msra.mxu0 %v1579
    %2224 = vmatpush.msra.mxu0 %v1578
    %2225 = vmatmul.f32.gmra.mxu0 %v2207
    %v2226 = vpop.f32.mrf.mxu0
    %v2227 = vadd.f32 %v1608, %v2226
    %2228 = vdwg.mxu0
    %2229 = vmatpush.msra.mxu0 0.0
    %2230 = vmatpush.msra.mxu0 0.0
    %2231 = vmatpush.msra.mxu0 0.0
    %2232 = vmatpush.msra.mxu0 0.0
    %2233 = vmatpush.msra.mxu0 0.0
    %2234 = vmatpush.msra.mxu0 0.0
    %2235 = vmatpush.msra.mxu0 0.0
    %2236 = vmatpush.msra.mxu0 0.0
    %2237 = vmatpush.msra.mxu0 0.0
    %2238 = vmatpush.msra.mxu0 0.0
    %2239 = vmatpush.msra.mxu0 0.0
    %2240 = vmatpush.msra.mxu0 0.0
    %2241 = vmatpush.msra.mxu0 %v1586
    %2242 = vmatpush.msra.mxu0 %v1585
    %2243 = vmatpush.msra.mxu0 %v1584
    %2244 = vmatpush.msra.mxu0 %v1583
    %2245 = vmatmul.f32.gmra.mxu0 %v2207
    %v2246 = vpop.f32.mrf.mxu0
    %v2247 = vadd.f32 %v1631, %v2246
    %2248 = vdwg.mxu0
    %2249 = vmatpush.msra.mxu0 0.0
    %2250 = vmatpush.msra.mxu0 0.0
    %2251 = vmatpush.msra.mxu0 0.0
    %2252 = vmatpush.msra.mxu0 0.0
    %2253 = vmatpush.msra.mxu0 0.0
    %2254 = vmatpush.msra.mxu0 0.0
    %2255 = vmatpush.msra.mxu0 0.0
    %2256 = vmatpush.msra.mxu0 0.0
    %2257 = vmatpush.msra.mxu0 0.0
    %2258 = vmatpush.msra.mxu0 0.0
    %2259 = vmatpush.msra.mxu0 0.0
    %2260 = vmatpush.msra.mxu0 0.0
    %2261 = vmatpush.msra.mxu0 %v1591
    %2262 = vmatpush.msra.mxu0 %v1590
    %2263 = vmatpush.msra.mxu0 %v1589
    %2264 = vmatpush.msra.mxu0 %v1588
    %2265 = vmatmul.f32.gmra.mxu0 %v2207
    %v2266 = vpop.f32.mrf.mxu0
    %v2267 = vadd.f32 %v1654, %v2266
    %2268 = vdwg.mxu0
    %v2269 = vadd.f32 %v2203, %v2227
    %v2270 = vxor.u32 %v2269, 2147483648
    %v2271 = vmul.f32 %v2270, 1.442695
    %v2272 = vpow.pop %v2271
    %v2273 = vadd.f32 %v2272, 1.0
    %v2274 = vrcp.pop %v2273
    %v2275 = vmul.f32 %v2273, %v2274
    %v2276 = vsub.f32 1.0, %v2275
    %v2277 = vmul.f32 %v2274, %v2276
    %v2278 = vadd.f32 %v2274, %v2277
    %vm2279 = vweird.f32 %v2273
    %vm2280 = vweird.f32 %v2274
    %vm2281 = vmor %vm2279, %vm2280
    %v2282 = vsel %vm2281, %v2274, %v2278
    %v2283 = vand.u32 2147483647, %v2273
    %vm2284 = vcmp.eq.f32.partialorder %v2283, 8.507059e+37
    %v2285 = vand.u32 %v2273, 2147483648
    %v2286 = vor.u32 1.1754944e-38, %v2285
    %v2287 = vsel %vm2284, %v2286, %v2282
    %v2288 = vmul.f32 1.0, %v2287
    %v2289 = vadd.f32 %v2204, %v2247
    %v2290 = vxor.u32 %v2289, 2147483648
    %v2291 = vmul.f32 %v2290, 1.442695
    %v2292 = vpow.pop %v2291
    %v2293 = vadd.f32 %v2292, 1.0
    %v2294 = vrcp.pop %v2293
    %v2295 = vmul.f32 %v2293, %v2294
    %v2296 = vsub.f32 1.0, %v2295
    %v2297 = vmul.f32 %v2294, %v2296
    %v2298 = vadd.f32 %v2294, %v2297
    %vm2299 = vweird.f32 %v2293
    %vm2300 = vweird.f32 %v2294
    %vm2301 = vmor %vm2299, %vm2300
    %v2302 = vsel %vm2301, %v2294, %v2298
    %v2303 = vand.u32 2147483647, %v2293
    %vm2304 = vcmp.eq.f32.partialorder %v2303, 8.507059e+37
    %v2305 = vand.u32 %v2293, 2147483648
    %v2306 = vor.u32 1.1754944e-38, %v2305
    %v2307 = vsel %vm2304, %v2306, %v2302
    %v2308 = vmul.f32 1.0, %v2307
    %v2309 = vmul.f32 %v2288, %v2267
    %v2310 = vadd.f32 %v2205, %v2309
    %v2311 = vtanh.pop %v2310
    %v2312 = vsub.f32 %v2202, %v2311
    %v2313 = vmul.f32 %v2308, %v2312
    %v2314 = vadd.f32 %v2311, %v2313
    %v2315 = vld [vmem:[%s1 + $0x28] sm:$0xff]
    %vm2316 = vcmp.ne.f32.partialorder %v2315, 0.0
    %v2317 = vsel %vm2316, %v2314, %v2202
    %v2318 = vsel %vm376, %v1726, %v1725
    %v2319 = vsel %vm376, %v1729, %v1728
    %v2320 = vsel %vm376, %v1732, %v1731
    %v2322 = vsel %vm81, %v2317, 0
    %2324 = vmatpush.msra.mxu0 0.0
    %2325 = vmatpush.msra.mxu0 0.0
    %2326 = vmatpush.msra.mxu0 0.0
    %2327 = vmatpush.msra.mxu0 0.0
    %2328 = vmatpush.msra.mxu0 0.0
    %2329 = vmatpush.msra.mxu0 0.0
    %2330 = vmatpush.msra.mxu0 0.0
    %2331 = vmatpush.msra.mxu0 0.0
    %2332 = vmatpush.msra.mxu0 0.0
    %2333 = vmatpush.msra.mxu0 0.0
    %2334 = vmatpush.msra.mxu0 0.0
    %2335 = vmatpush.msra.mxu0 0.0
    %2336 = vmatpush.msra.mxu0 %v1581
    %2337 = vmatpush.msra.mxu0 %v1580
    %2338 = vmatpush.msra.mxu0 %v1579
    %2339 = vmatpush.msra.mxu0 %v1578
    %2340 = vmatmul.f32.gmra.mxu0 %v2322
    %v2341 = vpop.f32.mrf.mxu0
    %v2342 = vadd.f32 %v1608, %v2341
    %2343 = vdwg.mxu0
    %2344 = vmatpush.msra.mxu0 0.0
    %2345 = vmatpush.msra.mxu0 0.0
    %2346 = vmatpush.msra.mxu0 0.0
    %2347 = vmatpush.msra.mxu0 0.0
    %2348 = vmatpush.msra.mxu0 0.0
    %2349 = vmatpush.msra.mxu0 0.0
    %2350 = vmatpush.msra.mxu0 0.0
    %2351 = vmatpush.msra.mxu0 0.0
    %2352 = vmatpush.msra.mxu0 0.0
    %2353 = vmatpush.msra.mxu0 0.0
    %2354 = vmatpush.msra.mxu0 0.0
    %2355 = vmatpush.msra.mxu0 0.0
    %2356 = vmatpush.msra.mxu0 %v1586
    %2357 = vmatpush.msra.mxu0 %v1585
    %2358 = vmatpush.msra.mxu0 %v1584
    %2359 = vmatpush.msra.mxu0 %v1583
    %2360 = vmatmul.f32.gmra.mxu0 %v2322
    %v2361 = vpop.f32.mrf.mxu0
    %v2362 = vadd.f32 %v1631, %v2361
    %2363 = vdwg.mxu0
    %2364 = vmatpush.msra.mxu0 0.0
    %2365 = vmatpush.msra.mxu0 0.0
    %2366 = vmatpush.msra.mxu0 0.0
    %2367 = vmatpush.msra.mxu0 0.0
    %2368 = vmatpush.msra.mxu0 0.0
    %2369 = vmatpush.msra.mxu0 0.0
    %2370 = vmatpush.msra.mxu0 0.0
    %2371 = vmatpush.msra.mxu0 0.0
    %2372 = vmatpush.msra.mxu0 0.0
    %2373 = vmatpush.msra.mxu0 0.0
    %2374 = vmatpush.msra.mxu0 0.0
    %2375 = vmatpush.msra.mxu0 0.0
    %2376 = vmatpush.msra.mxu0 %v1591
    %2377 = vmatpush.msra.mxu0 %v1590
    %2378 = vmatpush.msra.mxu0 %v1589
    %2379 = vmatpush.msra.mxu0 %v1588
    %2380 = vmatmul.f32.gmra.mxu0 %v2322
    %v2381 = vpop.f32.mrf.mxu0
    %v2382 = vadd.f32 %v1654, %v2381
    %2383 = vdwg.mxu0
    %v2384 = vadd.f32 %v2318, %v2342
    %v2385 = vxor.u32 %v2384, 2147483648
    %v2386 = vmul.f32 %v2385, 1.442695
    %v2387 = vpow.pop %v2386
    %v2388 = vadd.f32 %v2387, 1.0
    %v2389 = vrcp.pop %v2388
    %v2390 = vmul.f32 %v2388, %v2389
    %v2391 = vsub.f32 1.0, %v2390
    %v2392 = vmul.f32 %v2389, %v2391
    %v2393 = vadd.f32 %v2389, %v2392
    %vm2394 = vweird.f32 %v2388
    %vm2395 = vweird.f32 %v2389
    %vm2396 = vmor %vm2394, %vm2395
    %v2397 = vsel %vm2396, %v2389, %v2393
    %v2398 = vand.u32 2147483647, %v2388
    %vm2399 = vcmp.eq.f32.partialorder %v2398, 8.507059e+37
    %v2400 = vand.u32 %v2388, 2147483648
    %v2401 = vor.u32 1.1754944e-38, %v2400
    %v2402 = vsel %vm2399, %v2401, %v2397
    %v2403 = vmul.f32 1.0, %v2402
    %v2404 = vadd.f32 %v2319, %v2362
    %v2405 = vxor.u32 %v2404, 2147483648
    %v2406 = vmul.f32 %v2405, 1.442695
    %v2407 = vpow.pop %v2406
    %v2408 = vadd.f32 %v2407, 1.0
    %v2409 = vrcp.pop %v2408
    %v2410 = vmul.f32 %v2408, %v2409
    %v2411 = vsub.f32 1.0, %v2410
    %v2412 = vmul.f32 %v2409, %v2411
    %v2413 = vadd.f32 %v2409, %v2412
    %vm2414 = vweird.f32 %v2408
    %vm2415 = vweird.f32 %v2409
    %vm2416 = vmor %vm2414, %vm2415
    %v2417 = vsel %vm2416, %v2409, %v2413
    %v2418 = vand.u32 2147483647, %v2408
    %vm2419 = vcmp.eq.f32.partialorder %v2418, 8.507059e+37
    %v2420 = vand.u32 %v2408, 2147483648
    %v2421 = vor.u32 1.1754944e-38, %v2420
    %v2422 = vsel %vm2419, %v2421, %v2417
    %v2423 = vmul.f32 1.0, %v2422
    %v2424 = vmul.f32 %v2403, %v2382
    %v2425 = vadd.f32 %v2320, %v2424
    %v2426 = vtanh.pop %v2425
    %v2427 = vsub.f32 %v2317, %v2426
    %v2428 = vmul.f32 %v2423, %v2427
    %v2429 = vadd.f32 %v2426, %v2428
    %v2430 = vld [vmem:[%s1 + $0x30] sm:$0xff]
    %vm2431 = vcmp.ne.f32.partialorder %v2430, 0.0
    %v2432 = vsel %vm2431, %v2429, %v2317
    %v2433 = vsel %vm376, %v1599, %v1598
    %v2434 = vsel %vm376, %v1602, %v1601
    %v2435 = vsel %vm376, %v1605, %v1604
    %v2437 = vsel %vm81, %v2432, 0
    %2439 = vmatpush.msra.mxu0 0.0
    %2440 = vmatpush.msra.mxu0 0.0
    %2441 = vmatpush.msra.mxu0 0.0
    %2442 = vmatpush.msra.mxu0 0.0
    %2443 = vmatpush.msra.mxu0 0.0
    %2444 = vmatpush.msra.mxu0 0.0
    %2445 = vmatpush.msra.mxu0 0.0
    %2446 = vmatpush.msra.mxu0 0.0
    %2447 = vmatpush.msra.mxu0 0.0
    %2448 = vmatpush.msra.mxu0 0.0
    %2449 = vmatpush.msra.mxu0 0.0
    %2450 = vmatpush.msra.mxu0 0.0
    %2451 = vmatpush.msra.mxu0 %v1581
    %2452 = vmatpush.msra.mxu0 %v1580
    %2453 = vmatpush.msra.mxu0 %v1579
    %2454 = vmatpush.msra.mxu0 %v1578
    %2455 = vmatmul.f32.gmra.mxu0 %v2437
    %v2456 = vpop.f32.mrf.mxu0
    %v2457 = vadd.f32 %v1608, %v2456
    %2458 = vdwg.mxu0
    %2459 = vmatpush.msra.mxu0 0.0
    %2460 = vmatpush.msra.mxu0 0.0
    %2461 = vmatpush.msra.mxu0 0.0
    %2462 = vmatpush.msra.mxu0 0.0
    %2463 = vmatpush.msra.mxu0 0.0
    %2464 = vmatpush.msra.mxu0 0.0
    %2465 = vmatpush.msra.mxu0 0.0
    %2466 = vmatpush.msra.mxu0 0.0
    %2467 = vmatpush.msra.mxu0 0.0
    %2468 = vmatpush.msra.mxu0 0.0
    %2469 = vmatpush.msra.mxu0 0.0
    %2470 = vmatpush.msra.mxu0 0.0
    %2471 = vmatpush.msra.mxu0 %v1586
    %2472 = vmatpush.msra.mxu0 %v1585
    %2473 = vmatpush.msra.mxu0 %v1584
    %2474 = vmatpush.msra.mxu0 %v1583
    %2475 = vmatmul.f32.gmra.mxu0 %v2437
    %v2476 = vpop.f32.mrf.mxu0
    %v2477 = vadd.f32 %v1631, %v2476
    %2478 = vdwg.mxu0
    %2479 = vmatpush.msra.mxu0 0.0
    %2480 = vmatpush.msra.mxu0 0.0
    %2481 = vmatpush.msra.mxu0 0.0
    %2482 = vmatpush.msra.mxu0 0.0
    %2483 = vmatpush.msra.mxu0 0.0
    %2484 = vmatpush.msra.mxu0 0.0
    %2485 = vmatpush.msra.mxu0 0.0
    %2486 = vmatpush.msra.mxu0 0.0
    %2487 = vmatpush.msra.mxu0 0.0
    %2488 = vmatpush.msra.mxu0 0.0
    %2489 = vmatpush.msra.mxu0 0.0
    %2490 = vmatpush.msra.mxu0 0.0
    %2491 = vmatpush.msra.mxu0 %v1591
    %2492 = vmatpush.msra.mxu0 %v1590
    %2493 = vmatpush.msra.mxu0 %v1589
    %2494 = vmatpush.msra.mxu0 %v1588
    %2495 = vmatmul.f32.gmra.mxu0 %v2437
    %v2496 = vpop.f32.mrf.mxu0
    %v2497 = vadd.f32 %v1654, %v2496
    %2498 = vdwg.mxu0
    %v2499 = vadd.f32 %v2433, %v2457
    %v2500 = vxor.u32 %v2499, 2147483648
    %v2501 = vmul.f32 %v2500, 1.442695
    %v2502 = vpow.pop %v2501
    %v2503 = vadd.f32 %v2502, 1.0
    %v2504 = vrcp.pop %v2503
    %v2505 = vmul.f32 %v2503, %v2504
    %v2506 = vsub.f32 1.0, %v2505
    %v2507 = vmul.f32 %v2504, %v2506
    %v2508 = vadd.f32 %v2504, %v2507
    %vm2509 = vweird.f32 %v2503
    %vm2510 = vweird.f32 %v2504
    %vm2511 = vmor %vm2509, %vm2510
    %v2512 = vsel %vm2511, %v2504, %v2508
    %v2513 = vand.u32 2147483647, %v2503
    %vm2514 = vcmp.eq.f32.partialorder %v2513, 8.507059e+37
    %v2515 = vand.u32 %v2503, 2147483648
    %v2516 = vor.u32 1.1754944e-38, %v2515
    %v2517 = vsel %vm2514, %v2516, %v2512
    %v2518 = vmul.f32 1.0, %v2517
    %v2519 = vadd.f32 %v2434, %v2477
    %v2520 = vxor.u32 %v2519, 2147483648
    %v2521 = vmul.f32 %v2520, 1.442695
    %v2522 = vpow.pop %v2521
    %v2523 = vadd.f32 %v2522, 1.0
    %v2524 = vrcp.pop %v2523
    %v2525 = vmul.f32 %v2523, %v2524
    %v2526 = vsub.f32 1.0, %v2525
    %v2527 = vmul.f32 %v2524, %v2526
    %v2528 = vadd.f32 %v2524, %v2527
    %vm2529 = vweird.f32 %v2523
    %vm2530 = vweird.f32 %v2524
    %vm2531 = vmor %vm2529, %vm2530
    %v2532 = vsel %vm2531, %v2524, %v2528
    %v2533 = vand.u32 2147483647, %v2523
    %vm2534 = vcmp.eq.f32.partialorder %v2533, 8.507059e+37
    %v2535 = vand.u32 %v2523, 2147483648
    %v2536 = vor.u32 1.1754944e-38, %v2535
    %v2537 = vsel %vm2534, %v2536, %v2532
    %v2538 = vmul.f32 1.0, %v2537
    %v2539 = vmul.f32 %v2518, %v2497
    %v2540 = vadd.f32 %v2435, %v2539
    %v2541 = vtanh.pop %v2540
    %v2542 = vsub.f32 %v2432, %v2541
    %v2543 = vmul.f32 %v2538, %v2542
    %v2544 = vadd.f32 %v2541, %v2543
    %v2545 = vld [vmem:[%s1 + $0x38] sm:$0xff]
    %vm2546 = vcmp.ne.f32.partialorder %v2545, 0.0
    %v2547 = vsel %vm2546, %v2544, %v2432
    %v2548 = vadd.f32 %v1358, %v2547
    %2549 = vst.msk [vmem:[#allocation11] sm:$0xff] %vm81, %v2548
    // Predicated region
    $region42: #{tpu_custom_call.1} parent=1 // pred_check
      _
    $region43: #{tpu_custom_call.1} parent=1 // pred_check_branch
      %2551 = sbr.rel (0) target = $region45
    $region44: #{tpu_custom_call.1} parent=1 // pred_region
      %2553 = vsyncadd [#allocation8], 0
      %s2555 = sshll.u32 [#allocation11], 4
      %s2556 = int_to_ptr.vmem [resolvable:$true] %s2555
      %s2557 = sshll.u32 %s8, 4
      %s2558 = int_to_ptr.hbm [resolvable:$true] %s2557
      %2560 = dma.vmem_to_hbm [thread:$0]  %s2556, 128, %s2558, [#allocation8]
    $region45: #{tpu_custom_call.1} parent=1 // pred_fallthru
      _
    // Predicated region
    $region46: #{tpu_custom_call.1} parent=1 // pred_check
      _
    $region47: #{tpu_custom_call.1} parent=1 // pred_check_branch
      %2562 = sbr.rel (0) target = $region49
    $region48: #{tpu_custom_call.1} parent=1 // pred_region
      %2564 = dma.done [#allocation8], 128
    $region49: #{tpu_custom_call.1} parent=1 // pred_fallthru
      _
    %2565 = vsyncpa [#allocation7], 1
    %2566 = vsyncpa [#allocation10], 1
    %2567 = vsyncpa [#allocation8], 1

</llo_original>
